<compile_context>
chip_gen: v6e
topology: v6e:2x2x1
jax: 0.10.0
libtpu: 0.0.40
codegen_flags: <defaults>
</compile_context>

<pallas_src>
import functools

import jax
import jax.numpy as jnp
from jax.experimental import pallas as pl
from jax.experimental.pallas import tpu as pltpu

HIDDEN1 = 1400
HIDDEN2 = 1300
K_STEPS = 4                      # grid steps over w2's K (1400) dimension
TK = HIDDEN1 // K_STEPS          # 350


def _mish_kernel(x):
    # mish(x) = x * tanh(softplus(x)) = x * (t^2 + 2t) / (t^2 + 2t + 2), t=e^x.
    # One EUP exp + one approx EUP reciprocal (vs exp+log+tanh before).
    t = jnp.exp(jnp.minimum(x, 20.0))     # clamp: ratio rounds to 1.0 for x>20
    u = t * (t + 2.0)
    return x * u * pl.reciprocal(u + 2.0, approx=True)


def _mish_ref(x):
    t = jnp.exp(jnp.minimum(x, 20.0))
    u = t * (t + 2.0)
    return x * u / (u + 2.0)


def _actor_kernel(scale, max_action,
                  state_ref, act_ref, w1s_ref, w1a_ref, b1_ref,
                  w2q_ref, s2_ref, b2_ref, w3_ref, b3_ref,
                  out_ref, h2_acc):
    k = pl.program_id(0)

    @pl.when(k == 0)
    def _init():
        h2_acc[...] = jnp.zeros_like(h2_acc)

    # Layer-1 column chunk (cols [k*TK, (k+1)*TK)) + mish, fused into the
    # w2 K-loop so it overlaps with the streaming w2 slice DMA.
    h1k = (jnp.dot(state_ref[...], w1s_ref[0], preferred_element_type=jnp.float32)
           + jnp.dot(act_ref[...], w1a_ref[0], preferred_element_type=jnp.float32)
           + b1_ref[0])
    h1k = _mish_kernel(h1k)                                   # [B, TK]

    # Partial layer 2 with int8 weights (per-column scale folded post-dot).
    w2k = w2q_ref[0].astype(jnp.float32)                      # [TK, H2]
    h2_acc[...] += jnp.dot(h1k, w2k, preferred_element_type=jnp.float32)

    @pl.when(k == pl.num_programs(0) - 1)
    def _finalize():
        h2 = _mish_kernel(h2_acc[...] * s2_ref[...] + b2_ref[...])
        h3 = jnp.dot(h2, w3_ref[...], preferred_element_type=jnp.float32) + b3_ref[...]
        a = scale * jnp.tanh(h3)                              # scale = phi*max_action
        out_ref[...] = jnp.clip(a + act_ref[...], -max_action, max_action)


def actor_forward(state, action, params, *, max_action, phi=0.05):
    """Pallas-backed Actor.forward. state: [B, S] f32, action: [B, A] f32."""
    w1s, w1a, b1, w2q, s2, b2, w3, b3 = params
    batch, action_dim = action.shape
    state_dim = state.shape[1]
    hidden2 = w2q.shape[-1]

    kernel = functools.partial(
        _actor_kernel,
        float(phi) * float(max_action),    # folded scale
        float(max_action),
    )

    in_dim = state_dim + action_dim
    flops = 2 * batch * (in_dim * HIDDEN1 + HIDDEN1 * hidden2 + hidden2 * action_dim)
    transcendentals = batch * (2 * HIDDEN1 + 2 * hidden2 + action_dim)
    args = (state, action, w1s, w1a, b1, w2q, s2, b2, w3, b3)
    bytes_accessed = sum(int(x.size) * x.dtype.itemsize for x in args)
    bytes_accessed += batch * action_dim * 4

    grid_spec = pltpu.PrefetchScalarGridSpec(
        num_scalar_prefetch=0,
        grid=(K_STEPS,),
        in_specs=[
            pl.BlockSpec((batch, state_dim), lambda k: (0, 0)),          # state
            pl.BlockSpec((batch, action_dim), lambda k: (0, 0)),         # action
            pl.BlockSpec((1, state_dim, TK), lambda k: (k, 0, 0)),       # w1s chunk
            pl.BlockSpec((1, action_dim, TK), lambda k: (k, 0, 0)),      # w1a chunk
            pl.BlockSpec((1, 1, TK), lambda k: (k, 0, 0)),               # b1 chunk
            pl.BlockSpec((1, TK, hidden2), lambda k: (k, 0, 0)),         # w2 int8 slice
            pl.BlockSpec((1, hidden2), lambda k: (0, 0)),                # scale2
            pl.BlockSpec((1, hidden2), lambda k: (0, 0)),                # b2
            pl.BlockSpec((hidden2, action_dim), lambda k: (0, 0)),       # w3
            pl.BlockSpec((1, action_dim), lambda k: (0, 0)),             # b3
        ],
        out_specs=pl.BlockSpec((batch, action_dim), lambda k: (0, 0)),
        scratch_shapes=[pltpu.VMEM((batch, hidden2), jnp.float32)],      # h2 accum
    )

    return pl.pallas_call(
        kernel,
        out_shape=jax.ShapeDtypeStruct((batch, action_dim), jnp.float32),
        grid_spec=grid_spec,
        compiler_params=pltpu.CompilerParams(
            dimension_semantics=("arbitrary",),
            vmem_limit_bytes=16 << 20),
        cost_estimate=pl.CostEstimate(flops=flops,
                                      transcendentals=transcendentals,
                                      bytes_accessed=bytes_accessed),
    )(*args)


def init_actor_params(key, state_dim, action_dim):
    """PyTorch nn.Linear-style init (U(-1/sqrt(fan_in), 1/sqrt(fan_in))).

    Layouts are pre-massaged for the kernel:
      * weights are [in, out] (transposed vs PyTorch) so each layer is x@W+b,
      * w1 is split into state/action halves (no concat) and chunked along its
        1400 output columns into [K_STEPS, in, TK], b1 into [K_STEPS, 1, TK],
      * w2 is quantized to int8 with per-output-channel f32 scales and stored
        [K_STEPS, TK, 1300] so the kernel streams K-slices,
      * w1/w3/biases stay f32 (tiny vs w2).
    """
    def linear(k, fan_in, fan_out):
        kw, kb = jax.random.split(k)
        bound = 1.0 / (float(fan_in) ** 0.5)
        w = jax.random.uniform(kw, (fan_in, fan_out), jnp.float32, -bound, bound)
        b = jax.random.uniform(kb, (1, fan_out), jnp.float32, -bound, bound)
        return w, b

    k1, k2, k3 = jax.random.split(key, 3)
    w1, b1 = linear(k1, state_dim + action_dim, HIDDEN1)
    w2, b2 = linear(k2, HIDDEN1, HIDDEN2)
    w3, b3 = linear(k3, HIDDEN2, action_dim)

    w1s = w1[:state_dim].reshape(state_dim, K_STEPS, TK).transpose(1, 0, 2)
    w1a = w1[state_dim:].reshape(action_dim, K_STEPS, TK).transpose(1, 0, 2)
    b1c = b1.reshape(1, K_STEPS, TK).transpose(1, 0, 2)

    # Symmetric per-output-channel int8 quantization of w2 (dominant bytes).
    scale2 = jnp.maximum(jnp.max(jnp.abs(w2), axis=0, keepdims=True), 1e-8) / 127.0
    w2q = jnp.clip(jnp.round(w2 / scale2), -127, 127).astype(jnp.int8)
    w2q = w2q.reshape(K_STEPS, TK, HIDDEN2)

    return (w1s, w1a, b1c, w2q, scale2, b2, w3, b3)


def actor_forward_ref(state, action, params, *, max_action, phi=0.05):
    """Pure-JAX reference with identical (int8 w2) numerics."""
    w1s, w1a, b1, w2q, s2, b2, w3, b3 = params
    state_dim, action_dim = state.shape[1], action.shape[1]

    w1s2 = w1s.transpose(1, 0, 2).reshape(state_dim, HIDDEN1)
    w1a2 = w1a.transpose(1, 0, 2).reshape(action_dim, HIDDEN1)
    b1_2 = b1.transpose(1, 0, 2).reshape(1, HIDDEN1)
    w2 = w2q.reshape(HIDDEN1, HIDDEN2).astype(jnp.float32) * s2

    h1 = _mish_ref(state @ w1s2 + action @ w1a2 + b1_2)
    h2 = _mish_ref(h1 @ w2 + b2)
    a = (phi * max_action) * jnp.tanh(h2 @ w3 + b3)
    return jnp.clip(a + action, -max_action, max_action)


if __name__ == "__main__":
    state_dim, action_dim = 16, 4
    batch = 8
    max_action, phi = 1.0, 0.05

    key = jax.random.PRNGKey(0)
    kp, ks, ka = jax.random.split(key, 3)

    params = init_actor_params(kp, state_dim, action_dim)
    state = jax.random.normal(ks, (batch, state_dim), jnp.float32)
    action = jax.random.uniform(ka, (batch, action_dim), jnp.float32,
                                -max_action, max_action)

    out = actor_forward(state, action, params, max_action=max_action, phi=phi)
    out = jax.block_until_ready(out)

    ref = actor_forward_ref(state, action, params, max_action=max_action, phi=phi)
    assert out.shape == (batch, action_dim)
    assert jnp.allclose(out, ref, atol=2e-3, rtol=2e-3), "mismatch vs JAX reference"

    print("KERNEL_OK")
</pallas_src>

<mosaic_0001>
module attributes {stable_mosaic.version = 11 : i64} {
  func.func @_actor_kernel(%arg0: i32, %arg1: memref<8x16xf32, #tpu.memory_space<vmem>>, %arg2: memref<8x4xf32, #tpu.memory_space<vmem>>, %arg3: memref<1x16x350xf32, #tpu.memory_space<vmem>>, %arg4: memref<1x4x350xf32, #tpu.memory_space<vmem>>, %arg5: memref<1x1x350xf32, #tpu.memory_space<vmem>>, %arg6: memref<1x350x1300xi8, #tpu.memory_space<vmem>>, %arg7: memref<1x1300xf32, #tpu.memory_space<vmem>>, %arg8: memref<1x1300xf32, #tpu.memory_space<vmem>>, %arg9: memref<1300x4xf32, #tpu.memory_space<vmem>>, %arg10: memref<1x4xf32, #tpu.memory_space<vmem>>, %arg11: memref<8x4xf32, #tpu.memory_space<vmem>>, %arg12: memref<8x1300xf32, #tpu.memory_space<vmem>>) attributes {dimension_semantics = [#tpu.dimension_semantics<arbitrary>], iteration_bounds = array<i64: 4>, scalar_prefetch = 0 : i64, scratch_operands = 1 : i64, tpu.core_type = #tpu.core_type<tc>, window_params = [{pipeline_mode = #tpu.pipeline_mode<synchronous>, transform_indices = @transform_0, window_bounds = array<i64: 8, 16>}, {pipeline_mode = #tpu.pipeline_mode<synchronous>, transform_indices = @transform_1, window_bounds = array<i64: 8, 4>}, {transform_indices = @transform_2, window_bounds = array<i64: 1, 16, 350>}, {transform_indices = @transform_3, window_bounds = array<i64: 1, 4, 350>}, {transform_indices = @transform_4, window_bounds = array<i64: 1, 1, 350>}, {transform_indices = @transform_5, window_bounds = array<i64: 1, 350, 1300>}, {pipeline_mode = #tpu.pipeline_mode<synchronous>, transform_indices = @transform_6, window_bounds = array<i64: 1, 1300>}, {pipeline_mode = #tpu.pipeline_mode<synchronous>, transform_indices = @transform_7, window_bounds = array<i64: 1, 1300>}, {pipeline_mode = #tpu.pipeline_mode<synchronous>, transform_indices = @transform_8, window_bounds = array<i64: 1300, 4>}, {pipeline_mode = #tpu.pipeline_mode<synchronous>, transform_indices = @transform_9, window_bounds = array<i64: 1, 4>}, {pipeline_mode = #tpu.pipeline_mode<synchronous>, transform_indices = @transform_10, window_bounds = array<i64: 8, 4>}]} {
    %c0_i32 = arith.constant 0 : i32
    %0 = arith.cmpi eq, %arg0, %c0_i32 : i32
    %1 = arith.extui %0 : i1 to i32
    %c0_i32_0 = arith.constant 0 : i32
    %2 = arith.cmpi ne, %1, %c0_i32_0 : i32
    scf.if %2 {
      %cst_26 = arith.constant 0.000000e+00 : f32
      %37 = vector.broadcast %cst_26 : f32 to vector<8x1300xf32>
      %c0_27 = arith.constant 0 : index
      %c0_28 = arith.constant 0 : index
      %38 = vector.load %arg12[%c0_27, %c0_28] : memref<8x1300xf32, #tpu.memory_space<vmem>>, vector<8x1300xf32>
      tpu.vector_store %arg12[%c0_27, %c0_28], %37 {strides = array<i32>} : memref<8x1300xf32, #tpu.memory_space<vmem>>, vector<8x1300xf32>,
    } else {
    }
    %c0 = arith.constant 0 : index
    %c0_1 = arith.constant 0 : index
    %3 = vector.load %arg1[%c0, %c0_1] : memref<8x16xf32, #tpu.memory_space<vmem>>, vector<8x16xf32>
    %c0_2 = arith.constant 0 : index
    %c0_3 = arith.constant 0 : index
    %c0_4 = arith.constant 0 : index
    %4 = vector.load %arg3[%c0_2, %c0_3, %c0_4] : memref<1x16x350xf32, #tpu.memory_space<vmem>>, vector<1x16x350xf32>
    %5 = vector.shape_cast %4 : vector<1x16x350xf32> to vector<16x350xf32>
    %cst = arith.constant dense<0.000000e+00> : vector<8x350xf32>
    %6 = tpu.matmul %3, %5, %cst {dimension_numbers = #tpu.dot_dimension_numbers<[1], [0], [0], [1], [0, 0, 1, 1], [], []>} : vector<8x16xf32>, vector<16x350xf32>, vector<8x350xf32> -> vector<8x350xf32>
    %c0_5 = arith.constant 0 : index
    %c0_6 = arith.constant 0 : index
    %7 = vector.load %arg2[%c0_5, %c0_6] : memref<8x4xf32, #tpu.memory_space<vmem>>, vector<8x4xf32>
    %c0_7 = arith.constant 0 : index
    %c0_8 = arith.constant 0 : index
    %c0_9 = arith.constant 0 : index
    %8 = vector.load %arg4[%c0_7, %c0_8, %c0_9] : memref<1x4x350xf32, #tpu.memory_space<vmem>>, vector<1x4x350xf32>
    %9 = vector.shape_cast %8 : vector<1x4x350xf32> to vector<4x350xf32>
    %cst_10 = arith.constant dense<0.000000e+00> : vector<8x350xf32>
    %10 = tpu.matmul %7, %9, %cst_10 {dimension_numbers = #tpu.dot_dimension_numbers<[1], [0], [0], [1], [0, 0, 1, 1], [], []>} : vector<8x4xf32>, vector<4x350xf32>, vector<8x350xf32> -> vector<8x350xf32>
    %11 = arith.addf %6, %10 : vector<8x350xf32>
    %c0_11 = arith.constant 0 : index
    %c0_12 = arith.constant 0 : index
    %c0_13 = arith.constant 0 : index
    %12 = vector.load %arg5[%c0_11, %c0_12, %c0_13] : memref<1x1x350xf32, #tpu.memory_space<vmem>>, vector<1x1x350xf32>
    %13 = vector.shape_cast %12 : vector<1x1x350xf32> to vector<1x350xf32>
    %14 = vector.broadcast %13 : vector<1x350xf32> to vector<8x350xf32>
    %15 = arith.addf %11, %14 : vector<8x350xf32>
    %cst_14 = arith.constant 2.000000e+01 : f32
    %16 = vector.broadcast %cst_14 : f32 to vector<8x350xf32>
    %17 = arith.minimumf %15, %16 : vector<8x350xf32>
    %18 = math.exp %17 : vector<8x350xf32>
    %cst_15 = arith.constant 2.000000e+00 : f32
    %19 = vector.broadcast %cst_15 : f32 to vector<8x350xf32>
    %20 = arith.addf %18, %19 : vector<8x350xf32>
    %21 = arith.mulf %18, %20 : vector<8x350xf32>
    %22 = arith.mulf %15, %21 : vector<8x350xf32>
    %cst_16 = arith.constant 2.000000e+00 : f32
    %23 = vector.broadcast %cst_16 : f32 to vector<8x350xf32>
    %24 = arith.addf %21, %23 : vector<8x350xf32>
    %25 = tpu.reciprocal %24 {approx = true} : vector<8x350xf32> -> vector<8x350xf32>
    %26 = arith.mulf %22, %25 : vector<8x350xf32>
    %c0_17 = arith.constant 0 : index
    %c0_18 = arith.constant 0 : index
    %c0_19 = arith.constant 0 : index
    %27 = vector.load %arg6[%c0_17, %c0_18, %c0_19] : memref<1x350x1300xi8, #tpu.memory_space<vmem>>, vector<1x350x1300xi8>
    %28 = vector.shape_cast %27 : vector<1x350x1300xi8> to vector<350x1300xi8>
    %29 = arith.sitofp %28 : vector<350x1300xi8> to vector<350x1300xf32>
    %c0_20 = arith.constant 0 : index
    %c0_21 = arith.constant 0 : index
    %30 = vector.load %arg12[%c0_20, %c0_21] : memref<8x1300xf32, #tpu.memory_space<vmem>>, vector<8x1300xf32>
    %cst_22 = arith.constant dense<0.000000e+00> : vector<8x1300xf32>
    %31 = tpu.matmul %26, %29, %cst_22 {dimension_numbers = #tpu.dot_dimension_numbers<[1], [0], [0], [1], [0, 0, 1, 1], [], []>} : vector<8x350xf32>, vector<350x1300xf32>, vector<8x1300xf32> -> vector<8x1300xf32>
    %32 = arith.addf %30, %31 : vector<8x1300xf32>
    %c0_23 = arith.constant 0 : index
    %c0_24 = arith.constant 0 : index
    %33 = vector.load %arg12[%c0_23, %c0_24] : memref<8x1300xf32, #tpu.memory_space<vmem>>, vector<8x1300xf32>
    tpu.vector_store %arg12[%c0_23, %c0_24], %32 {strides = array<i32>} : memref<8x1300xf32, #tpu.memory_space<vmem>>, vector<8x1300xf32>,
    %c3_i32 = arith.constant 3 : i32
    %34 = arith.cmpi eq, %arg0, %c3_i32 : i32
    %35 = arith.extui %34 : i1 to i32
    %c0_i32_25 = arith.constant 0 : i32
    %36 = arith.cmpi ne, %35, %c0_i32_25 : i32
    scf.if %36 {
      %c0_26 = arith.constant 0 : index
      %c0_27 = arith.constant 0 : index
      %37 = vector.load %arg12[%c0_26, %c0_27] : memref<8x1300xf32, #tpu.memory_space<vmem>>, vector<8x1300xf32>
      %c0_28 = arith.constant 0 : index
      %c0_29 = arith.constant 0 : index
      %38 = vector.load %arg7[%c0_28, %c0_29] : memref<1x1300xf32, #tpu.memory_space<vmem>>, vector<1x1300xf32>
      %39 = vector.broadcast %38 : vector<1x1300xf32> to vector<8x1300xf32>
      %40 = arith.mulf %37, %39 : vector<8x1300xf32>
      %c0_30 = arith.constant 0 : index
      %c0_31 = arith.constant 0 : index
      %41 = vector.load %arg8[%c0_30, %c0_31] : memref<1x1300xf32, #tpu.memory_space<vmem>>, vector<1x1300xf32>
      %42 = vector.broadcast %41 : vector<1x1300xf32> to vector<8x1300xf32>
      %43 = arith.addf %40, %42 : vector<8x1300xf32>
      %cst_32 = arith.constant 2.000000e+01 : f32
      %44 = vector.broadcast %cst_32 : f32 to vector<8x1300xf32>
      %45 = arith.minimumf %43, %44 : vector<8x1300xf32>
      %46 = math.exp %45 : vector<8x1300xf32>
      %cst_33 = arith.constant 2.000000e+00 : f32
      %47 = vector.broadcast %cst_33 : f32 to vector<8x1300xf32>
      %48 = arith.addf %46, %47 : vector<8x1300xf32>
      %49 = arith.mulf %46, %48 : vector<8x1300xf32>
      %50 = arith.mulf %43, %49 : vector<8x1300xf32>
      %cst_34 = arith.constant 2.000000e+00 : f32
      %51 = vector.broadcast %cst_34 : f32 to vector<8x1300xf32>
      %52 = arith.addf %49, %51 : vector<8x1300xf32>
      %53 = tpu.reciprocal %52 {approx = true} : vector<8x1300xf32> -> vector<8x1300xf32>
      %54 = arith.mulf %50, %53 : vector<8x1300xf32>
      %c0_35 = arith.constant 0 : index
      %c0_36 = arith.constant 0 : index
      %55 = vector.load %arg9[%c0_35, %c0_36] : memref<1300x4xf32, #tpu.memory_space<vmem>>, vector<1300x4xf32>
      %cst_37 = arith.constant dense<0.000000e+00> : vector<8x4xf32>
      %56 = tpu.matmul %54, %55, %cst_37 {dimension_numbers = #tpu.dot_dimension_numbers<[1], [0], [0], [1], [0, 0, 1, 1], [], []>} : vector<8x1300xf32>, vector<1300x4xf32>, vector<8x4xf32> -> vector<8x4xf32>
      %c0_38 = arith.constant 0 : index
      %c0_39 = arith.constant 0 : index
      %57 = vector.load %arg10[%c0_38, %c0_39] : memref<1x4xf32, #tpu.memory_space<vmem>>, vector<1x4xf32>
      %58 = vector.broadcast %57 : vector<1x4xf32> to vector<8x4xf32>
      %59 = arith.addf %56, %58 : vector<8x4xf32>
      %60 = math.tanh %59 : vector<8x4xf32>
      %cst_40 = arith.constant 5.000000e-02 : f32
      %61 = vector.broadcast %cst_40 : f32 to vector<8x4xf32>
      %62 = arith.mulf %61, %60 : vector<8x4xf32>
      %c0_41 = arith.constant 0 : index
      %c0_42 = arith.constant 0 : index
      %63 = vector.load %arg2[%c0_41, %c0_42] : memref<8x4xf32, #tpu.memory_space<vmem>>, vector<8x4xf32>
      %64 = arith.addf %62, %63 : vector<8x4xf32>
      %cst_43 = arith.constant -1.000000e+00 : f32
      %cst_44 = arith.constant 1.000000e+00 : f32
      %65 = vector.broadcast %cst_43 : f32 to vector<8x4xf32>
      %66 = arith.maximumf %65, %64 : vector<8x4xf32>
      %67 = vector.broadcast %cst_44 : f32 to vector<8x4xf32>
      %68 = arith.minimumf %67, %66 : vector<8x4xf32>
      %c0_45 = arith.constant 0 : index
      %c0_46 = arith.constant 0 : index
      %69 = vector.load %arg11[%c0_45, %c0_46] : memref<8x4xf32, #tpu.memory_space<vmem>>, vector<8x4xf32>
      tpu.vector_store %arg11[%c0_45, %c0_46], %68 {strides = array<i32>} : memref<8x4xf32, #tpu.memory_space<vmem>>, vector<8x4xf32>,
    } else {
    }
    return
  }
  func.func @transform_0(%arg0: i32) -> (i32, i32) {
    %c0_i32 = arith.constant 0 : i32
    %c0_i32_0 = arith.constant 0 : i32
    %c0_i32_1 = arith.constant 0 : i32
    return %c0_i32, %c0_i32_0 : i32, i32
  }
  func.func @transform_1(%arg0: i32) -> (i32, i32) {
    %c0_i32 = arith.constant 0 : i32
    %c0_i32_0 = arith.constant 0 : i32
    %c0_i32_1 = arith.constant 0 : i32
    return %c0_i32, %c0_i32_0 : i32, i32
  }
  func.func @transform_2(%arg0: i32) -> (i32, i32, i32) {
    %c0_i32 = arith.constant 0 : i32
    %c0_i32_0 = arith.constant 0 : i32
    %c0_i32_1 = arith.constant 0 : i32
    return %arg0, %c0_i32, %c0_i32_0 : i32, i32, i32
  }
  func.func @transform_3(%arg0: i32) -> (i32, i32, i32) {
    %c0_i32 = arith.constant 0 : i32
    %c0_i32_0 = arith.constant 0 : i32
    %c0_i32_1 = arith.constant 0 : i32
    return %arg0, %c0_i32, %c0_i32_0 : i32, i32, i32
  }
  func.func @transform_4(%arg0: i32) -> (i32, i32, i32) {
    %c0_i32 = arith.constant 0 : i32
    %c0_i32_0 = arith.constant 0 : i32
    %c0_i32_1 = arith.constant 0 : i32
    return %arg0, %c0_i32, %c0_i32_0 : i32, i32, i32
  }
  func.func @transform_5(%arg0: i32) -> (i32, i32, i32) {
    %c0_i32 = arith.constant 0 : i32
    %c0_i32_0 = arith.constant 0 : i32
    %c0_i32_1 = arith.constant 0 : i32
    return %arg0, %c0_i32, %c0_i32_0 : i32, i32, i32
  }
  func.func @transform_6(%arg0: i32) -> (i32, i32) {
    %c0_i32 = arith.constant 0 : i32
    %c0_i32_0 = arith.constant 0 : i32
    %c0_i32_1 = arith.constant 0 : i32
    return %c0_i32, %c0_i32_0 : i32, i32
  }
  func.func @transform_7(%arg0: i32) -> (i32, i32) {
    %c0_i32 = arith.constant 0 : i32
    %c0_i32_0 = arith.constant 0 : i32
    %c0_i32_1 = arith.constant 0 : i32
    return %c0_i32, %c0_i32_0 : i32, i32
  }
  func.func @transform_8(%arg0: i32) -> (i32, i32) {
    %c0_i32 = arith.constant 0 : i32
    %c0_i32_0 = arith.constant 0 : i32
    %c0_i32_1 = arith.constant 0 : i32
    return %c0_i32, %c0_i32_0 : i32, i32
  }
  func.func @transform_9(%arg0: i32) -> (i32, i32) {
    %c0_i32 = arith.constant 0 : i32
    %c0_i32_0 = arith.constant 0 : i32
    %c0_i32_1 = arith.constant 0 : i32
    return %c0_i32, %c0_i32_0 : i32, i32
  }
  func.func @transform_10(%arg0: i32) -> (i32, i32) {
    %c0_i32 = arith.constant 0 : i32
    %c0_i32_0 = arith.constant 0 : i32
    %c0_i32_1 = arith.constant 0 : i32
    return %c0_i32, %c0_i32_0 : i32, i32
  }
}

</mosaic_0001>

<llo_original>
// kernel: tpu_custom_call.1
$region0: #{tpu_custom_call.1}
  #allocation0 [shape = 'u32[]', space=smem, size = 0x4, offset = 0x4, fixed_abs, tag = 'smem constant byte address 0x4 - core index']
  #allocation1 [shape = 'u32[144,128]{1,0:T(1,128)}', space=vmem, size = 0x12000, scoped, tag = 'internal scratch']
  #allocation2 [shape = 'f32[8,1300]{1,0:T(8,128)}', space=vmem, size = 0xb000, scoped, tag = 'scratch operand']
  %s0 = inlined_call_operand.vmem [shape: f32[8,16], index: 0, kind: input, shape index: {}]
  %s1 = inlined_call_operand.vmem [shape: f32[8,4], index: 1, kind: input, shape index: {}]
  %s2 = inlined_call_operand.vmem [shape: f32[4,16,350], index: 2, kind: input, shape index: {}]
  %s3 = inlined_call_operand.vmem [shape: f32[4,4,350], index: 3, kind: input, shape index: {}]
  %s4 = inlined_call_operand.vmem [shape: f32[4,1,350], index: 4, kind: input, shape index: {}]
  %s5 = inlined_call_operand.vmem [shape: s8[4,350,1300], index: 5, kind: input, shape index: {}]
  %s6 = inlined_call_operand.vmem [shape: f32[1,1300], index: 6, kind: input, shape index: {}]
  %s7 = inlined_call_operand.vmem [shape: f32[1,1300], index: 7, kind: input, shape index: {}]
  %s8 = inlined_call_operand.vmem [shape: f32[1300,4], index: 8, kind: input, shape index: {}]
  %s9 = inlined_call_operand.vmem [shape: f32[1,4], index: 9, kind: input, shape index: {}]
  %s10 = inlined_call_operand.vmem [shape: f32[8,4], index: 10, kind: output, shape index: {}]
  %s11 = sld [smem:[#allocation0]]
  $region81: #{tpu_custom_call.1} parent=0
    _
  %s13 = ssub.s32 1, %s11
  %s14 = scalar_select 0, %s13, %s11
  loop: start=0, step=1, limit=6
  $region2: #{tpu_custom_call.1} parent=0 // loop_pre_header
    _
  $region3: #{tpu_custom_call.1} parent=0 // loop_header
    %s16 = sphi 0, %s20
    %p17 = scmp.ge.s32.totalorder %s16, 6
    %s24 = sphi 0, %s24
    %s26 = sphi 0, %s24
    %s27 = sphi 0, %s26
    %s41 = sphi 0, %s27
    %s45 = sphi 0, %s45
    %s47 = sphi 0, %s45
    %s48 = sphi 0, %s47
    %s62 = sphi 0, %s48
    %s68 = sphi 0, %s70
    %s71 = sphi 0, %s68
    %s72 = sphi 0, %s71
    %s88 = sphi 0, %s72
    %s94 = sphi 0, %s96
    %s97 = sphi 0, %s94
    %s98 = sphi 0, %s97
    %s114 = sphi 0, %s98
    %s120 = sphi 0, %s122
    %s123 = sphi 0, %s120
    %s124 = sphi 0, %s123
    %s140 = sphi 0, %s124
    %s146 = sphi 0, %s148
    %s149 = sphi 0, %s146
    %s150 = sphi 0, %s149
    %s166 = sphi 0, %s150
    %s170 = sphi 0, %s170
    %s172 = sphi 0, %s170
    %s173 = sphi 0, %s172
    %s187 = sphi 0, %s173
    %s191 = sphi 0, %s191
    %s193 = sphi 0, %s191
    %s194 = sphi 0, %s193
    %s208 = sphi 0, %s194
    %s212 = sphi 0, %s212
    %s214 = sphi 0, %s212
    %s215 = sphi 0, %s214
    %s229 = sphi 0, %s215
    %s233 = sphi 0, %s233
    %s235 = sphi 0, %s233
    %s236 = sphi 0, %s235
    %s250 = sphi 0, %s236
    %s254 = sphi 0, %s254
    %s256 = sphi 0, %s254
    %s257 = sphi 0, %s256
    %s271 = sphi 0, %s257
  $region4: #{tpu_custom_call.1} parent=0 // loop_header_branch
    %19 = sbr.rel (%p17) target = $region8
  $region5: #{tpu_custom_call.1} parent=0 // loop_body
    %s21 = ssub.s32 %s16, 1
    %s22 = ssub.s32 %s16, 2
    %s23 = sadd.s32 %s16, 1
    %s25 = sadd.s32 %s24, 1
    %p28 = scmp.eq.s32.totalorder %s16, 3
    %p29 = scmp.ne.s32.totalorder %s24, %s26
    %p30 = scmp.eq.s32.totalorder %s16, 0
    %p31 = por %p29, %p30
    %p32 = scmp.ne.s32.totalorder %s24, %s26
    %p33 = scmp.eq.s32.totalorder %s21, 3
    %p34 = por %p32, %p33
    %p35 = scmp.ne.s32.totalorder %s26, %s27
    %p36 = scmp.eq.s32.totalorder %s21, 0
    %p37 = por %p35, %p36
    %p38 = scmp.ne.s32.totalorder %s26, %s27
    %p39 = scmp.eq.s32.totalorder %s22, 3
    %p40 = por %p38, %p39
    %p42 = scmp.ne.s32.totalorder %s27, %s41
    %p43 = scmp.eq.s32.totalorder %s22, 0
    %p44 = por %p42, %p43
    %s46 = sadd.s32 %s45, 1
    %p49 = scmp.eq.s32.totalorder %s16, 3
    %p50 = scmp.ne.s32.totalorder %s45, %s47
    %p51 = scmp.eq.s32.totalorder %s16, 0
    %p52 = por %p50, %p51
    %p53 = scmp.ne.s32.totalorder %s45, %s47
    %p54 = scmp.eq.s32.totalorder %s21, 3
    %p55 = por %p53, %p54
    %p56 = scmp.ne.s32.totalorder %s47, %s48
    %p57 = scmp.eq.s32.totalorder %s21, 0
    %p58 = por %p56, %p57
    %p59 = scmp.ne.s32.totalorder %s47, %s48
    %p60 = scmp.eq.s32.totalorder %s22, 3
    %p61 = por %p59, %p60
    %p63 = scmp.ne.s32.totalorder %s48, %s62
    %p64 = scmp.eq.s32.totalorder %s22, 0
    %p65 = por %p63, %p64
    %s66 = ssub.s32 %s16, %s23
    %p67 = scmp.eq.s32.totalorder %s66, 0
    %s69 = sadd.s32 %s68, 1
    %s70 = scalar_select %p67, %s68, %s69
    %p73 = pneg %p67
    %p74 = scmp.eq.s32.totalorder %s16, 3
    %p75 = por %p73, %p74
    %p76 = scmp.ne.s32.totalorder %s68, %s71
    %p77 = scmp.eq.s32.totalorder %s16, 0
    %p78 = por %p76, %p77
    %p79 = scmp.ne.s32.totalorder %s68, %s71
    %p80 = scmp.eq.s32.totalorder %s21, 3
    %p81 = por %p79, %p80
    %p82 = scmp.ne.s32.totalorder %s71, %s72
    %p83 = scmp.eq.s32.totalorder %s21, 0
    %p84 = por %p82, %p83
    %p85 = scmp.ne.s32.totalorder %s71, %s72
    %p86 = scmp.eq.s32.totalorder %s22, 3
    %p87 = por %p85, %p86
    %p89 = scmp.ne.s32.totalorder %s72, %s88
    %p90 = scmp.eq.s32.totalorder %s22, 0
    %p91 = por %p89, %p90
    %s92 = ssub.s32 %s16, %s23
    %p93 = scmp.eq.s32.totalorder %s92, 0
    %s95 = sadd.s32 %s94, 1
    %s96 = scalar_select %p93, %s94, %s95
    %p99 = pneg %p93
    %p100 = scmp.eq.s32.totalorder %s16, 3
    %p101 = por %p99, %p100
    %p102 = scmp.ne.s32.totalorder %s94, %s97
    %p103 = scmp.eq.s32.totalorder %s16, 0
    %p104 = por %p102, %p103
    %p105 = scmp.ne.s32.totalorder %s94, %s97
    %p106 = scmp.eq.s32.totalorder %s21, 3
    %p107 = por %p105, %p106
    %p108 = scmp.ne.s32.totalorder %s97, %s98
    %p109 = scmp.eq.s32.totalorder %s21, 0
    %p110 = por %p108, %p109
    %p111 = scmp.ne.s32.totalorder %s97, %s98
    %p112 = scmp.eq.s32.totalorder %s22, 3
    %p113 = por %p111, %p112
    %p115 = scmp.ne.s32.totalorder %s98, %s114
    %p116 = scmp.eq.s32.totalorder %s22, 0
    %p117 = por %p115, %p116
    %s118 = ssub.s32 %s16, %s23
    %p119 = scmp.eq.s32.totalorder %s118, 0
    %s121 = sadd.s32 %s120, 1
    %s122 = scalar_select %p119, %s120, %s121
    %p125 = pneg %p119
    %p126 = scmp.eq.s32.totalorder %s16, 3
    %p127 = por %p125, %p126
    %p128 = scmp.ne.s32.totalorder %s120, %s123
    %p129 = scmp.eq.s32.totalorder %s16, 0
    %p130 = por %p128, %p129
    %p131 = scmp.ne.s32.totalorder %s120, %s123
    %p132 = scmp.eq.s32.totalorder %s21, 3
    %p133 = por %p131, %p132
    %p134 = scmp.ne.s32.totalorder %s123, %s124
    %p135 = scmp.eq.s32.totalorder %s21, 0
    %p136 = por %p134, %p135
    %p137 = scmp.ne.s32.totalorder %s123, %s124
    %p138 = scmp.eq.s32.totalorder %s22, 3
    %p139 = por %p137, %p138
    %p141 = scmp.ne.s32.totalorder %s124, %s140
    %p142 = scmp.eq.s32.totalorder %s22, 0
    %p143 = por %p141, %p142
    %s144 = ssub.s32 %s16, %s23
    %p145 = scmp.eq.s32.totalorder %s144, 0
    %s147 = sadd.s32 %s146, 1
    %s148 = scalar_select %p145, %s146, %s147
    %p151 = pneg %p145
    %p152 = scmp.eq.s32.totalorder %s16, 3
    %p153 = por %p151, %p152
    %p154 = scmp.ne.s32.totalorder %s146, %s149
    %p155 = scmp.eq.s32.totalorder %s16, 0
    %p156 = por %p154, %p155
    %p157 = scmp.ne.s32.totalorder %s146, %s149
    %p158 = scmp.eq.s32.totalorder %s21, 3
    %p159 = por %p157, %p158
    %p160 = scmp.ne.s32.totalorder %s149, %s150
    %p161 = scmp.eq.s32.totalorder %s21, 0
    %p162 = por %p160, %p161
    %p163 = scmp.ne.s32.totalorder %s149, %s150
    %p164 = scmp.eq.s32.totalorder %s22, 3
    %p165 = por %p163, %p164
    %p167 = scmp.ne.s32.totalorder %s150, %s166
    %p168 = scmp.eq.s32.totalorder %s22, 0
    %p169 = por %p167, %p168
    %s171 = sadd.s32 %s170, 1
    %p174 = scmp.eq.s32.totalorder %s16, 3
    %p175 = scmp.ne.s32.totalorder %s170, %s172
    %p176 = scmp.eq.s32.totalorder %s16, 0
    %p177 = por %p175, %p176
    %p178 = scmp.ne.s32.totalorder %s170, %s172
    %p179 = scmp.eq.s32.totalorder %s21, 3
    %p180 = por %p178, %p179
    %p181 = scmp.ne.s32.totalorder %s172, %s173
    %p182 = scmp.eq.s32.totalorder %s21, 0
    %p183 = por %p181, %p182
    %p184 = scmp.ne.s32.totalorder %s172, %s173
    %p185 = scmp.eq.s32.totalorder %s22, 3
    %p186 = por %p184, %p185
    %p188 = scmp.ne.s32.totalorder %s173, %s187
    %p189 = scmp.eq.s32.totalorder %s22, 0
    %p190 = por %p188, %p189
    %s192 = sadd.s32 %s191, 1
    %p195 = scmp.eq.s32.totalorder %s16, 3
    %p196 = scmp.ne.s32.totalorder %s191, %s193
    %p197 = scmp.eq.s32.totalorder %s16, 0
    %p198 = por %p196, %p197
    %p199 = scmp.ne.s32.totalorder %s191, %s193
    %p200 = scmp.eq.s32.totalorder %s21, 3
    %p201 = por %p199, %p200
    %p202 = scmp.ne.s32.totalorder %s193, %s194
    %p203 = scmp.eq.s32.totalorder %s21, 0
    %p204 = por %p202, %p203
    %p205 = scmp.ne.s32.totalorder %s193, %s194
    %p206 = scmp.eq.s32.totalorder %s22, 3
    %p207 = por %p205, %p206
    %p209 = scmp.ne.s32.totalorder %s194, %s208
    %p210 = scmp.eq.s32.totalorder %s22, 0
    %p211 = por %p209, %p210
    %s213 = sadd.s32 %s212, 1
    %p216 = scmp.eq.s32.totalorder %s16, 3
    %p217 = scmp.ne.s32.totalorder %s212, %s214
    %p218 = scmp.eq.s32.totalorder %s16, 0
    %p219 = por %p217, %p218
    %p220 = scmp.ne.s32.totalorder %s212, %s214
    %p221 = scmp.eq.s32.totalorder %s21, 3
    %p222 = por %p220, %p221
    %p223 = scmp.ne.s32.totalorder %s214, %s215
    %p224 = scmp.eq.s32.totalorder %s21, 0
    %p225 = por %p223, %p224
    %p226 = scmp.ne.s32.totalorder %s214, %s215
    %p227 = scmp.eq.s32.totalorder %s22, 3
    %p228 = por %p226, %p227
    %p230 = scmp.ne.s32.totalorder %s215, %s229
    %p231 = scmp.eq.s32.totalorder %s22, 0
    %p232 = por %p230, %p231
    %s234 = sadd.s32 %s233, 1
    %p237 = scmp.eq.s32.totalorder %s16, 3
    %p238 = scmp.ne.s32.totalorder %s233, %s235
    %p239 = scmp.eq.s32.totalorder %s16, 0
    %p240 = por %p238, %p239
    %p241 = scmp.ne.s32.totalorder %s233, %s235
    %p242 = scmp.eq.s32.totalorder %s21, 3
    %p243 = por %p241, %p242
    %p244 = scmp.ne.s32.totalorder %s235, %s236
    %p245 = scmp.eq.s32.totalorder %s21, 0
    %p246 = por %p244, %p245
    %p247 = scmp.ne.s32.totalorder %s235, %s236
    %p248 = scmp.eq.s32.totalorder %s22, 3
    %p249 = por %p247, %p248
    %p251 = scmp.ne.s32.totalorder %s236, %s250
    %p252 = scmp.eq.s32.totalorder %s22, 0
    %p253 = por %p251, %p252
    %s255 = sadd.s32 %s254, 1
    %p258 = scmp.eq.s32.totalorder %s16, 3
    %p259 = scmp.ne.s32.totalorder %s254, %s256
    %p260 = scmp.eq.s32.totalorder %s16, 0
    %p261 = por %p259, %p260
    %p262 = scmp.ne.s32.totalorder %s254, %s256
    %p263 = scmp.eq.s32.totalorder %s21, 3
    %p264 = por %p262, %p263
    %p265 = scmp.ne.s32.totalorder %s256, %s257
    %p266 = scmp.eq.s32.totalorder %s21, 0
    %p267 = por %p265, %p266
    %p268 = scmp.ne.s32.totalorder %s256, %s257
    %p269 = scmp.eq.s32.totalorder %s22, 3
    %p270 = por %p268, %p269
    %p272 = scmp.ne.s32.totalorder %s257, %s271
    %p273 = scmp.eq.s32.totalorder %s22, 0
    %p274 = por %p272, %p273
    %p275 = scmp.le.s32.totalorder 1, %s16
    %p276 = scmp.lt.s32.totalorder %s16, 5
    %p277 = pnand %p275, %p276
    %p278 = pneg %p277
    // Predicated region
    $region9: #{tpu_custom_call.1} parent=5 // pred_check
      _
    $region10: #{tpu_custom_call.1} parent=5 // pred_check_branch
      %280 = sbr.rel (%p277) target = $region12
    $region11: #{tpu_custom_call.1} parent=5 // pred_region
      %s281 = ssub.s32 %s16, 1
      // Predicated region
      $region13: #{tpu_custom_call.1} parent=11 // pred_check
        %p282 = pneg %p37
      $region14: #{tpu_custom_call.1} parent=11 // pred_check_branch
        %284 = sbr.rel (%p282) target = $region16
      $region15: #{tpu_custom_call.1} parent=11 // pred_region
        _
      $region16: #{tpu_custom_call.1} parent=11 // pred_fallthru
        _
      // Predicated region
      $region17: #{tpu_custom_call.1} parent=11 // pred_check
        %p285 = pneg %p58
      $region18: #{tpu_custom_call.1} parent=11 // pred_check_branch
        %287 = sbr.rel (%p285) target = $region20
      $region19: #{tpu_custom_call.1} parent=11 // pred_region
        _
      $region20: #{tpu_custom_call.1} parent=11 // pred_fallthru
        _
      // Predicated region
      $region21: #{tpu_custom_call.1} parent=11 // pred_check
        %p288 = pneg %p183
      $region22: #{tpu_custom_call.1} parent=11 // pred_check_branch
        %290 = sbr.rel (%p288) target = $region24
      $region23: #{tpu_custom_call.1} parent=11 // pred_region
        _
      $region24: #{tpu_custom_call.1} parent=11 // pred_fallthru
        _
      // Predicated region
      $region25: #{tpu_custom_call.1} parent=11 // pred_check
        %p291 = pneg %p204
      $region26: #{tpu_custom_call.1} parent=11 // pred_check_branch
        %293 = sbr.rel (%p291) target = $region28
      $region27: #{tpu_custom_call.1} parent=11 // pred_region
        _
      $region28: #{tpu_custom_call.1} parent=11 // pred_fallthru
        _
      // Predicated region
      $region29: #{tpu_custom_call.1} parent=11 // pred_check
        %p294 = pneg %p225
      $region30: #{tpu_custom_call.1} parent=11 // pred_check_branch
        %296 = sbr.rel (%p294) target = $region32
      $region31: #{tpu_custom_call.1} parent=11 // pred_region
        _
      $region32: #{tpu_custom_call.1} parent=11 // pred_fallthru
        _
      // Predicated region
      $region33: #{tpu_custom_call.1} parent=11 // pred_check
        %p297 = pneg %p246
      $region34: #{tpu_custom_call.1} parent=11 // pred_check_branch
        %299 = sbr.rel (%p297) target = $region36
      $region35: #{tpu_custom_call.1} parent=11 // pred_region
        _
      $region36: #{tpu_custom_call.1} parent=11 // pred_fallthru
        _
    $region12: #{tpu_custom_call.1} parent=5 // pred_fallthru
      _
    %p300 = scmp.lt.s32.totalorder %s16, 4
    // Predicated region
    $region37: #{tpu_custom_call.1} parent=5 // pred_check
      %p301 = pneg %p300
    $region38: #{tpu_custom_call.1} parent=5 // pred_check_branch
      %303 = sbr.rel (%p301) target = $region40
    $region39: #{tpu_custom_call.1} parent=5 // pred_region
      // Predicated region
      $region41: #{tpu_custom_call.1} parent=39 // pred_check
        %p304 = pneg %p78
      $region42: #{tpu_custom_call.1} parent=39 // pred_check_branch
        %306 = sbr.rel (%p304) target = $region44
      $region43: #{tpu_custom_call.1} parent=39 // pred_region
        %p307 = scmp.lt.s32.totalorder %s16, 3
        %s308 = scalar_select %p307, %s16, 3
        %s309 = smul.addr %s308, 6
        %s310 = smul.addr %s309, 8
        %s311 = scalar_lea.vmem %s2, %s310
      $region44: #{tpu_custom_call.1} parent=39 // pred_fallthru
        _
      // Predicated region
      $region45: #{tpu_custom_call.1} parent=39 // pred_check
        %p312 = pneg %p104
      $region46: #{tpu_custom_call.1} parent=39 // pred_check_branch
        %314 = sbr.rel (%p312) target = $region48
      $region47: #{tpu_custom_call.1} parent=39 // pred_region
        %p315 = scmp.lt.s32.totalorder %s16, 3
        %s316 = scalar_select %p315, %s16, 3
        %s317 = smul.addr %s316, 3
        %s318 = smul.addr %s317, 4
        %s319 = scalar_lea.vmem %s3, %s318
      $region48: #{tpu_custom_call.1} parent=39 // pred_fallthru
        _
      // Predicated region
      $region49: #{tpu_custom_call.1} parent=39 // pred_check
        %p320 = pneg %p130
      $region50: #{tpu_custom_call.1} parent=39 // pred_check_branch
        %322 = sbr.rel (%p320) target = $region52
      $region51: #{tpu_custom_call.1} parent=39 // pred_region
        %p323 = scmp.lt.s32.totalorder %s16, 3
        %s324 = scalar_select %p323, %s16, 3
        %s325 = smul.addr %s324, 3
        %s326 = scalar_lea.vmem %s4, %s325
      $region52: #{tpu_custom_call.1} parent=39 // pred_fallthru
        _
      // Predicated region
      $region53: #{tpu_custom_call.1} parent=39 // pred_check
        %p327 = pneg %p156
      $region54: #{tpu_custom_call.1} parent=39 // pred_check_branch
        %329 = sbr.rel (%p327) target = $region56
      $region55: #{tpu_custom_call.1} parent=39 // pred_region
        %p330 = scmp.lt.s32.totalorder %s16, 3
        %s331 = scalar_select %p330, %s16, 3
        %s332 = smul.addr %s331, 484
        %s333 = smul.addr %s332, 2
        %s334 = scalar_lea.vmem %s5, %s333
      $region56: #{tpu_custom_call.1} parent=39 // pred_fallthru
        _
    $region40: #{tpu_custom_call.1} parent=5 // pred_fallthru
      _
    %p335 = scmp.le.s32.totalorder 1, %s16
    %p336 = scmp.lt.s32.totalorder %s16, 5
    %p337 = pnand %p335, %p336
    %p338 = pneg %p337
    // Predicated region
    $region57: #{tpu_custom_call.1} parent=5 // pred_check
      _
    $region58: #{tpu_custom_call.1} parent=5 // pred_check_branch
      %340 = sbr.rel (%p337) target = $region60
    $region59: #{tpu_custom_call.1} parent=5 // pred_region
      %s341 = ssub.s32 %s16, 1
      %p342 = pneg %p37
      %p343 = pneg %p34
      %p344 = pneg %p58
      %p345 = pneg %p55
      %p346 = scmp.lt.s32.totalorder %s21, 3
      %s347 = scalar_select %p346, %s21, 3
      %s348 = smul.addr %s347, 6
      %s349 = smul.addr %s348, 8
      %s350 = scalar_lea.vmem %s2, %s349
      %p351 = pneg %p84
      %p352 = pneg %p81
      %p353 = scmp.lt.s32.totalorder %s21, 3
      %s354 = scalar_select %p353, %s21, 3
      %s355 = smul.addr %s354, 3
      %s356 = smul.addr %s355, 4
      %s357 = scalar_lea.vmem %s3, %s356
      %p358 = pneg %p110
      %p359 = pneg %p107
      %p360 = scmp.lt.s32.totalorder %s21, 3
      %s361 = scalar_select %p360, %s21, 3
      %s362 = smul.addr %s361, 3
      %s363 = scalar_lea.vmem %s4, %s362
      %p364 = pneg %p136
      %p365 = pneg %p133
      %p366 = scmp.lt.s32.totalorder %s21, 3
      %s367 = scalar_select %p366, %s21, 3
      %s368 = smul.addr %s367, 484
      %s369 = smul.addr %s368, 2
      %s370 = scalar_lea.vmem %s5, %s369
      %p371 = pneg %p162
      %p372 = pneg %p159
      %p373 = pneg %p183
      %p374 = pneg %p180
      %p375 = pneg %p204
      %p376 = pneg %p201
      %p377 = pneg %p225
      %p378 = pneg %p222
      %p379 = pneg %p246
      %p380 = pneg %p243
      %p381 = pneg %p267
      %p382 = pneg %p264
      %p383 = scmp.lt.s32.totalorder %s21, 3
      %s384 = scalar_select %p383, %s21, 3
      %s385 = smul.addr %s384, 6
      %s386 = smul.addr %s385, 8
      %s387 = scalar_lea.vmem %s2, %s386
      %p388 = scmp.lt.s32.totalorder %s21, 3
      %s389 = scalar_select %p388, %s21, 3
      %s390 = smul.addr %s389, 3
      %s391 = smul.addr %s390, 4
      %s392 = scalar_lea.vmem %s3, %s391
      %p393 = scmp.lt.s32.totalorder %s21, 3
      %s394 = scalar_select %p393, %s21, 3
      %s395 = smul.addr %s394, 3
      %s396 = scalar_lea.vmem %s4, %s395
      %p397 = scmp.lt.s32.totalorder %s21, 3
      %s398 = scalar_select %p397, %s21, 3
      %s399 = smul.addr %s398, 484
      %s400 = smul.addr %s399, 2
      %s401 = scalar_lea.vmem %s5, %s400
      %p402 = scmp.eq.s32.totalorder %s21, 0
      // Predicated region
      $region61: #{tpu_custom_call.1} parent=59 // pred_check
        %p403 = pneg %p402
      $region62: #{tpu_custom_call.1} parent=59 // pred_check_branch
        %405 = sbr.rel (%p403) target = $region64
      $region63: #{tpu_custom_call.1} parent=59 // pred_region
        %406 = vst [vmem:[#allocation2] sm:$0xff] 0.0
        %407 = vst [vmem:[#allocation2 + $0x8] sm:$0xff] 0.0
        %408 = vst [vmem:[#allocation2 + $0x10] sm:$0xff] 0.0
        %409 = vst [vmem:[#allocation2 + $0x18] sm:$0xff] 0.0
        %410 = vst [vmem:[#allocation2 + $0x20] sm:$0xff] 0.0
        %411 = vst [vmem:[#allocation2 + $0x28] sm:$0xff] 0.0
        %412 = vst [vmem:[#allocation2 + $0x30] sm:$0xff] 0.0
        %413 = vst [vmem:[#allocation2 + $0x38] sm:$0xff] 0.0
        %414 = vst [vmem:[#allocation2 + $0x40] sm:$0xff] 0.0
        %415 = vst [vmem:[#allocation2 + $0x48] sm:$0xff] 0.0
        %vm416 = vcmask 162816
        %417 = vst.msk [vmem:[#allocation2 + $0x50] sm:$0xff] %vm416, 0.0
      $region64: #{tpu_custom_call.1} parent=59 // pred_fallthru
        _
      %v418 = vld [vmem:[%s0] sm:$0xff]
      %v419 = vld [vmem:[%s387] sm:$0xff]
      %v420 = vld [vmem:[%s387 + $0x8] sm:$0xff]
      %v421 = vld [vmem:[%s387 + $0x10] sm:$0xff]
      %v422 = vld [vmem:[%s387 + $0x18] sm:$0xff]
      %v423 = vld [vmem:[%s387 + $0x20] sm:$0xff]
      %v424 = vld [vmem:[%s387 + $0x28] sm:$0xff]
      %v425 = vld [vmem:[%s1] sm:$0xff]
      %v426 = vld [vmem:[%s392] sm:$0xff]
      %v427 = vld [vmem:[%s392 + $0x8] sm:$0xf]
      %v430 = vcombine.high %v426, %v426
      %vm431 = vcmask 31744
      %v433 = vsel %vm431, %v425, 0
      %vm435 = vcmask 1043456
      %v436 = vsel %vm435, %v426, 0
      %v438 = vsel %vm435, %v430, 0
      %v440 = vsel %vm435, %v427, 0
      %442 = vmatprep.subr.mxu0 0.0
      %443 = vmatpush1.msra.mxu0 0.0
      %444 = vmatprep.subr.mxu0 0.0
      %445 = vmatpush1.msra.mxu0 0.0
      %446 = vmatprep.subr.mxu0 0.0
      %447 = vmatpush1.msra.mxu0 0.0
      %448 = vmatprep.subr.mxu0 0.0
      %449 = vmatpush1.msra.mxu0 0.0
      %450 = vmatprep.subr.mxu0 0.0
      %451 = vmatpush1.msra.mxu0 0.0
      %452 = vmatprep.subr.mxu0 0.0
      %453 = vmatpush1.msra.mxu0 0.0
      %454 = vmatprep.subr.mxu0 0.0
      %455 = vmatpush1.msra.mxu0 0.0
      %456 = vmatprep.subr.mxu0 0.0
      %457 = vmatpush1.msra.mxu0 0.0
      %458 = vmatprep.subr.mxu0 0.0
      %459 = vmatpush1.msra.mxu0 0.0
      %460 = vmatprep.subr.mxu0 0.0
      %461 = vmatpush1.msra.mxu0 0.0
      %462 = vmatprep.subr.mxu0 0.0
      %463 = vmatpush1.msra.mxu0 0.0
      %464 = vmatprep.subr.mxu0 0.0
      %465 = vmatpush1.msra.mxu0 0.0
      %466 = vmatprep.subr.mxu0 0.0
      %467 = vmatpush1.msra.mxu0 0.0
      %468 = vmatprep.subr.mxu0 0.0
      %469 = vmatpush1.msra.mxu0 0.0
      %470 = vmatprep.subr.mxu0 0.0
      %471 = vmatpush1.msra.mxu0 0.0
      %472 = vmatprep.subr.mxu0 %v438
      %473 = vmatpush1.msra.mxu0 %v436
      %474 = vmatprep.subr.mxu0 0.0
      %475 = vmatpush2.msra.mxu0 0.0
      %476 = vmatprep.subr.mxu0 0.0
      %477 = vmatpush2.msra.mxu0 0.0
      %478 = vmatprep.subr.mxu0 0.0
      %479 = vmatpush2.msra.mxu0 0.0
      %480 = vmatprep.subr.mxu0 0.0
      %481 = vmatpush2.msra.mxu0 0.0
      %482 = vmatprep.subr.mxu0 0.0
      %483 = vmatpush2.msra.mxu0 0.0
      %484 = vmatprep.subr.mxu0 0.0
      %485 = vmatpush2.msra.mxu0 0.0
      %486 = vmatprep.subr.mxu0 0.0
      %487 = vmatpush2.msra.mxu0 0.0
      %488 = vmatprep.subr.mxu0 0.0
      %489 = vmatpush2.msra.mxu0 0.0
      %490 = vmatprep.subr.mxu0 0.0
      %491 = vmatpush2.msra.mxu0 0.0
      %492 = vmatprep.subr.mxu0 0.0
      %493 = vmatpush2.msra.mxu0 0.0
      %494 = vmatprep.subr.mxu0 0.0
      %495 = vmatpush2.msra.mxu0 0.0
      %496 = vmatprep.subr.mxu0 0.0
      %497 = vmatpush2.msra.mxu0 0.0
      %498 = vmatprep.subr.mxu0 0.0
      %499 = vmatpush2.msra.mxu0 0.0
      %500 = vmatprep.subr.mxu0 0.0
      %501 = vmatpush2.msra.mxu0 0.0
      %502 = vmatprep.subr.mxu0 0.0
      %503 = vmatpush2.msra.mxu0 0.0
      %504 = vmatprep.subr.mxu0 0.0
      %505 = vmatpush2.msra.mxu0 0.0
      %506 = vmatprep.mubr.f32.mxu0 0.0
      %507 = vmatmul.mubr.f32.gmra.mxu0 %v433
      %v508 = vpop.f32.mrf.mxu0
      %v509 = vadd.f32 0.0, %v508
      %v510 = vpop.f32.mrf.mxu0
      %v511 = vadd.f32 0.0, %v510
      %512 = vdwg.mxu0
      %513 = vmatprep.subr.mxu0 0.0
      %514 = vmatpush1.msra.mxu0 0.0
      %515 = vmatprep.subr.mxu0 0.0
      %516 = vmatpush1.msra.mxu0 0.0
      %517 = vmatprep.subr.mxu0 0.0
      %518 = vmatpush1.msra.mxu0 0.0
      %519 = vmatprep.subr.mxu0 0.0
      %520 = vmatpush1.msra.mxu0 0.0
      %521 = vmatprep.subr.mxu0 0.0
      %522 = vmatpush1.msra.mxu0 0.0
      %523 = vmatprep.subr.mxu0 0.0
      %524 = vmatpush1.msra.mxu0 0.0
      %525 = vmatprep.subr.mxu0 0.0
      %526 = vmatpush1.msra.mxu0 0.0
      %527 = vmatprep.subr.mxu0 0.0
      %528 = vmatpush1.msra.mxu0 0.0
      %529 = vmatprep.subr.mxu0 0.0
      %530 = vmatpush1.msra.mxu0 0.0
      %531 = vmatprep.subr.mxu0 0.0
      %532 = vmatpush1.msra.mxu0 0.0
      %533 = vmatprep.subr.mxu0 0.0
      %534 = vmatpush1.msra.mxu0 0.0
      %535 = vmatprep.subr.mxu0 0.0
      %536 = vmatpush1.msra.mxu0 0.0
      %537 = vmatprep.subr.mxu0 0.0
      %538 = vmatpush1.msra.mxu0 0.0
      %539 = vmatprep.subr.mxu0 0.0
      %540 = vmatpush1.msra.mxu0 0.0
      %541 = vmatprep.subr.mxu0 0.0
      %542 = vmatpush1.msra.mxu0 0.0
      %543 = vmatprep.subr.mxu0 0.0
      %544 = vmatpush1.msra.mxu0 %v440
      %545 = vmatprep.subr.mxu0 0.0
      %546 = vmatpush2.msra.mxu0 0.0
      %547 = vmatprep.subr.mxu0 0.0
      %548 = vmatpush2.msra.mxu0 0.0
      %549 = vmatprep.subr.mxu0 0.0
      %550 = vmatpush2.msra.mxu0 0.0
      %551 = vmatprep.subr.mxu0 0.0
      %552 = vmatpush2.msra.mxu0 0.0
      %553 = vmatprep.subr.mxu0 0.0
      %554 = vmatpush2.msra.mxu0 0.0
      %555 = vmatprep.subr.mxu0 0.0
      %556 = vmatpush2.msra.mxu0 0.0
      %557 = vmatprep.subr.mxu0 0.0
      %558 = vmatpush2.msra.mxu0 0.0
      %559 = vmatprep.subr.mxu0 0.0
      %560 = vmatpush2.msra.mxu0 0.0
      %561 = vmatprep.subr.mxu0 0.0
      %562 = vmatpush2.msra.mxu0 0.0
      %563 = vmatprep.subr.mxu0 0.0
      %564 = vmatpush2.msra.mxu0 0.0
      %565 = vmatprep.subr.mxu0 0.0
      %566 = vmatpush2.msra.mxu0 0.0
      %567 = vmatprep.subr.mxu0 0.0
      %568 = vmatpush2.msra.mxu0 0.0
      %569 = vmatprep.subr.mxu0 0.0
      %570 = vmatpush2.msra.mxu0 0.0
      %571 = vmatprep.subr.mxu0 0.0
      %572 = vmatpush2.msra.mxu0 0.0
      %573 = vmatprep.subr.mxu0 0.0
      %574 = vmatpush2.msra.mxu0 0.0
      %575 = vmatprep.subr.mxu0 0.0
      %576 = vmatpush2.msra.mxu0 0.0
      %577 = vmatprep.mubr.f32.mxu0 0.0
      %578 = vmatmul.mubr.f32.gmra.mxu0 %v433
      %v579 = vpop.f32.mrf.mxu0
      %v580 = vadd.f32 0.0, %v579
      %v581 = vpop.f32.mrf.mxu0
      %582 = vdwg.mxu0
      %vm583 = vcmask 130048
      %v585 = vsel %vm583, %v418, 0
      %587 = vmatprep.subr.mxu0 0.0
      %588 = vmatpush1.msra.mxu0 0.0
      %589 = vmatprep.subr.mxu0 0.0
      %590 = vmatpush1.msra.mxu0 0.0
      %591 = vmatprep.subr.mxu0 0.0
      %592 = vmatpush1.msra.mxu0 0.0
      %593 = vmatprep.subr.mxu0 0.0
      %594 = vmatpush1.msra.mxu0 0.0
      %595 = vmatprep.subr.mxu0 0.0
      %596 = vmatpush1.msra.mxu0 0.0
      %597 = vmatprep.subr.mxu0 0.0
      %598 = vmatpush1.msra.mxu0 0.0
      %599 = vmatprep.subr.mxu0 0.0
      %600 = vmatpush1.msra.mxu0 0.0
      %601 = vmatprep.subr.mxu0 0.0
      %602 = vmatpush1.msra.mxu0 0.0
      %603 = vmatprep.subr.mxu0 0.0
      %604 = vmatpush1.msra.mxu0 0.0
      %605 = vmatprep.subr.mxu0 0.0
      %606 = vmatpush1.msra.mxu0 0.0
      %607 = vmatprep.subr.mxu0 0.0
      %608 = vmatpush1.msra.mxu0 0.0
      %609 = vmatprep.subr.mxu0 0.0
      %610 = vmatpush1.msra.mxu0 0.0
      %611 = vmatprep.subr.mxu0 0.0
      %612 = vmatpush1.msra.mxu0 0.0
      %613 = vmatprep.subr.mxu0 0.0
      %614 = vmatpush1.msra.mxu0 0.0
      %615 = vmatprep.subr.mxu0 %v423
      %616 = vmatpush1.msra.mxu0 %v422
      %617 = vmatprep.subr.mxu0 %v420
      %618 = vmatpush1.msra.mxu0 %v419
      %619 = vmatprep.subr.mxu0 0.0
      %620 = vmatpush2.msra.mxu0 0.0
      %621 = vmatprep.subr.mxu0 0.0
      %622 = vmatpush2.msra.mxu0 0.0
      %623 = vmatprep.subr.mxu0 0.0
      %624 = vmatpush2.msra.mxu0 0.0
      %625 = vmatprep.subr.mxu0 0.0
      %626 = vmatpush2.msra.mxu0 0.0
      %627 = vmatprep.subr.mxu0 0.0
      %628 = vmatpush2.msra.mxu0 0.0
      %629 = vmatprep.subr.mxu0 0.0
      %630 = vmatpush2.msra.mxu0 0.0
      %631 = vmatprep.subr.mxu0 0.0
      %632 = vmatpush2.msra.mxu0 0.0
      %633 = vmatprep.subr.mxu0 0.0
      %634 = vmatpush2.msra.mxu0 0.0
      %635 = vmatprep.subr.mxu0 0.0
      %636 = vmatpush2.msra.mxu0 0.0
      %637 = vmatprep.subr.mxu0 0.0
      %638 = vmatpush2.msra.mxu0 0.0
      %639 = vmatprep.subr.mxu0 0.0
      %640 = vmatpush2.msra.mxu0 0.0
      %641 = vmatprep.subr.mxu0 0.0
      %642 = vmatpush2.msra.mxu0 0.0
      %643 = vmatprep.subr.mxu0 0.0
      %644 = vmatpush2.msra.mxu0 0.0
      %645 = vmatprep.subr.mxu0 0.0
      %646 = vmatpush2.msra.mxu0 0.0
      %647 = vmatprep.subr.mxu0 0.0
      %648 = vmatpush2.msra.mxu0 0.0
      %649 = vmatprep.subr.mxu0 0.0
      %650 = vmatpush2.msra.mxu0 0.0
      %651 = vmatprep.mubr.f32.mxu0 0.0
      %652 = vmatmul.mubr.f32.gmra.mxu0 %v585
      %v653 = vpop.f32.mrf.mxu0
      %v654 = vadd.f32 %v509, %v653
      %v655 = vpop.f32.mrf.mxu0
      %v656 = vadd.f32 %v511, %v655
      %657 = vdwg.mxu0
      %658 = vmatprep.subr.mxu0 0.0
      %659 = vmatpush1.msra.mxu0 0.0
      %660 = vmatprep.subr.mxu0 0.0
      %661 = vmatpush1.msra.mxu0 0.0
      %662 = vmatprep.subr.mxu0 0.0
      %663 = vmatpush1.msra.mxu0 0.0
      %664 = vmatprep.subr.mxu0 0.0
      %665 = vmatpush1.msra.mxu0 0.0
      %666 = vmatprep.subr.mxu0 0.0
      %667 = vmatpush1.msra.mxu0 0.0
      %668 = vmatprep.subr.mxu0 0.0
      %669 = vmatpush1.msra.mxu0 0.0
      %670 = vmatprep.subr.mxu0 0.0
      %671 = vmatpush1.msra.mxu0 0.0
      %672 = vmatprep.subr.mxu0 0.0
      %673 = vmatpush1.msra.mxu0 0.0
      %674 = vmatprep.subr.mxu0 0.0
      %675 = vmatpush1.msra.mxu0 0.0
      %676 = vmatprep.subr.mxu0 0.0
      %677 = vmatpush1.msra.mxu0 0.0
      %678 = vmatprep.subr.mxu0 0.0
      %679 = vmatpush1.msra.mxu0 0.0
      %680 = vmatprep.subr.mxu0 0.0
      %681 = vmatpush1.msra.mxu0 0.0
      %682 = vmatprep.subr.mxu0 0.0
      %683 = vmatpush1.msra.mxu0 0.0
      %684 = vmatprep.subr.mxu0 0.0
      %685 = vmatpush1.msra.mxu0 0.0
      %686 = vmatprep.subr.mxu0 0.0
      %687 = vmatpush1.msra.mxu0 %v424
      %688 = vmatprep.subr.mxu0 0.0
      %689 = vmatpush1.msra.mxu0 %v421
      %690 = vmatprep.subr.mxu0 0.0
      %691 = vmatpush2.msra.mxu0 0.0
      %692 = vmatprep.subr.mxu0 0.0
      %693 = vmatpush2.msra.mxu0 0.0
      %694 = vmatprep.subr.mxu0 0.0
      %695 = vmatpush2.msra.mxu0 0.0
      %696 = vmatprep.subr.mxu0 0.0
      %697 = vmatpush2.msra.mxu0 0.0
      %698 = vmatprep.subr.mxu0 0.0
      %699 = vmatpush2.msra.mxu0 0.0
      %700 = vmatprep.subr.mxu0 0.0
      %701 = vmatpush2.msra.mxu0 0.0
      %702 = vmatprep.subr.mxu0 0.0
      %703 = vmatpush2.msra.mxu0 0.0
      %704 = vmatprep.subr.mxu0 0.0
      %705 = vmatpush2.msra.mxu0 0.0
      %706 = vmatprep.subr.mxu0 0.0
      %707 = vmatpush2.msra.mxu0 0.0
      %708 = vmatprep.subr.mxu0 0.0
      %709 = vmatpush2.msra.mxu0 0.0
      %710 = vmatprep.subr.mxu0 0.0
      %711 = vmatpush2.msra.mxu0 0.0
      %712 = vmatprep.subr.mxu0 0.0
      %713 = vmatpush2.msra.mxu0 0.0
      %714 = vmatprep.subr.mxu0 0.0
      %715 = vmatpush2.msra.mxu0 0.0
      %716 = vmatprep.subr.mxu0 0.0
      %717 = vmatpush2.msra.mxu0 0.0
      %718 = vmatprep.subr.mxu0 0.0
      %719 = vmatpush2.msra.mxu0 0.0
      %720 = vmatprep.subr.mxu0 0.0
      %721 = vmatpush2.msra.mxu0 0.0
      %722 = vmatprep.mubr.f32.mxu0 0.0
      %723 = vmatmul.mubr.f32.gmra.mxu0 %v585
      %v724 = vpop.f32.mrf.mxu0
      %v725 = vadd.f32 %v580, %v724
      %v726 = vpop.f32.mrf.mxu0
      %727 = vdwg.mxu0
      %v728 = vld [vmem:[%s396] sm:$0x7]
      %v730 = vlaneseq
      %v731 = vshrl.u32 %v730, 7
      %v732 = vsub.s32 0, %v731
      %v733 = vrot.slane %v728, %v732
      %v734 = vlaneseq
      %v735 = vshrl.u32 %v734, 7
      %v736 = vsub.s32 1, %v735
      %v737 = vrot.slane %v728, %v736
      %v738 = vlaneseq
      %v739 = vshrl.u32 %v738, 7
      %v740 = vsub.s32 2, %v739
      %v741 = vrot.slane %v728, %v740
      %v745 = vadd.f32 %v654, %v733
      %v746 = vadd.f32 %v656, %v737
      %v747 = vadd.f32 %v725, %v741
      %v748 = vmin.f32 %v745, 20.0
      %v749 = vmin.f32 %v746, 20.0
      %v750 = vmin.f32 %v747, 20.0
      %v751 = vmul.f32 %v748, 1.442695
      %v752 = vpow.pop %v751
      %v753 = vmul.f32 %v749, 1.442695
      %v754 = vpow.pop %v753
      %v755 = vmul.f32 %v750, 1.442695
      %v756 = vpow.pop %v755
      %v757 = vadd.f32 %v752, 2.0
      %v758 = vadd.f32 %v754, 2.0
      %v759 = vadd.f32 %v756, 2.0
      %v760 = vmul.f32 %v752, %v757
      %v761 = vmul.f32 %v754, %v758
      %v762 = vmul.f32 %v756, %v759
      %v763 = vmul.f32 %v745, %v760
      %v764 = vmul.f32 %v746, %v761
      %v765 = vmul.f32 %v747, %v762
      %v766 = vadd.f32 %v760, 2.0
      %v767 = vadd.f32 %v761, 2.0
      %v768 = vadd.f32 %v762, 2.0
      %v769 = vrcp.pop %v766
      %v770 = vrcp.pop %v767
      %v771 = vrcp.pop %v768
      %v772 = vmul.f32 %v763, %v769
      %v773 = vmul.f32 %v764, %v770
      %v774 = vmul.f32 %v765, %v771
      %v775 = vld [vmem:[%s401] sm:$0xff]
      %v776 = vld [vmem:[%s401 + $0x8] sm:$0xff]
      %v777 = vld [vmem:[%s401 + $0x10] sm:$0x3f]
      %v778 = vld [vmem:[%s401 + $0x16] sm:$0xff]
      %v779 = vld [vmem:[%s401 + $0x1e] sm:$0xff]
      %v780 = vld [vmem:[%s401 + $0x26] sm:$0x3f]
      %v781 = vld [vmem:[%s401 + $0x2c] sm:$0xff]
      %v782 = vld [vmem:[%s401 + $0x34] sm:$0xff]
      %v783 = vld [vmem:[%s401 + $0x3c] sm:$0x3f]
      %v784 = vld [vmem:[%s401 + $0x42] sm:$0xff]
      %v785 = vld [vmem:[%s401 + $0x4a] sm:$0xff]
      %v786 = vld [vmem:[%s401 + $0x52] sm:$0x3f]
      %v787 = vld [vmem:[%s401 + $0x58] sm:$0xff]
      %v788 = vld [vmem:[%s401 + $0x60] sm:$0xff]
      %v789 = vld [vmem:[%s401 + $0x68] sm:$0x3f]
      %v790 = vld [vmem:[%s401 + $0x6e] sm:$0xff]
      %v791 = vld [vmem:[%s401 + $0x76] sm:$0xff]
      %v792 = vld [vmem:[%s401 + $0x7e] sm:$0x3f]
      %v793 = vld [vmem:[%s401 + $0x84] sm:$0xff]
      %v794 = vld [vmem:[%s401 + $0x8c] sm:$0xff]
      %v795 = vld [vmem:[%s401 + $0x94] sm:$0x3f]
      %v796 = vld [vmem:[%s401 + $0x9a] sm:$0xff]
      %v797 = vld [vmem:[%s401 + $0xa2] sm:$0xff]
      %v798 = vld [vmem:[%s401 + $0xaa] sm:$0x3f]
      %v799 = vld [vmem:[%s401 + $0xb0] sm:$0xff]
      %v800 = vld [vmem:[%s401 + $0xb8] sm:$0xff]
      %v801 = vld [vmem:[%s401 + $0xc0] sm:$0x3f]
      %v802 = vld [vmem:[%s401 + $0xc6] sm:$0xff]
      %v803 = vld [vmem:[%s401 + $0xce] sm:$0xff]
      %v804 = vld [vmem:[%s401 + $0xd6] sm:$0x3f]
      %v805 = vld [vmem:[%s401 + $0xdc] sm:$0xff]
      %v806 = vld [vmem:[%s401 + $0xe4] sm:$0xff]
      %v807 = vld [vmem:[%s401 + $0xec] sm:$0x3f]
      %v808 = vld [vmem:[%s401 + $0xf2] sm:$0xff]
      %v809 = vld [vmem:[%s401 + $0xfa] sm:$0xff]
      %v810 = vld [vmem:[%s401 + $0x102] sm:$0x3f]
      %v811 = vld [vmem:[%s401 + $0x108] sm:$0xff]
      %v812 = vld [vmem:[%s401 + $0x110] sm:$0xff]
      %v813 = vld [vmem:[%s401 + $0x118] sm:$0x3f]
      %v814 = vld [vmem:[%s401 + $0x11e] sm:$0xff]
      %v815 = vld [vmem:[%s401 + $0x126] sm:$0xff]
      %v816 = vld [vmem:[%s401 + $0x12e] sm:$0x3f]
      %v817 = vld [vmem:[%s401 + $0x134] sm:$0xff]
      %v818 = vld [vmem:[%s401 + $0x13c] sm:$0xff]
      %v819 = vld [vmem:[%s401 + $0x144] sm:$0x3f]
      %v820 = vld [vmem:[%s401 + $0x14a] sm:$0xff]
      %v821 = vld [vmem:[%s401 + $0x152] sm:$0xff]
      %v822 = vld [vmem:[%s401 + $0x15a] sm:$0x3f]
      %v823 = vld [vmem:[%s401 + $0x160] sm:$0xff]
      %v824 = vld [vmem:[%s401 + $0x168] sm:$0xff]
      %v825 = vld [vmem:[%s401 + $0x170] sm:$0x3f]
      %v826 = vld [vmem:[%s401 + $0x176] sm:$0xff]
      %v827 = vld [vmem:[%s401 + $0x17e] sm:$0xff]
      %v828 = vld [vmem:[%s401 + $0x186] sm:$0x3f]
      %v829 = vld [vmem:[%s401 + $0x18c] sm:$0xff]
      %v830 = vld [vmem:[%s401 + $0x194] sm:$0xff]
      %v831 = vld [vmem:[%s401 + $0x19c] sm:$0x3f]
      %v832 = vld [vmem:[%s401 + $0x1a2] sm:$0xff]
      %v833 = vld [vmem:[%s401 + $0x1aa] sm:$0xff]
      %v834 = vld [vmem:[%s401 + $0x1b2] sm:$0x3f]
      %v835 = vld [vmem:[%s401 + $0x1b8] sm:$0xff]
      %v836 = vld [vmem:[%s401 + $0x1c0] sm:$0xff]
      %v837 = vld [vmem:[%s401 + $0x1c8] sm:$0x3f]
      %v838 = vld [vmem:[%s401 + $0x1ce] sm:$0xff]
      %v839 = vld [vmem:[%s401 + $0x1d6] sm:$0xff]
      %v840 = vld [vmem:[%s401 + $0x1de] sm:$0x3f]
      %v841 = vld [vmem:[%s401 + $0x1e4] sm:$0xff]
      %v842 = vld [vmem:[%s401 + $0x1ec] sm:$0xff]
      %v843 = vld [vmem:[%s401 + $0x1f4] sm:$0x3f]
      %v844 = vld [vmem:[%s401 + $0x1fa] sm:$0xff]
      %v845 = vld [vmem:[%s401 + $0x202] sm:$0xff]
      %v846 = vld [vmem:[%s401 + $0x20a] sm:$0x3f]
      %v847 = vld [vmem:[%s401 + $0x210] sm:$0xff]
      %v848 = vld [vmem:[%s401 + $0x218] sm:$0xff]
      %v849 = vld [vmem:[%s401 + $0x220] sm:$0x3f]
      %v850 = vld [vmem:[%s401 + $0x226] sm:$0xff]
      %v851 = vld [vmem:[%s401 + $0x22e] sm:$0xff]
      %v852 = vld [vmem:[%s401 + $0x236] sm:$0x3f]
      %v853 = vld [vmem:[%s401 + $0x23c] sm:$0xff]
      %v854 = vld [vmem:[%s401 + $0x244] sm:$0xff]
      %v855 = vld [vmem:[%s401 + $0x24c] sm:$0x3f]
      %v856 = vld [vmem:[%s401 + $0x252] sm:$0xff]
      %v857 = vld [vmem:[%s401 + $0x25a] sm:$0xff]
      %v858 = vld [vmem:[%s401 + $0x262] sm:$0x3f]
      %v859 = vld [vmem:[%s401 + $0x268] sm:$0xff]
      %v860 = vld [vmem:[%s401 + $0x270] sm:$0xff]
      %v861 = vld [vmem:[%s401 + $0x278] sm:$0x3f]
      %v862 = vld [vmem:[%s401 + $0x27e] sm:$0xff]
      %v863 = vld [vmem:[%s401 + $0x286] sm:$0xff]
      %v864 = vld [vmem:[%s401 + $0x28e] sm:$0x3f]
      %v865 = vld [vmem:[%s401 + $0x294] sm:$0xff]
      %v866 = vld [vmem:[%s401 + $0x29c] sm:$0xff]
      %v867 = vld [vmem:[%s401 + $0x2a4] sm:$0x3f]
      %v868 = vld [vmem:[%s401 + $0x2aa] sm:$0xff]
      %v869 = vld [vmem:[%s401 + $0x2b2] sm:$0xff]
      %v870 = vld [vmem:[%s401 + $0x2ba] sm:$0x3f]
      %v871 = vld [vmem:[%s401 + $0x2c0] sm:$0xff]
      %v872 = vld [vmem:[%s401 + $0x2c8] sm:$0xff]
      %v873 = vld [vmem:[%s401 + $0x2d0] sm:$0x3f]
      %v874 = vld [vmem:[%s401 + $0x2d6] sm:$0xff]
      %v875 = vld [vmem:[%s401 + $0x2de] sm:$0xff]
      %v876 = vld [vmem:[%s401 + $0x2e6] sm:$0x3f]
      %v877 = vld [vmem:[%s401 + $0x2ec] sm:$0xff]
      %v878 = vld [vmem:[%s401 + $0x2f4] sm:$0xff]
      %v879 = vld [vmem:[%s401 + $0x2fc] sm:$0x3f]
      %v880 = vld [vmem:[%s401 + $0x302] sm:$0xff]
      %v881 = vld [vmem:[%s401 + $0x30a] sm:$0xff]
      %v882 = vld [vmem:[%s401 + $0x312] sm:$0x3f]
      %v883 = vld [vmem:[%s401 + $0x318] sm:$0xff]
      %v884 = vld [vmem:[%s401 + $0x320] sm:$0xff]
      %v885 = vld [vmem:[%s401 + $0x328] sm:$0x3f]
      %v886 = vld [vmem:[%s401 + $0x32e] sm:$0xff]
      %v887 = vld [vmem:[%s401 + $0x336] sm:$0xff]
      %v888 = vld [vmem:[%s401 + $0x33e] sm:$0x3f]
      %v889 = vld [vmem:[%s401 + $0x344] sm:$0xff]
      %v890 = vld [vmem:[%s401 + $0x34c] sm:$0xff]
      %v891 = vld [vmem:[%s401 + $0x354] sm:$0x3f]
      %v892 = vld [vmem:[%s401 + $0x35a] sm:$0xff]
      %v893 = vld [vmem:[%s401 + $0x362] sm:$0xff]
      %v894 = vld [vmem:[%s401 + $0x36a] sm:$0x3f]
      %v895 = vld [vmem:[%s401 + $0x370] sm:$0xff]
      %v896 = vld [vmem:[%s401 + $0x378] sm:$0xff]
      %v897 = vld [vmem:[%s401 + $0x380] sm:$0x3f]
      %v898 = vld [vmem:[%s401 + $0x386] sm:$0xff]
      %v899 = vld [vmem:[%s401 + $0x38e] sm:$0xff]
      %v900 = vld [vmem:[%s401 + $0x396] sm:$0x3f]
      %v901 = vld [vmem:[%s401 + $0x39c] sm:$0xff]
      %v902 = vld [vmem:[%s401 + $0x3a4] sm:$0xff]
      %v903 = vld [vmem:[%s401 + $0x3ac] sm:$0x3f]
      %v904 = vld [vmem:[%s401 + $0x3b2] sm:$0xff]
      %v905 = vld [vmem:[%s401 + $0x3ba] sm:$0xff]
      %v906 = vld [vmem:[%s401 + $0x3c2] sm:$0x3f]
      %v907 = vunpack.c.0.s8 %v775
      %v908 = vunpack.c.1.s8 %v775
      %v909 = vunpack.c.2.s8 %v775
      %v910 = vunpack.c.3.s8 %v775
      %v911 = vunpack.c.0.s8 %v776
      %v912 = vunpack.c.1.s8 %v776
      %v913 = vunpack.c.2.s8 %v776
      %v914 = vunpack.c.3.s8 %v776
      %v915 = vunpack.c.0.s8 %v777
      %v916 = vunpack.c.1.s8 %v777
      %v917 = vunpack.c.2.s8 %v777
      %v918 = vunpack.c.0.s8 %v778
      %v919 = vunpack.c.1.s8 %v778
      %v920 = vunpack.c.2.s8 %v778
      %v921 = vunpack.c.3.s8 %v778
      %v922 = vunpack.c.0.s8 %v779
      %v923 = vunpack.c.1.s8 %v779
      %v924 = vunpack.c.2.s8 %v779
      %v925 = vunpack.c.3.s8 %v779
      %v926 = vunpack.c.0.s8 %v780
      %v927 = vunpack.c.1.s8 %v780
      %v928 = vunpack.c.2.s8 %v780
      %v929 = vunpack.c.0.s8 %v781
      %v930 = vunpack.c.1.s8 %v781
      %v931 = vunpack.c.2.s8 %v781
      %v932 = vunpack.c.3.s8 %v781
      %v933 = vunpack.c.0.s8 %v782
      %v934 = vunpack.c.1.s8 %v782
      %v935 = vunpack.c.2.s8 %v782
      %v936 = vunpack.c.3.s8 %v782
      %v937 = vunpack.c.0.s8 %v783
      %v938 = vunpack.c.1.s8 %v783
      %v939 = vunpack.c.2.s8 %v783
      %v940 = vunpack.c.0.s8 %v784
      %v941 = vunpack.c.1.s8 %v784
      %v942 = vunpack.c.2.s8 %v784
      %v943 = vunpack.c.3.s8 %v784
      %v944 = vunpack.c.0.s8 %v785
      %v945 = vunpack.c.1.s8 %v785
      %v946 = vunpack.c.2.s8 %v785
      %v947 = vunpack.c.3.s8 %v785
      %v948 = vunpack.c.0.s8 %v786
      %v949 = vunpack.c.1.s8 %v786
      %v950 = vunpack.c.2.s8 %v786
      %v951 = vunpack.c.0.s8 %v787
      %v952 = vunpack.c.1.s8 %v787
      %v953 = vunpack.c.2.s8 %v787
      %v954 = vunpack.c.3.s8 %v787
      %v955 = vunpack.c.0.s8 %v788
      %v956 = vunpack.c.1.s8 %v788
      %v957 = vunpack.c.2.s8 %v788
      %v958 = vunpack.c.3.s8 %v788
      %v959 = vunpack.c.0.s8 %v789
      %v960 = vunpack.c.1.s8 %v789
      %v961 = vunpack.c.2.s8 %v789
      %v962 = vunpack.c.0.s8 %v790
      %v963 = vunpack.c.1.s8 %v790
      %v964 = vunpack.c.2.s8 %v790
      %v965 = vunpack.c.3.s8 %v790
      %v966 = vunpack.c.0.s8 %v791
      %v967 = vunpack.c.1.s8 %v791
      %v968 = vunpack.c.2.s8 %v791
      %v969 = vunpack.c.3.s8 %v791
      %v970 = vunpack.c.0.s8 %v792
      %v971 = vunpack.c.1.s8 %v792
      %v972 = vunpack.c.2.s8 %v792
      %v973 = vunpack.c.0.s8 %v793
      %v974 = vunpack.c.1.s8 %v793
      %v975 = vunpack.c.2.s8 %v793
      %v976 = vunpack.c.3.s8 %v793
      %v977 = vunpack.c.0.s8 %v794
      %v978 = vunpack.c.1.s8 %v794
      %v979 = vunpack.c.2.s8 %v794
      %v980 = vunpack.c.3.s8 %v794
      %v981 = vunpack.c.0.s8 %v795
      %v982 = vunpack.c.1.s8 %v795
      %v983 = vunpack.c.2.s8 %v795
      %v984 = vunpack.c.0.s8 %v796
      %v985 = vunpack.c.1.s8 %v796
      %v986 = vunpack.c.2.s8 %v796
      %v987 = vunpack.c.3.s8 %v796
      %v988 = vunpack.c.0.s8 %v797
      %v989 = vunpack.c.1.s8 %v797
      %v990 = vunpack.c.2.s8 %v797
      %v991 = vunpack.c.3.s8 %v797
      %v992 = vunpack.c.0.s8 %v798
      %v993 = vunpack.c.1.s8 %v798
      %v994 = vunpack.c.2.s8 %v798
      %v995 = vunpack.c.0.s8 %v799
      %v996 = vunpack.c.1.s8 %v799
      %v997 = vunpack.c.2.s8 %v799
      %v998 = vunpack.c.3.s8 %v799
      %v999 = vunpack.c.0.s8 %v800
      %v1000 = vunpack.c.1.s8 %v800
      %v1001 = vunpack.c.2.s8 %v800
      %v1002 = vunpack.c.3.s8 %v800
      %v1003 = vunpack.c.0.s8 %v801
      %v1004 = vunpack.c.1.s8 %v801
      %v1005 = vunpack.c.2.s8 %v801
      %v1006 = vunpack.c.0.s8 %v802
      %v1007 = vunpack.c.1.s8 %v802
      %v1008 = vunpack.c.2.s8 %v802
      %v1009 = vunpack.c.3.s8 %v802
      %v1010 = vunpack.c.0.s8 %v803
      %v1011 = vunpack.c.1.s8 %v803
      %v1012 = vunpack.c.2.s8 %v803
      %v1013 = vunpack.c.3.s8 %v803
      %v1014 = vunpack.c.0.s8 %v804
      %v1015 = vunpack.c.1.s8 %v804
      %v1016 = vunpack.c.2.s8 %v804
      %v1017 = vunpack.c.0.s8 %v805
      %v1018 = vunpack.c.1.s8 %v805
      %v1019 = vunpack.c.2.s8 %v805
      %v1020 = vunpack.c.3.s8 %v805
      %v1021 = vunpack.c.0.s8 %v806
      %v1022 = vunpack.c.1.s8 %v806
      %v1023 = vunpack.c.2.s8 %v806
      %v1024 = vunpack.c.3.s8 %v806
      %v1025 = vunpack.c.0.s8 %v807
      %v1026 = vunpack.c.1.s8 %v807
      %v1027 = vunpack.c.2.s8 %v807
      %v1028 = vunpack.c.0.s8 %v808
      %v1029 = vunpack.c.1.s8 %v808
      %v1030 = vunpack.c.2.s8 %v808
      %v1031 = vunpack.c.3.s8 %v808
      %v1032 = vunpack.c.0.s8 %v809
      %v1033 = vunpack.c.1.s8 %v809
      %v1034 = vunpack.c.2.s8 %v809
      %v1035 = vunpack.c.3.s8 %v809
      %v1036 = vunpack.c.0.s8 %v810
      %v1037 = vunpack.c.1.s8 %v810
      %v1038 = vunpack.c.2.s8 %v810
      %v1039 = vunpack.c.0.s8 %v811
      %v1040 = vunpack.c.1.s8 %v811
      %v1041 = vunpack.c.2.s8 %v811
      %v1042 = vunpack.c.3.s8 %v811
      %v1043 = vunpack.c.0.s8 %v812
      %v1044 = vunpack.c.1.s8 %v812
      %v1045 = vunpack.c.2.s8 %v812
      %v1046 = vunpack.c.3.s8 %v812
      %v1047 = vunpack.c.0.s8 %v813
      %v1048 = vunpack.c.1.s8 %v813
      %v1049 = vunpack.c.2.s8 %v813
      %v1050 = vunpack.c.0.s8 %v814
      %v1051 = vunpack.c.1.s8 %v814
      %v1052 = vunpack.c.2.s8 %v814
      %v1053 = vunpack.c.3.s8 %v814
      %v1054 = vunpack.c.0.s8 %v815
      %v1055 = vunpack.c.1.s8 %v815
      %v1056 = vunpack.c.2.s8 %v815
      %v1057 = vunpack.c.3.s8 %v815
      %v1058 = vunpack.c.0.s8 %v816
      %v1059 = vunpack.c.1.s8 %v816
      %v1060 = vunpack.c.2.s8 %v816
      %v1061 = vunpack.c.0.s8 %v817
      %v1062 = vunpack.c.1.s8 %v817
      %v1063 = vunpack.c.2.s8 %v817
      %v1064 = vunpack.c.3.s8 %v817
      %v1065 = vunpack.c.0.s8 %v818
      %v1066 = vunpack.c.1.s8 %v818
      %v1067 = vunpack.c.2.s8 %v818
      %v1068 = vunpack.c.3.s8 %v818
      %v1069 = vunpack.c.0.s8 %v819
      %v1070 = vunpack.c.1.s8 %v819
      %v1071 = vunpack.c.2.s8 %v819
      %v1072 = vunpack.c.0.s8 %v820
      %v1073 = vunpack.c.1.s8 %v820
      %v1074 = vunpack.c.2.s8 %v820
      %v1075 = vunpack.c.3.s8 %v820
      %v1076 = vunpack.c.0.s8 %v821
      %v1077 = vunpack.c.1.s8 %v821
      %v1078 = vunpack.c.2.s8 %v821
      %v1079 = vunpack.c.3.s8 %v821
      %v1080 = vunpack.c.0.s8 %v822
      %v1081 = vunpack.c.1.s8 %v822
      %v1082 = vunpack.c.2.s8 %v822
      %v1083 = vunpack.c.0.s8 %v823
      %v1084 = vunpack.c.1.s8 %v823
      %v1085 = vunpack.c.2.s8 %v823
      %v1086 = vunpack.c.3.s8 %v823
      %v1087 = vunpack.c.0.s8 %v824
      %v1088 = vunpack.c.1.s8 %v824
      %v1089 = vunpack.c.2.s8 %v824
      %v1090 = vunpack.c.3.s8 %v824
      %v1091 = vunpack.c.0.s8 %v825
      %v1092 = vunpack.c.1.s8 %v825
      %v1093 = vunpack.c.2.s8 %v825
      %v1094 = vunpack.c.0.s8 %v826
      %v1095 = vunpack.c.1.s8 %v826
      %v1096 = vunpack.c.2.s8 %v826
      %v1097 = vunpack.c.3.s8 %v826
      %v1098 = vunpack.c.0.s8 %v827
      %v1099 = vunpack.c.1.s8 %v827
      %v1100 = vunpack.c.2.s8 %v827
      %v1101 = vunpack.c.3.s8 %v827
      %v1102 = vunpack.c.0.s8 %v828
      %v1103 = vunpack.c.1.s8 %v828
      %v1104 = vunpack.c.2.s8 %v828
      %v1105 = vunpack.c.0.s8 %v829
      %v1106 = vunpack.c.1.s8 %v829
      %v1107 = vunpack.c.2.s8 %v829
      %v1108 = vunpack.c.3.s8 %v829
      %v1109 = vunpack.c.0.s8 %v830
      %v1110 = vunpack.c.1.s8 %v830
      %v1111 = vunpack.c.2.s8 %v830
      %v1112 = vunpack.c.3.s8 %v830
      %v1113 = vunpack.c.0.s8 %v831
      %v1114 = vunpack.c.1.s8 %v831
      %v1115 = vunpack.c.2.s8 %v831
      %v1116 = vunpack.c.0.s8 %v832
      %v1117 = vunpack.c.1.s8 %v832
      %v1118 = vunpack.c.2.s8 %v832
      %v1119 = vunpack.c.3.s8 %v832
      %v1120 = vunpack.c.0.s8 %v833
      %v1121 = vunpack.c.1.s8 %v833
      %v1122 = vunpack.c.2.s8 %v833
      %v1123 = vunpack.c.3.s8 %v833
      %v1124 = vunpack.c.0.s8 %v834
      %v1125 = vunpack.c.1.s8 %v834
      %v1126 = vunpack.c.2.s8 %v834
      %v1127 = vunpack.c.0.s8 %v835
      %v1128 = vunpack.c.1.s8 %v835
      %v1129 = vunpack.c.2.s8 %v835
      %v1130 = vunpack.c.3.s8 %v835
      %v1131 = vunpack.c.0.s8 %v836
      %v1132 = vunpack.c.1.s8 %v836
      %v1133 = vunpack.c.2.s8 %v836
      %v1134 = vunpack.c.3.s8 %v836
      %v1135 = vunpack.c.0.s8 %v837
      %v1136 = vunpack.c.1.s8 %v837
      %v1137 = vunpack.c.2.s8 %v837
      %v1138 = vunpack.c.0.s8 %v838
      %v1139 = vunpack.c.1.s8 %v838
      %v1140 = vunpack.c.2.s8 %v838
      %v1141 = vunpack.c.3.s8 %v838
      %v1142 = vunpack.c.0.s8 %v839
      %v1143 = vunpack.c.1.s8 %v839
      %v1144 = vunpack.c.2.s8 %v839
      %v1145 = vunpack.c.3.s8 %v839
      %v1146 = vunpack.c.0.s8 %v840
      %v1147 = vunpack.c.1.s8 %v840
      %v1148 = vunpack.c.2.s8 %v840
      %v1149 = vunpack.c.0.s8 %v841
      %v1150 = vunpack.c.1.s8 %v841
      %v1151 = vunpack.c.2.s8 %v841
      %v1152 = vunpack.c.3.s8 %v841
      %v1153 = vunpack.c.0.s8 %v842
      %v1154 = vunpack.c.1.s8 %v842
      %v1155 = vunpack.c.2.s8 %v842
      %v1156 = vunpack.c.3.s8 %v842
      %v1157 = vunpack.c.0.s8 %v843
      %v1158 = vunpack.c.1.s8 %v843
      %v1159 = vunpack.c.2.s8 %v843
      %v1160 = vunpack.c.0.s8 %v844
      %v1161 = vunpack.c.1.s8 %v844
      %v1162 = vunpack.c.2.s8 %v844
      %v1163 = vunpack.c.3.s8 %v844
      %v1164 = vunpack.c.0.s8 %v845
      %v1165 = vunpack.c.1.s8 %v845
      %v1166 = vunpack.c.2.s8 %v845
      %v1167 = vunpack.c.3.s8 %v845
      %v1168 = vunpack.c.0.s8 %v846
      %v1169 = vunpack.c.1.s8 %v846
      %v1170 = vunpack.c.2.s8 %v846
      %v1171 = vunpack.c.0.s8 %v847
      %v1172 = vunpack.c.1.s8 %v847
      %v1173 = vunpack.c.2.s8 %v847
      %v1174 = vunpack.c.3.s8 %v847
      %v1175 = vunpack.c.0.s8 %v848
      %v1176 = vunpack.c.1.s8 %v848
      %v1177 = vunpack.c.2.s8 %v848
      %v1178 = vunpack.c.3.s8 %v848
      %v1179 = vunpack.c.0.s8 %v849
      %v1180 = vunpack.c.1.s8 %v849
      %v1181 = vunpack.c.2.s8 %v849
      %v1182 = vunpack.c.0.s8 %v850
      %v1183 = vunpack.c.1.s8 %v850
      %v1184 = vunpack.c.2.s8 %v850
      %v1185 = vunpack.c.3.s8 %v850
      %v1186 = vunpack.c.0.s8 %v851
      %v1187 = vunpack.c.1.s8 %v851
      %v1188 = vunpack.c.2.s8 %v851
      %v1189 = vunpack.c.3.s8 %v851
      %v1190 = vunpack.c.0.s8 %v852
      %v1191 = vunpack.c.1.s8 %v852
      %v1192 = vunpack.c.2.s8 %v852
      %v1193 = vunpack.c.0.s8 %v853
      %v1194 = vunpack.c.1.s8 %v853
      %v1195 = vunpack.c.2.s8 %v853
      %v1196 = vunpack.c.3.s8 %v853
      %v1197 = vunpack.c.0.s8 %v854
      %v1198 = vunpack.c.1.s8 %v854
      %v1199 = vunpack.c.2.s8 %v854
      %v1200 = vunpack.c.3.s8 %v854
      %v1201 = vunpack.c.0.s8 %v855
      %v1202 = vunpack.c.1.s8 %v855
      %v1203 = vunpack.c.2.s8 %v855
      %v1204 = vunpack.c.0.s8 %v856
      %v1205 = vunpack.c.1.s8 %v856
      %v1206 = vunpack.c.2.s8 %v856
      %v1207 = vunpack.c.3.s8 %v856
      %v1208 = vunpack.c.0.s8 %v857
      %v1209 = vunpack.c.1.s8 %v857
      %v1210 = vunpack.c.2.s8 %v857
      %v1211 = vunpack.c.3.s8 %v857
      %v1212 = vunpack.c.0.s8 %v858
      %v1213 = vunpack.c.1.s8 %v858
      %v1214 = vunpack.c.2.s8 %v858
      %v1215 = vunpack.c.0.s8 %v859
      %v1216 = vunpack.c.1.s8 %v859
      %v1217 = vunpack.c.2.s8 %v859
      %v1218 = vunpack.c.3.s8 %v859
      %v1219 = vunpack.c.0.s8 %v860
      %v1220 = vunpack.c.1.s8 %v860
      %v1221 = vunpack.c.2.s8 %v860
      %v1222 = vunpack.c.3.s8 %v860
      %v1223 = vunpack.c.0.s8 %v861
      %v1224 = vunpack.c.1.s8 %v861
      %v1225 = vunpack.c.2.s8 %v861
      %v1226 = vunpack.c.0.s8 %v862
      %v1227 = vunpack.c.1.s8 %v862
      %v1228 = vunpack.c.2.s8 %v862
      %v1229 = vunpack.c.3.s8 %v862
      %v1230 = vunpack.c.0.s8 %v863
      %v1231 = vunpack.c.1.s8 %v863
      %v1232 = vunpack.c.2.s8 %v863
      %v1233 = vunpack.c.3.s8 %v863
      %v1234 = vunpack.c.0.s8 %v864
      %v1235 = vunpack.c.1.s8 %v864
      %v1236 = vunpack.c.2.s8 %v864
      %v1237 = vunpack.c.0.s8 %v865
      %v1238 = vunpack.c.1.s8 %v865
      %v1239 = vunpack.c.2.s8 %v865
      %v1240 = vunpack.c.3.s8 %v865
      %v1241 = vunpack.c.0.s8 %v866
      %v1242 = vunpack.c.1.s8 %v866
      %v1243 = vunpack.c.2.s8 %v866
      %v1244 = vunpack.c.3.s8 %v866
      %v1245 = vunpack.c.0.s8 %v867
      %v1246 = vunpack.c.1.s8 %v867
      %v1247 = vunpack.c.2.s8 %v867
      %v1248 = vunpack.c.0.s8 %v868
      %v1249 = vunpack.c.1.s8 %v868
      %v1250 = vunpack.c.2.s8 %v868
      %v1251 = vunpack.c.3.s8 %v868
      %v1252 = vunpack.c.0.s8 %v869
      %v1253 = vunpack.c.1.s8 %v869
      %v1254 = vunpack.c.2.s8 %v869
      %v1255 = vunpack.c.3.s8 %v869
      %v1256 = vunpack.c.0.s8 %v870
      %v1257 = vunpack.c.1.s8 %v870
      %v1258 = vunpack.c.2.s8 %v870
      %v1259 = vunpack.c.0.s8 %v871
      %v1260 = vunpack.c.1.s8 %v871
      %v1261 = vunpack.c.2.s8 %v871
      %v1262 = vunpack.c.3.s8 %v871
      %v1263 = vunpack.c.0.s8 %v872
      %v1264 = vunpack.c.1.s8 %v872
      %v1265 = vunpack.c.2.s8 %v872
      %v1266 = vunpack.c.3.s8 %v872
      %v1267 = vunpack.c.0.s8 %v873
      %v1268 = vunpack.c.1.s8 %v873
      %v1269 = vunpack.c.2.s8 %v873
      %v1270 = vunpack.c.0.s8 %v874
      %v1271 = vunpack.c.1.s8 %v874
      %v1272 = vunpack.c.2.s8 %v874
      %v1273 = vunpack.c.3.s8 %v874
      %v1274 = vunpack.c.0.s8 %v875
      %v1275 = vunpack.c.1.s8 %v875
      %v1276 = vunpack.c.2.s8 %v875
      %v1277 = vunpack.c.3.s8 %v875
      %v1278 = vunpack.c.0.s8 %v876
      %v1279 = vunpack.c.1.s8 %v876
      %v1280 = vunpack.c.2.s8 %v876
      %v1281 = vunpack.c.0.s8 %v877
      %v1282 = vunpack.c.1.s8 %v877
      %v1283 = vunpack.c.2.s8 %v877
      %v1284 = vunpack.c.3.s8 %v877
      %v1285 = vunpack.c.0.s8 %v878
      %v1286 = vunpack.c.1.s8 %v878
      %v1287 = vunpack.c.2.s8 %v878
      %v1288 = vunpack.c.3.s8 %v878
      %v1289 = vunpack.c.0.s8 %v879
      %v1290 = vunpack.c.1.s8 %v879
      %v1291 = vunpack.c.2.s8 %v879
      %v1292 = vunpack.c.0.s8 %v880
      %v1293 = vunpack.c.1.s8 %v880
      %v1294 = vunpack.c.2.s8 %v880
      %v1295 = vunpack.c.3.s8 %v880
      %v1296 = vunpack.c.0.s8 %v881
      %v1297 = vunpack.c.1.s8 %v881
      %v1298 = vunpack.c.2.s8 %v881
      %v1299 = vunpack.c.3.s8 %v881
      %v1300 = vunpack.c.0.s8 %v882
      %v1301 = vunpack.c.1.s8 %v882
      %v1302 = vunpack.c.2.s8 %v882
      %v1303 = vunpack.c.0.s8 %v883
      %v1304 = vunpack.c.1.s8 %v883
      %v1305 = vunpack.c.2.s8 %v883
      %v1306 = vunpack.c.3.s8 %v883
      %v1307 = vunpack.c.0.s8 %v884
      %v1308 = vunpack.c.1.s8 %v884
      %v1309 = vunpack.c.2.s8 %v884
      %v1310 = vunpack.c.3.s8 %v884
      %v1311 = vunpack.c.0.s8 %v885
      %v1312 = vunpack.c.1.s8 %v885
      %v1313 = vunpack.c.2.s8 %v885
      %v1314 = vunpack.c.0.s8 %v886
      %v1315 = vunpack.c.1.s8 %v886
      %v1316 = vunpack.c.2.s8 %v886
      %v1317 = vunpack.c.3.s8 %v886
      %v1318 = vunpack.c.0.s8 %v887
      %v1319 = vunpack.c.1.s8 %v887
      %v1320 = vunpack.c.2.s8 %v887
      %v1321 = vunpack.c.3.s8 %v887
      %v1322 = vunpack.c.0.s8 %v888
      %v1323 = vunpack.c.1.s8 %v888
      %v1324 = vunpack.c.2.s8 %v888
      %v1325 = vunpack.c.0.s8 %v889
      %v1326 = vunpack.c.1.s8 %v889
      %v1327 = vunpack.c.2.s8 %v889
      %v1328 = vunpack.c.3.s8 %v889
      %v1329 = vunpack.c.0.s8 %v890
      %v1330 = vunpack.c.1.s8 %v890
      %v1331 = vunpack.c.2.s8 %v890
      %v1332 = vunpack.c.3.s8 %v890
      %v1333 = vunpack.c.0.s8 %v891
      %v1334 = vunpack.c.1.s8 %v891
      %v1335 = vunpack.c.2.s8 %v891
      %v1336 = vunpack.c.0.s8 %v892
      %v1337 = vunpack.c.1.s8 %v892
      %v1338 = vunpack.c.2.s8 %v892
      %v1339 = vunpack.c.3.s8 %v892
      %v1340 = vunpack.c.0.s8 %v893
      %v1341 = vunpack.c.1.s8 %v893
      %v1342 = vunpack.c.2.s8 %v893
      %v1343 = vunpack.c.3.s8 %v893
      %v1344 = vunpack.c.0.s8 %v894
      %v1345 = vunpack.c.1.s8 %v894
      %v1346 = vunpack.c.2.s8 %v894
      %v1347 = vunpack.c.0.s8 %v895
      %v1348 = vunpack.c.1.s8 %v895
      %v1349 = vunpack.c.2.s8 %v895
      %v1350 = vunpack.c.3.s8 %v895
      %v1351 = vunpack.c.0.s8 %v896
      %v1352 = vunpack.c.1.s8 %v896
      %v1353 = vunpack.c.2.s8 %v896
      %v1354 = vunpack.c.3.s8 %v896
      %v1355 = vunpack.c.0.s8 %v897
      %v1356 = vunpack.c.1.s8 %v897
      %v1357 = vunpack.c.2.s8 %v897
      %v1358 = vunpack.c.0.s8 %v898
      %v1359 = vunpack.c.1.s8 %v898
      %v1360 = vunpack.c.2.s8 %v898
      %v1361 = vunpack.c.3.s8 %v898
      %v1362 = vunpack.c.0.s8 %v899
      %v1363 = vunpack.c.1.s8 %v899
      %v1364 = vunpack.c.2.s8 %v899
      %v1365 = vunpack.c.3.s8 %v899
      %v1366 = vunpack.c.0.s8 %v900
      %v1367 = vunpack.c.1.s8 %v900
      %v1368 = vunpack.c.2.s8 %v900
      %v1369 = vunpack.c.0.s8 %v901
      %v1370 = vunpack.c.1.s8 %v901
      %v1371 = vunpack.c.2.s8 %v901
      %v1372 = vunpack.c.3.s8 %v901
      %v1373 = vunpack.c.0.s8 %v902
      %v1374 = vunpack.c.1.s8 %v902
      %v1375 = vunpack.c.2.s8 %v902
      %v1376 = vunpack.c.3.s8 %v902
      %v1377 = vunpack.c.0.s8 %v903
      %v1378 = vunpack.c.1.s8 %v903
      %v1379 = vunpack.c.2.s8 %v903
      %v1380 = vunpack.c.0.s8 %v904
      %v1381 = vunpack.c.1.s8 %v904
      %v1382 = vunpack.c.2.s8 %v904
      %v1383 = vunpack.c.3.s8 %v904
      %v1384 = vunpack.c.0.s8 %v905
      %v1385 = vunpack.c.1.s8 %v905
      %v1386 = vunpack.c.2.s8 %v905
      %v1387 = vunpack.c.3.s8 %v905
      %v1388 = vunpack.c.0.s8 %v906
      %v1389 = vunpack.c.1.s8 %v906
      %v1390 = vunpack.c.2.s8 %v906
      %v1391 = vcvt.s32.f32 %v907
      %v1392 = vcvt.s32.f32 %v908
      %v1393 = vcvt.s32.f32 %v909
      %v1394 = vcvt.s32.f32 %v910
      %v1395 = vcvt.s32.f32 %v911
      %v1396 = vcvt.s32.f32 %v912
      %v1397 = vcvt.s32.f32 %v913
      %v1398 = vcvt.s32.f32 %v914
      %v1399 = vcvt.s32.f32 %v915
      %v1400 = vcvt.s32.f32 %v916
      %v1401 = vcvt.s32.f32 %v917
      %v1402 = vcvt.s32.f32 %v918
      %v1403 = vcvt.s32.f32 %v919
      %v1404 = vcvt.s32.f32 %v920
      %v1405 = vcvt.s32.f32 %v921
      %v1406 = vcvt.s32.f32 %v922
      %v1407 = vcvt.s32.f32 %v923
      %v1408 = vcvt.s32.f32 %v924
      %v1409 = vcvt.s32.f32 %v925
      %v1410 = vcvt.s32.f32 %v926
      %v1411 = vcvt.s32.f32 %v927
      %v1412 = vcvt.s32.f32 %v928
      %v1413 = vcvt.s32.f32 %v929
      %v1414 = vcvt.s32.f32 %v930
      %v1415 = vcvt.s32.f32 %v931
      %v1416 = vcvt.s32.f32 %v932
      %v1417 = vcvt.s32.f32 %v933
      %v1418 = vcvt.s32.f32 %v934
      %v1419 = vcvt.s32.f32 %v935
      %v1420 = vcvt.s32.f32 %v936
      %v1421 = vcvt.s32.f32 %v937
      %v1422 = vcvt.s32.f32 %v938
      %v1423 = vcvt.s32.f32 %v939
      %v1424 = vcvt.s32.f32 %v940
      %v1425 = vcvt.s32.f32 %v941
      %v1426 = vcvt.s32.f32 %v942
      %v1427 = vcvt.s32.f32 %v943
      %v1428 = vcvt.s32.f32 %v944
      %v1429 = vcvt.s32.f32 %v945
      %v1430 = vcvt.s32.f32 %v946
      %v1431 = vcvt.s32.f32 %v947
      %v1432 = vcvt.s32.f32 %v948
      %v1433 = vcvt.s32.f32 %v949
      %v1434 = vcvt.s32.f32 %v950
      %v1435 = vcvt.s32.f32 %v951
      %v1436 = vcvt.s32.f32 %v952
      %v1437 = vcvt.s32.f32 %v953
      %v1438 = vcvt.s32.f32 %v954
      %v1439 = vcvt.s32.f32 %v955
      %v1440 = vcvt.s32.f32 %v956
      %v1441 = vcvt.s32.f32 %v957
      %v1442 = vcvt.s32.f32 %v958
      %v1443 = vcvt.s32.f32 %v959
      %v1444 = vcvt.s32.f32 %v960
      %v1445 = vcvt.s32.f32 %v961
      %v1446 = vcvt.s32.f32 %v962
      %v1447 = vcvt.s32.f32 %v963
      %v1448 = vcvt.s32.f32 %v964
      %v1449 = vcvt.s32.f32 %v965
      %v1450 = vcvt.s32.f32 %v966
      %v1451 = vcvt.s32.f32 %v967
      %v1452 = vcvt.s32.f32 %v968
      %v1453 = vcvt.s32.f32 %v969
      %v1454 = vcvt.s32.f32 %v970
      %v1455 = vcvt.s32.f32 %v971
      %v1456 = vcvt.s32.f32 %v972
      %v1457 = vcvt.s32.f32 %v973
      %v1458 = vcvt.s32.f32 %v974
      %v1459 = vcvt.s32.f32 %v975
      %v1460 = vcvt.s32.f32 %v976
      %v1461 = vcvt.s32.f32 %v977
      %v1462 = vcvt.s32.f32 %v978
      %v1463 = vcvt.s32.f32 %v979
      %v1464 = vcvt.s32.f32 %v980
      %v1465 = vcvt.s32.f32 %v981
      %v1466 = vcvt.s32.f32 %v982
      %v1467 = vcvt.s32.f32 %v983
      %v1468 = vcvt.s32.f32 %v984
      %v1469 = vcvt.s32.f32 %v985
      %v1470 = vcvt.s32.f32 %v986
      %v1471 = vcvt.s32.f32 %v987
      %v1472 = vcvt.s32.f32 %v988
      %v1473 = vcvt.s32.f32 %v989
      %v1474 = vcvt.s32.f32 %v990
      %v1475 = vcvt.s32.f32 %v991
      %v1476 = vcvt.s32.f32 %v992
      %v1477 = vcvt.s32.f32 %v993
      %v1478 = vcvt.s32.f32 %v994
      %v1479 = vcvt.s32.f32 %v995
      %v1480 = vcvt.s32.f32 %v996
      %v1481 = vcvt.s32.f32 %v997
      %v1482 = vcvt.s32.f32 %v998
      %v1483 = vcvt.s32.f32 %v999
      %v1484 = vcvt.s32.f32 %v1000
      %v1485 = vcvt.s32.f32 %v1001
      %v1486 = vcvt.s32.f32 %v1002
      %v1487 = vcvt.s32.f32 %v1003
      %v1488 = vcvt.s32.f32 %v1004
      %v1489 = vcvt.s32.f32 %v1005
      %v1490 = vcvt.s32.f32 %v1006
      %v1491 = vcvt.s32.f32 %v1007
      %v1492 = vcvt.s32.f32 %v1008
      %v1493 = vcvt.s32.f32 %v1009
      %v1494 = vcvt.s32.f32 %v1010
      %v1495 = vcvt.s32.f32 %v1011
      %v1496 = vcvt.s32.f32 %v1012
      %v1497 = vcvt.s32.f32 %v1013
      %v1498 = vcvt.s32.f32 %v1014
      %v1499 = vcvt.s32.f32 %v1015
      %v1500 = vcvt.s32.f32 %v1016
      %v1501 = vcvt.s32.f32 %v1017
      %v1502 = vcvt.s32.f32 %v1018
      %v1503 = vcvt.s32.f32 %v1019
      %v1504 = vcvt.s32.f32 %v1020
      %v1505 = vcvt.s32.f32 %v1021
      %v1506 = vcvt.s32.f32 %v1022
      %v1507 = vcvt.s32.f32 %v1023
      %v1508 = vcvt.s32.f32 %v1024
      %v1509 = vcvt.s32.f32 %v1025
      %v1510 = vcvt.s32.f32 %v1026
      %v1511 = vcvt.s32.f32 %v1027
      %v1512 = vcvt.s32.f32 %v1028
      %v1513 = vcvt.s32.f32 %v1029
      %v1514 = vcvt.s32.f32 %v1030
      %v1515 = vcvt.s32.f32 %v1031
      %v1516 = vcvt.s32.f32 %v1032
      %v1517 = vcvt.s32.f32 %v1033
      %v1518 = vcvt.s32.f32 %v1034
      %v1519 = vcvt.s32.f32 %v1035
      %v1520 = vcvt.s32.f32 %v1036
      %v1521 = vcvt.s32.f32 %v1037
      %v1522 = vcvt.s32.f32 %v1038
      %v1523 = vcvt.s32.f32 %v1039
      %v1524 = vcvt.s32.f32 %v1040
      %v1525 = vcvt.s32.f32 %v1041
      %v1526 = vcvt.s32.f32 %v1042
      %v1527 = vcvt.s32.f32 %v1043
      %v1528 = vcvt.s32.f32 %v1044
      %v1529 = vcvt.s32.f32 %v1045
      %v1530 = vcvt.s32.f32 %v1046
      %v1531 = vcvt.s32.f32 %v1047
      %v1532 = vcvt.s32.f32 %v1048
      %v1533 = vcvt.s32.f32 %v1049
      %v1534 = vcvt.s32.f32 %v1050
      %v1535 = vcvt.s32.f32 %v1051
      %v1536 = vcvt.s32.f32 %v1052
      %v1537 = vcvt.s32.f32 %v1053
      %v1538 = vcvt.s32.f32 %v1054
      %v1539 = vcvt.s32.f32 %v1055
      %v1540 = vcvt.s32.f32 %v1056
      %v1541 = vcvt.s32.f32 %v1057
      %v1542 = vcvt.s32.f32 %v1058
      %v1543 = vcvt.s32.f32 %v1059
      %v1544 = vcvt.s32.f32 %v1060
      %v1545 = vcvt.s32.f32 %v1061
      %v1546 = vcvt.s32.f32 %v1062
      %v1547 = vcvt.s32.f32 %v1063
      %v1548 = vcvt.s32.f32 %v1064
      %v1549 = vcvt.s32.f32 %v1065
      %v1550 = vcvt.s32.f32 %v1066
      %v1551 = vcvt.s32.f32 %v1067
      %v1552 = vcvt.s32.f32 %v1068
      %v1553 = vcvt.s32.f32 %v1069
      %v1554 = vcvt.s32.f32 %v1070
      %v1555 = vcvt.s32.f32 %v1071
      %v1556 = vcvt.s32.f32 %v1072
      %v1557 = vcvt.s32.f32 %v1073
      %v1558 = vcvt.s32.f32 %v1074
      %v1559 = vcvt.s32.f32 %v1075
      %v1560 = vcvt.s32.f32 %v1076
      %v1561 = vcvt.s32.f32 %v1077
      %v1562 = vcvt.s32.f32 %v1078
      %v1563 = vcvt.s32.f32 %v1079
      %v1564 = vcvt.s32.f32 %v1080
      %v1565 = vcvt.s32.f32 %v1081
      %v1566 = vcvt.s32.f32 %v1082
      %v1567 = vcvt.s32.f32 %v1083
      %v1568 = vcvt.s32.f32 %v1084
      %v1569 = vcvt.s32.f32 %v1085
      %v1570 = vcvt.s32.f32 %v1086
      %v1571 = vcvt.s32.f32 %v1087
      %v1572 = vcvt.s32.f32 %v1088
      %v1573 = vcvt.s32.f32 %v1089
      %v1574 = vcvt.s32.f32 %v1090
      %v1575 = vcvt.s32.f32 %v1091
      %v1576 = vcvt.s32.f32 %v1092
      %v1577 = vcvt.s32.f32 %v1093
      %v1578 = vcvt.s32.f32 %v1094
      %v1579 = vcvt.s32.f32 %v1095
      %v1580 = vcvt.s32.f32 %v1096
      %v1581 = vcvt.s32.f32 %v1097
      %v1582 = vcvt.s32.f32 %v1098
      %v1583 = vcvt.s32.f32 %v1099
      %v1584 = vcvt.s32.f32 %v1100
      %v1585 = vcvt.s32.f32 %v1101
      %v1586 = vcvt.s32.f32 %v1102
      %v1587 = vcvt.s32.f32 %v1103
      %v1588 = vcvt.s32.f32 %v1104
      %v1589 = vcvt.s32.f32 %v1105
      %v1590 = vcvt.s32.f32 %v1106
      %v1591 = vcvt.s32.f32 %v1107
      %v1592 = vcvt.s32.f32 %v1108
      %v1593 = vcvt.s32.f32 %v1109
      %v1594 = vcvt.s32.f32 %v1110
      %v1595 = vcvt.s32.f32 %v1111
      %v1596 = vcvt.s32.f32 %v1112
      %v1597 = vcvt.s32.f32 %v1113
      %v1598 = vcvt.s32.f32 %v1114
      %v1599 = vcvt.s32.f32 %v1115
      %v1600 = vcvt.s32.f32 %v1116
      %v1601 = vcvt.s32.f32 %v1117
      %v1602 = vcvt.s32.f32 %v1118
      %v1603 = vcvt.s32.f32 %v1119
      %v1604 = vcvt.s32.f32 %v1120
      %v1605 = vcvt.s32.f32 %v1121
      %v1606 = vcvt.s32.f32 %v1122
      %v1607 = vcvt.s32.f32 %v1123
      %v1608 = vcvt.s32.f32 %v1124
      %v1609 = vcvt.s32.f32 %v1125
      %v1610 = vcvt.s32.f32 %v1126
      %v1611 = vcvt.s32.f32 %v1127
      %v1612 = vcvt.s32.f32 %v1128
      %v1613 = vcvt.s32.f32 %v1129
      %v1614 = vcvt.s32.f32 %v1130
      %v1615 = vcvt.s32.f32 %v1131
      %v1616 = vcvt.s32.f32 %v1132
      %v1617 = vcvt.s32.f32 %v1133
      %v1618 = vcvt.s32.f32 %v1134
      %v1619 = vcvt.s32.f32 %v1135
      %v1620 = vcvt.s32.f32 %v1136
      %v1621 = vcvt.s32.f32 %v1137
      %v1622 = vcvt.s32.f32 %v1138
      %v1623 = vcvt.s32.f32 %v1139
      %v1624 = vcvt.s32.f32 %v1140
      %v1625 = vcvt.s32.f32 %v1141
      %v1626 = vcvt.s32.f32 %v1142
      %v1627 = vcvt.s32.f32 %v1143
      %v1628 = vcvt.s32.f32 %v1144
      %v1629 = vcvt.s32.f32 %v1145
      %v1630 = vcvt.s32.f32 %v1146
      %v1631 = vcvt.s32.f32 %v1147
      %v1632 = vcvt.s32.f32 %v1148
      %v1633 = vcvt.s32.f32 %v1149
      %v1634 = vcvt.s32.f32 %v1150
      %v1635 = vcvt.s32.f32 %v1151
      %v1636 = vcvt.s32.f32 %v1152
      %v1637 = vcvt.s32.f32 %v1153
      %v1638 = vcvt.s32.f32 %v1154
      %v1639 = vcvt.s32.f32 %v1155
      %v1640 = vcvt.s32.f32 %v1156
      %v1641 = vcvt.s32.f32 %v1157
      %v1642 = vcvt.s32.f32 %v1158
      %v1643 = vcvt.s32.f32 %v1159
      %v1644 = vcvt.s32.f32 %v1160
      %v1645 = vcvt.s32.f32 %v1161
      %v1646 = vcvt.s32.f32 %v1162
      %v1647 = vcvt.s32.f32 %v1163
      %v1648 = vcvt.s32.f32 %v1164
      %v1649 = vcvt.s32.f32 %v1165
      %v1650 = vcvt.s32.f32 %v1166
      %v1651 = vcvt.s32.f32 %v1167
      %v1652 = vcvt.s32.f32 %v1168
      %v1653 = vcvt.s32.f32 %v1169
      %v1654 = vcvt.s32.f32 %v1170
      %v1655 = vcvt.s32.f32 %v1171
      %v1656 = vcvt.s32.f32 %v1172
      %v1657 = vcvt.s32.f32 %v1173
      %v1658 = vcvt.s32.f32 %v1174
      %v1659 = vcvt.s32.f32 %v1175
      %v1660 = vcvt.s32.f32 %v1176
      %v1661 = vcvt.s32.f32 %v1177
      %v1662 = vcvt.s32.f32 %v1178
      %v1663 = vcvt.s32.f32 %v1179
      %v1664 = vcvt.s32.f32 %v1180
      %v1665 = vcvt.s32.f32 %v1181
      %v1666 = vcvt.s32.f32 %v1182
      %v1667 = vcvt.s32.f32 %v1183
      %v1668 = vcvt.s32.f32 %v1184
      %v1669 = vcvt.s32.f32 %v1185
      %v1670 = vcvt.s32.f32 %v1186
      %v1671 = vcvt.s32.f32 %v1187
      %v1672 = vcvt.s32.f32 %v1188
      %v1673 = vcvt.s32.f32 %v1189
      %v1674 = vcvt.s32.f32 %v1190
      %v1675 = vcvt.s32.f32 %v1191
      %v1676 = vcvt.s32.f32 %v1192
      %v1677 = vcvt.s32.f32 %v1193
      %v1678 = vcvt.s32.f32 %v1194
      %v1679 = vcvt.s32.f32 %v1195
      %v1680 = vcvt.s32.f32 %v1196
      %v1681 = vcvt.s32.f32 %v1197
      %v1682 = vcvt.s32.f32 %v1198
      %v1683 = vcvt.s32.f32 %v1199
      %v1684 = vcvt.s32.f32 %v1200
      %v1685 = vcvt.s32.f32 %v1201
      %v1686 = vcvt.s32.f32 %v1202
      %v1687 = vcvt.s32.f32 %v1203
      %v1688 = vcvt.s32.f32 %v1204
      %v1689 = vcvt.s32.f32 %v1205
      %v1690 = vcvt.s32.f32 %v1206
      %v1691 = vcvt.s32.f32 %v1207
      %v1692 = vcvt.s32.f32 %v1208
      %v1693 = vcvt.s32.f32 %v1209
      %v1694 = vcvt.s32.f32 %v1210
      %v1695 = vcvt.s32.f32 %v1211
      %v1696 = vcvt.s32.f32 %v1212
      %v1697 = vcvt.s32.f32 %v1213
      %v1698 = vcvt.s32.f32 %v1214
      %v1699 = vcvt.s32.f32 %v1215
      %v1700 = vcvt.s32.f32 %v1216
      %v1701 = vcvt.s32.f32 %v1217
      %v1702 = vcvt.s32.f32 %v1218
      %v1703 = vcvt.s32.f32 %v1219
      %v1704 = vcvt.s32.f32 %v1220
      %v1705 = vcvt.s32.f32 %v1221
      %v1706 = vcvt.s32.f32 %v1222
      %v1707 = vcvt.s32.f32 %v1223
      %v1708 = vcvt.s32.f32 %v1224
      %v1709 = vcvt.s32.f32 %v1225
      %v1710 = vcvt.s32.f32 %v1226
      %v1711 = vcvt.s32.f32 %v1227
      %v1712 = vcvt.s32.f32 %v1228
      %v1713 = vcvt.s32.f32 %v1229
      %v1714 = vcvt.s32.f32 %v1230
      %v1715 = vcvt.s32.f32 %v1231
      %v1716 = vcvt.s32.f32 %v1232
      %v1717 = vcvt.s32.f32 %v1233
      %v1718 = vcvt.s32.f32 %v1234
      %v1719 = vcvt.s32.f32 %v1235
      %v1720 = vcvt.s32.f32 %v1236
      %v1721 = vcvt.s32.f32 %v1237
      %v1722 = vcvt.s32.f32 %v1238
      %v1723 = vcvt.s32.f32 %v1239
      %v1724 = vcvt.s32.f32 %v1240
      %v1725 = vcvt.s32.f32 %v1241
      %v1726 = vcvt.s32.f32 %v1242
      %v1727 = vcvt.s32.f32 %v1243
      %v1728 = vcvt.s32.f32 %v1244
      %v1729 = vcvt.s32.f32 %v1245
      %v1730 = vcvt.s32.f32 %v1246
      %v1731 = vcvt.s32.f32 %v1247
      %v1732 = vcvt.s32.f32 %v1248
      %v1733 = vcvt.s32.f32 %v1249
      %v1734 = vcvt.s32.f32 %v1250
      %v1735 = vcvt.s32.f32 %v1251
      %v1736 = vcvt.s32.f32 %v1252
      %v1737 = vcvt.s32.f32 %v1253
      %v1738 = vcvt.s32.f32 %v1254
      %v1739 = vcvt.s32.f32 %v1255
      %v1740 = vcvt.s32.f32 %v1256
      %v1741 = vcvt.s32.f32 %v1257
      %v1742 = vcvt.s32.f32 %v1258
      %v1743 = vcvt.s32.f32 %v1259
      %v1744 = vcvt.s32.f32 %v1260
      %v1745 = vcvt.s32.f32 %v1261
      %v1746 = vcvt.s32.f32 %v1262
      %v1747 = vcvt.s32.f32 %v1263
      %v1748 = vcvt.s32.f32 %v1264
      %v1749 = vcvt.s32.f32 %v1265
      %v1750 = vcvt.s32.f32 %v1266
      %v1751 = vcvt.s32.f32 %v1267
      %v1752 = vcvt.s32.f32 %v1268
      %v1753 = vcvt.s32.f32 %v1269
      %v1754 = vcvt.s32.f32 %v1270
      %v1755 = vcvt.s32.f32 %v1271
      %v1756 = vcvt.s32.f32 %v1272
      %v1757 = vcvt.s32.f32 %v1273
      %v1758 = vcvt.s32.f32 %v1274
      %v1759 = vcvt.s32.f32 %v1275
      %v1760 = vcvt.s32.f32 %v1276
      %v1761 = vcvt.s32.f32 %v1277
      %v1762 = vcvt.s32.f32 %v1278
      %v1763 = vcvt.s32.f32 %v1279
      %v1764 = vcvt.s32.f32 %v1280
      %v1765 = vcvt.s32.f32 %v1281
      %v1766 = vcvt.s32.f32 %v1282
      %v1767 = vcvt.s32.f32 %v1283
      %v1768 = vcvt.s32.f32 %v1284
      %v1769 = vcvt.s32.f32 %v1285
      %v1770 = vcvt.s32.f32 %v1286
      %v1771 = vcvt.s32.f32 %v1287
      %v1772 = vcvt.s32.f32 %v1288
      %v1773 = vcvt.s32.f32 %v1289
      %v1774 = vcvt.s32.f32 %v1290
      %v1775 = vcvt.s32.f32 %v1291
      %v1776 = vcvt.s32.f32 %v1292
      %v1777 = vcvt.s32.f32 %v1293
      %v1778 = vcvt.s32.f32 %v1294
      %v1779 = vcvt.s32.f32 %v1295
      %v1780 = vcvt.s32.f32 %v1296
      %v1781 = vcvt.s32.f32 %v1297
      %v1782 = vcvt.s32.f32 %v1298
      %v1783 = vcvt.s32.f32 %v1299
      %v1784 = vcvt.s32.f32 %v1300
      %v1785 = vcvt.s32.f32 %v1301
      %v1786 = vcvt.s32.f32 %v1302
      %v1787 = vcvt.s32.f32 %v1303
      %v1788 = vcvt.s32.f32 %v1304
      %v1789 = vcvt.s32.f32 %v1305
      %v1790 = vcvt.s32.f32 %v1306
      %v1791 = vcvt.s32.f32 %v1307
      %v1792 = vcvt.s32.f32 %v1308
      %v1793 = vcvt.s32.f32 %v1309
      %v1794 = vcvt.s32.f32 %v1310
      %v1795 = vcvt.s32.f32 %v1311
      %v1796 = vcvt.s32.f32 %v1312
      %v1797 = vcvt.s32.f32 %v1313
      %v1798 = vcvt.s32.f32 %v1314
      %v1799 = vcvt.s32.f32 %v1315
      %v1800 = vcvt.s32.f32 %v1316
      %v1801 = vcvt.s32.f32 %v1317
      %v1802 = vcvt.s32.f32 %v1318
      %v1803 = vcvt.s32.f32 %v1319
      %v1804 = vcvt.s32.f32 %v1320
      %v1805 = vcvt.s32.f32 %v1321
      %v1806 = vcvt.s32.f32 %v1322
      %v1807 = vcvt.s32.f32 %v1323
      %v1808 = vcvt.s32.f32 %v1324
      %v1809 = vcvt.s32.f32 %v1325
      %v1810 = vcvt.s32.f32 %v1326
      %v1811 = vcvt.s32.f32 %v1327
      %v1812 = vcvt.s32.f32 %v1328
      %v1813 = vcvt.s32.f32 %v1329
      %v1814 = vcvt.s32.f32 %v1330
      %v1815 = vcvt.s32.f32 %v1331
      %v1816 = vcvt.s32.f32 %v1332
      %v1817 = vcvt.s32.f32 %v1333
      %v1818 = vcvt.s32.f32 %v1334
      %v1819 = vcvt.s32.f32 %v1335
      %v1820 = vcvt.s32.f32 %v1336
      %v1821 = vcvt.s32.f32 %v1337
      %v1822 = vcvt.s32.f32 %v1338
      %v1823 = vcvt.s32.f32 %v1339
      %v1824 = vcvt.s32.f32 %v1340
      %v1825 = vcvt.s32.f32 %v1341
      %v1826 = vcvt.s32.f32 %v1342
      %v1827 = vcvt.s32.f32 %v1343
      %v1828 = vcvt.s32.f32 %v1344
      %v1829 = vcvt.s32.f32 %v1345
      %v1830 = vcvt.s32.f32 %v1346
      %v1831 = vcvt.s32.f32 %v1347
      %v1832 = vcvt.s32.f32 %v1348
      %v1833 = vcvt.s32.f32 %v1349
      %v1834 = vcvt.s32.f32 %v1350
      %v1835 = vcvt.s32.f32 %v1351
      %v1836 = vcvt.s32.f32 %v1352
      %v1837 = vcvt.s32.f32 %v1353
      %v1838 = vcvt.s32.f32 %v1354
      %v1839 = vcvt.s32.f32 %v1355
      %v1840 = vcvt.s32.f32 %v1356
      %v1841 = vcvt.s32.f32 %v1357
      %v1842 = vcvt.s32.f32 %v1358
      %v1843 = vcvt.s32.f32 %v1359
      %v1844 = vcvt.s32.f32 %v1360
      %v1845 = vcvt.s32.f32 %v1361
      %v1846 = vcvt.s32.f32 %v1362
      %v1847 = vcvt.s32.f32 %v1363
      %v1848 = vcvt.s32.f32 %v1364
      %v1849 = vcvt.s32.f32 %v1365
      %v1850 = vcvt.s32.f32 %v1366
      %v1851 = vcvt.s32.f32 %v1367
      %v1852 = vcvt.s32.f32 %v1368
      %v1853 = vcvt.s32.f32 %v1369
      %v1854 = vcvt.s32.f32 %v1370
      %v1855 = vcvt.s32.f32 %v1371
      %v1856 = vcvt.s32.f32 %v1372
      %v1857 = vcvt.s32.f32 %v1373
      %v1858 = vcvt.s32.f32 %v1374
      %v1859 = vcvt.s32.f32 %v1375
      %v1860 = vcvt.s32.f32 %v1376
      %v1861 = vcvt.s32.f32 %v1377
      %v1862 = vcvt.s32.f32 %v1378
      %v1863 = vcvt.s32.f32 %v1379
      %v1864 = vcvt.s32.f32 %v1380
      %v1865 = vcvt.s32.f32 %v1381
      %v1866 = vcvt.s32.f32 %v1382
      %v1867 = vcvt.s32.f32 %v1383
      %v1868 = vcvt.s32.f32 %v1384
      %v1869 = vcvt.s32.f32 %v1385
      %v1870 = vcvt.s32.f32 %v1386
      %v1871 = vcvt.s32.f32 %v1387
      %v1872 = vcvt.s32.f32 %v1388
      %v1873 = vcvt.s32.f32 %v1389
      %v1874 = vcvt.s32.f32 %v1390
      %v1875 = vld [vmem:[#allocation2] sm:$0xff]
      %v1876 = vld [vmem:[#allocation2 + $0x8] sm:$0xff]
      %v1877 = vld [vmem:[#allocation2 + $0x10] sm:$0xff]
      %v1878 = vld [vmem:[#allocation2 + $0x18] sm:$0xff]
      %v1879 = vld [vmem:[#allocation2 + $0x20] sm:$0xff]
      %v1880 = vld [vmem:[#allocation2 + $0x28] sm:$0xff]
      %v1881 = vld [vmem:[#allocation2 + $0x30] sm:$0xff]
      %v1882 = vld [vmem:[#allocation2 + $0x38] sm:$0xff]
      %v1883 = vld [vmem:[#allocation2 + $0x40] sm:$0xff]
      %v1884 = vld [vmem:[#allocation2 + $0x48] sm:$0xff]
      %v1885 = vld [vmem:[#allocation2 + $0x50] sm:$0xff]
      %vm1886 = vcmask 769024
      %v1888 = vsel %vm1886, %v774, 0
      %vm1890 = vcmask 1045504
      %v1892 = vsel %vm1890, %v1864, 0
      %v1895 = vsel %vm1890, %v1865, 0
      %v1898 = vsel %vm1890, %v1866, 0
      %v1901 = vsel %vm1890, %v1867, 0
      %v1904 = vsel %vm1890, %v1868, 0
      %v1907 = vsel %vm1890, %v1869, 0
      %v1910 = vsel %vm1890, %v1870, 0
      %v1913 = vsel %vm1890, %v1871, 0
      %v1916 = vsel %vm1890, %v1872, 0
      %v1919 = vsel %vm1890, %v1873, 0
      %v1922 = vsel %vm1890, %v1874, 0
      %1924 = vmatprep.subr.mxu0 %v1557
      %1925 = vmatpush1.msra.mxu0 %v1556
      %1926 = vmatprep.subr.mxu0 %v1546
      %1927 = vmatpush1.msra.mxu0 %v1545
      %1928 = vmatprep.subr.mxu0 %v1535
      %1929 = vmatpush1.msra.mxu0 %v1534
      %1930 = vmatprep.subr.mxu0 %v1524
      %1931 = vmatpush1.msra.mxu0 %v1523
      %1932 = vmatprep.subr.mxu0 %v1513
      %1933 = vmatpush1.msra.mxu0 %v1512
      %1934 = vmatprep.subr.mxu0 %v1502
      %1935 = vmatpush1.msra.mxu0 %v1501
      %1936 = vmatprep.subr.mxu0 %v1491
      %1937 = vmatpush1.msra.mxu0 %v1490
      %1938 = vmatprep.subr.mxu0 %v1480
      %1939 = vmatpush1.msra.mxu0 %v1479
      %1940 = vmatprep.subr.mxu0 %v1469
      %1941 = vmatpush1.msra.mxu0 %v1468
      %1942 = vmatprep.subr.mxu0 %v1458
      %1943 = vmatpush1.msra.mxu0 %v1457
      %1944 = vmatprep.subr.mxu0 %v1447
      %1945 = vmatpush1.msra.mxu0 %v1446
      %1946 = vmatprep.subr.mxu0 %v1436
      %1947 = vmatpush1.msra.mxu0 %v1435
      %1948 = vmatprep.subr.mxu0 %v1425
      %1949 = vmatpush1.msra.mxu0 %v1424
      %1950 = vmatprep.subr.mxu0 %v1414
      %1951 = vmatpush1.msra.mxu0 %v1413
      %1952 = vmatprep.subr.mxu0 %v1403
      %1953 = vmatpush1.msra.mxu0 %v1402
      %1954 = vmatprep.subr.mxu0 %v1392
      %1955 = vmatpush1.msra.mxu0 %v1391
      %1956 = vmatprep.subr.mxu0 %v1733
      %1957 = vmatpush2.msra.mxu0 %v1732
      %1958 = vmatprep.subr.mxu0 %v1722
      %1959 = vmatpush2.msra.mxu0 %v1721
      %1960 = vmatprep.subr.mxu0 %v1711
      %1961 = vmatpush2.msra.mxu0 %v1710
      %1962 = vmatprep.subr.mxu0 %v1700
      %1963 = vmatpush2.msra.mxu0 %v1699
      %1964 = vmatprep.subr.mxu0 %v1689
      %1965 = vmatpush2.msra.mxu0 %v1688
      %1966 = vmatprep.subr.mxu0 %v1678
      %1967 = vmatpush2.msra.mxu0 %v1677
      %1968 = vmatprep.subr.mxu0 %v1667
      %1969 = vmatpush2.msra.mxu0 %v1666
      %1970 = vmatprep.subr.mxu0 %v1656
      %1971 = vmatpush2.msra.mxu0 %v1655
      %1972 = vmatprep.subr.mxu0 %v1645
      %1973 = vmatpush2.msra.mxu0 %v1644
      %1974 = vmatprep.subr.mxu0 %v1634
      %1975 = vmatpush2.msra.mxu0 %v1633
      %1976 = vmatprep.subr.mxu0 %v1623
      %1977 = vmatpush2.msra.mxu0 %v1622
      %1978 = vmatprep.subr.mxu0 %v1612
      %1979 = vmatpush2.msra.mxu0 %v1611
      %1980 = vmatprep.subr.mxu0 %v1601
      %1981 = vmatpush2.msra.mxu0 %v1600
      %1982 = vmatprep.subr.mxu0 %v1590
      %1983 = vmatpush2.msra.mxu0 %v1589
      %1984 = vmatprep.subr.mxu0 %v1579
      %1985 = vmatpush2.msra.mxu0 %v1578
      %1986 = vmatprep.subr.mxu0 %v1568
      %1987 = vmatpush2.msra.mxu0 %v1567
      %1988 = vmatprep.mubr.f32.mxu0 %v773
      %1989 = vmatmul.mubr.f32.gmra.mxu0 %v772
      %v1990 = vpop.f32.mrf.mxu0
      %v1991 = vadd.f32 0.0, %v1990
      %v1992 = vpop.f32.mrf.mxu0
      %v1993 = vadd.f32 0.0, %v1992
      %1994 = vdwg.mxu0
      %1995 = vmatprep.subr.mxu0 0.0
      %1996 = vmatpush1.msra.mxu0 0.0
      %1997 = vmatprep.subr.mxu0 0.0
      %1998 = vmatpush1.msra.mxu0 0.0
      %1999 = vmatprep.subr.mxu0 0.0
      %2000 = vmatpush1.msra.mxu0 0.0
      %2001 = vmatprep.subr.mxu0 0.0
      %2002 = vmatpush1.msra.mxu0 0.0
      %2003 = vmatprep.subr.mxu0 %v1895
      %2004 = vmatpush1.msra.mxu0 %v1892
      %2005 = vmatprep.subr.mxu0 %v1854
      %2006 = vmatpush1.msra.mxu0 %v1853
      %2007 = vmatprep.subr.mxu0 %v1843
      %2008 = vmatpush1.msra.mxu0 %v1842
      %2009 = vmatprep.subr.mxu0 %v1832
      %2010 = vmatpush1.msra.mxu0 %v1831
      %2011 = vmatprep.subr.mxu0 %v1821
      %2012 = vmatpush1.msra.mxu0 %v1820
      %2013 = vmatprep.subr.mxu0 %v1810
      %2014 = vmatpush1.msra.mxu0 %v1809
      %2015 = vmatprep.subr.mxu0 %v1799
      %2016 = vmatpush1.msra.mxu0 %v1798
      %2017 = vmatprep.subr.mxu0 %v1788
      %2018 = vmatpush1.msra.mxu0 %v1787
      %2019 = vmatprep.subr.mxu0 %v1777
      %2020 = vmatpush1.msra.mxu0 %v1776
      %2021 = vmatprep.subr.mxu0 %v1766
      %2022 = vmatpush1.msra.mxu0 %v1765
      %2023 = vmatprep.subr.mxu0 %v1755
      %2024 = vmatpush1.msra.mxu0 %v1754
      %2025 = vmatprep.subr.mxu0 %v1744
      %2026 = vmatpush1.msra.mxu0 %v1743
      %2027 = vmatprep.subr.mxu0 0.0
      %2028 = vmatpush2.msra.mxu0 0.0
      %2029 = vmatprep.subr.mxu0 0.0
      %2030 = vmatpush2.msra.mxu0 0.0
      %2031 = vmatprep.subr.mxu0 0.0
      %2032 = vmatpush2.msra.mxu0 0.0
      %2033 = vmatprep.subr.mxu0 0.0
      %2034 = vmatpush2.msra.mxu0 0.0
      %2035 = vmatprep.subr.mxu0 0.0
      %2036 = vmatpush2.msra.mxu0 0.0
      %2037 = vmatprep.subr.mxu0 0.0
      %2038 = vmatpush2.msra.mxu0 0.0
      %2039 = vmatprep.subr.mxu0 0.0
      %2040 = vmatpush2.msra.mxu0 0.0
      %2041 = vmatprep.subr.mxu0 0.0
      %2042 = vmatpush2.msra.mxu0 0.0
      %2043 = vmatprep.subr.mxu0 0.0
      %2044 = vmatpush2.msra.mxu0 0.0
      %2045 = vmatprep.subr.mxu0 0.0
      %2046 = vmatpush2.msra.mxu0 0.0
      %2047 = vmatprep.subr.mxu0 0.0
      %2048 = vmatpush2.msra.mxu0 0.0
      %2049 = vmatprep.subr.mxu0 0.0
      %2050 = vmatpush2.msra.mxu0 0.0
      %2051 = vmatprep.subr.mxu0 0.0
      %2052 = vmatpush2.msra.mxu0 0.0
      %2053 = vmatprep.subr.mxu0 0.0
      %2054 = vmatpush2.msra.mxu0 0.0
      %2055 = vmatprep.subr.mxu0 0.0
      %2056 = vmatpush2.msra.mxu0 0.0
      %2057 = vmatprep.subr.mxu0 0.0
      %2058 = vmatpush2.msra.mxu0 0.0
      %2059 = vmatprep.mubr.f32.mxu0 0.0
      %2060 = vmatmul.mubr.f32.gmra.mxu0 %v1888
      %v2061 = vpop.f32.mrf.mxu0
      %v2062 = vadd.f32 %v1991, %v2061
      %v2063 = vpop.f32.mrf.mxu0
      %v2064 = vadd.f32 %v1993, %v2063
      %2065 = vdwg.mxu0
      %2066 = vmatprep.subr.mxu0 %v1559
      %2067 = vmatpush1.msra.mxu0 %v1558
      %2068 = vmatprep.subr.mxu0 %v1548
      %2069 = vmatpush1.msra.mxu0 %v1547
      %2070 = vmatprep.subr.mxu0 %v1537
      %2071 = vmatpush1.msra.mxu0 %v1536
      %2072 = vmatprep.subr.mxu0 %v1526
      %2073 = vmatpush1.msra.mxu0 %v1525
      %2074 = vmatprep.subr.mxu0 %v1515
      %2075 = vmatpush1.msra.mxu0 %v1514
      %2076 = vmatprep.subr.mxu0 %v1504
      %2077 = vmatpush1.msra.mxu0 %v1503
      %2078 = vmatprep.subr.mxu0 %v1493
      %2079 = vmatpush1.msra.mxu0 %v1492
      %2080 = vmatprep.subr.mxu0 %v1482
      %2081 = vmatpush1.msra.mxu0 %v1481
      %2082 = vmatprep.subr.mxu0 %v1471
      %2083 = vmatpush1.msra.mxu0 %v1470
      %2084 = vmatprep.subr.mxu0 %v1460
      %2085 = vmatpush1.msra.mxu0 %v1459
      %2086 = vmatprep.subr.mxu0 %v1449
      %2087 = vmatpush1.msra.mxu0 %v1448
      %2088 = vmatprep.subr.mxu0 %v1438
      %2089 = vmatpush1.msra.mxu0 %v1437
      %2090 = vmatprep.subr.mxu0 %v1427
      %2091 = vmatpush1.msra.mxu0 %v1426
      %2092 = vmatprep.subr.mxu0 %v1416
      %2093 = vmatpush1.msra.mxu0 %v1415
      %2094 = vmatprep.subr.mxu0 %v1405
      %2095 = vmatpush1.msra.mxu0 %v1404
      %2096 = vmatprep.subr.mxu0 %v1394
      %2097 = vmatpush1.msra.mxu0 %v1393
      %2098 = vmatprep.subr.mxu0 %v1735
      %2099 = vmatpush2.msra.mxu0 %v1734
      %2100 = vmatprep.subr.mxu0 %v1724
      %2101 = vmatpush2.msra.mxu0 %v1723
      %2102 = vmatprep.subr.mxu0 %v1713
      %2103 = vmatpush2.msra.mxu0 %v1712
      %2104 = vmatprep.subr.mxu0 %v1702
      %2105 = vmatpush2.msra.mxu0 %v1701
      %2106 = vmatprep.subr.mxu0 %v1691
      %2107 = vmatpush2.msra.mxu0 %v1690
      %2108 = vmatprep.subr.mxu0 %v1680
      %2109 = vmatpush2.msra.mxu0 %v1679
      %2110 = vmatprep.subr.mxu0 %v1669
      %2111 = vmatpush2.msra.mxu0 %v1668
      %2112 = vmatprep.subr.mxu0 %v1658
      %2113 = vmatpush2.msra.mxu0 %v1657
      %2114 = vmatprep.subr.mxu0 %v1647
      %2115 = vmatpush2.msra.mxu0 %v1646
      %2116 = vmatprep.subr.mxu0 %v1636
      %2117 = vmatpush2.msra.mxu0 %v1635
      %2118 = vmatprep.subr.mxu0 %v1625
      %2119 = vmatpush2.msra.mxu0 %v1624
      %2120 = vmatprep.subr.mxu0 %v1614
      %2121 = vmatpush2.msra.mxu0 %v1613
      %2122 = vmatprep.subr.mxu0 %v1603
      %2123 = vmatpush2.msra.mxu0 %v1602
      %2124 = vmatprep.subr.mxu0 %v1592
      %2125 = vmatpush2.msra.mxu0 %v1591
      %2126 = vmatprep.subr.mxu0 %v1581
      %2127 = vmatpush2.msra.mxu0 %v1580
      %2128 = vmatprep.subr.mxu0 %v1570
      %2129 = vmatpush2.msra.mxu0 %v1569
      %2130 = vmatprep.mubr.f32.mxu0 %v773
      %2131 = vmatmul.mubr.f32.gmra.mxu0 %v772
      %v2132 = vpop.f32.mrf.mxu0
      %v2133 = vadd.f32 0.0, %v2132
      %v2134 = vpop.f32.mrf.mxu0
      %v2135 = vadd.f32 0.0, %v2134
      %2136 = vdwg.mxu0
      %2137 = vmatprep.subr.mxu0 0.0
      %2138 = vmatpush1.msra.mxu0 0.0
      %2139 = vmatprep.subr.mxu0 0.0
      %2140 = vmatpush1.msra.mxu0 0.0
      %2141 = vmatprep.subr.mxu0 0.0
      %2142 = vmatpush1.msra.mxu0 0.0
      %2143 = vmatprep.subr.mxu0 0.0
      %2144 = vmatpush1.msra.mxu0 0.0
      %2145 = vmatprep.subr.mxu0 %v1901
      %2146 = vmatpush1.msra.mxu0 %v1898
      %2147 = vmatprep.subr.mxu0 %v1856
      %2148 = vmatpush1.msra.mxu0 %v1855
      %2149 = vmatprep.subr.mxu0 %v1845
      %2150 = vmatpush1.msra.mxu0 %v1844
      %2151 = vmatprep.subr.mxu0 %v1834
      %2152 = vmatpush1.msra.mxu0 %v1833
      %2153 = vmatprep.subr.mxu0 %v1823
      %2154 = vmatpush1.msra.mxu0 %v1822
      %2155 = vmatprep.subr.mxu0 %v1812
      %2156 = vmatpush1.msra.mxu0 %v1811
      %2157 = vmatprep.subr.mxu0 %v1801
      %2158 = vmatpush1.msra.mxu0 %v1800
      %2159 = vmatprep.subr.mxu0 %v1790
      %2160 = vmatpush1.msra.mxu0 %v1789
      %2161 = vmatprep.subr.mxu0 %v1779
      %2162 = vmatpush1.msra.mxu0 %v1778
      %2163 = vmatprep.subr.mxu0 %v1768
      %2164 = vmatpush1.msra.mxu0 %v1767
      %2165 = vmatprep.subr.mxu0 %v1757
      %2166 = vmatpush1.msra.mxu0 %v1756
      %2167 = vmatprep.subr.mxu0 %v1746
      %2168 = vmatpush1.msra.mxu0 %v1745
      %2169 = vmatprep.subr.mxu0 0.0
      %2170 = vmatpush2.msra.mxu0 0.0
      %2171 = vmatprep.subr.mxu0 0.0
      %2172 = vmatpush2.msra.mxu0 0.0
      %2173 = vmatprep.subr.mxu0 0.0
      %2174 = vmatpush2.msra.mxu0 0.0
      %2175 = vmatprep.subr.mxu0 0.0
      %2176 = vmatpush2.msra.mxu0 0.0
      %2177 = vmatprep.subr.mxu0 0.0
      %2178 = vmatpush2.msra.mxu0 0.0
      %2179 = vmatprep.subr.mxu0 0.0
      %2180 = vmatpush2.msra.mxu0 0.0
      %2181 = vmatprep.subr.mxu0 0.0
      %2182 = vmatpush2.msra.mxu0 0.0
      %2183 = vmatprep.subr.mxu0 0.0
      %2184 = vmatpush2.msra.mxu0 0.0
      %2185 = vmatprep.subr.mxu0 0.0
      %2186 = vmatpush2.msra.mxu0 0.0
      %2187 = vmatprep.subr.mxu0 0.0
      %2188 = vmatpush2.msra.mxu0 0.0
      %2189 = vmatprep.subr.mxu0 0.0
      %2190 = vmatpush2.msra.mxu0 0.0
      %2191 = vmatprep.subr.mxu0 0.0
      %2192 = vmatpush2.msra.mxu0 0.0
      %2193 = vmatprep.subr.mxu0 0.0
      %2194 = vmatpush2.msra.mxu0 0.0
      %2195 = vmatprep.subr.mxu0 0.0
      %2196 = vmatpush2.msra.mxu0 0.0
      %2197 = vmatprep.subr.mxu0 0.0
      %2198 = vmatpush2.msra.mxu0 0.0
      %2199 = vmatprep.subr.mxu0 0.0
      %2200 = vmatpush2.msra.mxu0 0.0
      %2201 = vmatprep.mubr.f32.mxu0 0.0
      %2202 = vmatmul.mubr.f32.gmra.mxu0 %v1888
      %v2203 = vpop.f32.mrf.mxu0
      %v2204 = vadd.f32 %v2133, %v2203
      %v2205 = vpop.f32.mrf.mxu0
      %v2206 = vadd.f32 %v2135, %v2205
      %2207 = vdwg.mxu0
      %2208 = vmatprep.subr.mxu0 %v1561
      %2209 = vmatpush1.msra.mxu0 %v1560
      %2210 = vmatprep.subr.mxu0 %v1550
      %2211 = vmatpush1.msra.mxu0 %v1549
      %2212 = vmatprep.subr.mxu0 %v1539
      %2213 = vmatpush1.msra.mxu0 %v1538
      %2214 = vmatprep.subr.mxu0 %v1528
      %2215 = vmatpush1.msra.mxu0 %v1527
      %2216 = vmatprep.subr.mxu0 %v1517
      %2217 = vmatpush1.msra.mxu0 %v1516
      %2218 = vmatprep.subr.mxu0 %v1506
      %2219 = vmatpush1.msra.mxu0 %v1505
      %2220 = vmatprep.subr.mxu0 %v1495
      %2221 = vmatpush1.msra.mxu0 %v1494
      %2222 = vmatprep.subr.mxu0 %v1484
      %2223 = vmatpush1.msra.mxu0 %v1483
      %2224 = vmatprep.subr.mxu0 %v1473
      %2225 = vmatpush1.msra.mxu0 %v1472
      %2226 = vmatprep.subr.mxu0 %v1462
      %2227 = vmatpush1.msra.mxu0 %v1461
      %2228 = vmatprep.subr.mxu0 %v1451
      %2229 = vmatpush1.msra.mxu0 %v1450
      %2230 = vmatprep.subr.mxu0 %v1440
      %2231 = vmatpush1.msra.mxu0 %v1439
      %2232 = vmatprep.subr.mxu0 %v1429
      %2233 = vmatpush1.msra.mxu0 %v1428
      %2234 = vmatprep.subr.mxu0 %v1418
      %2235 = vmatpush1.msra.mxu0 %v1417
      %2236 = vmatprep.subr.mxu0 %v1407
      %2237 = vmatpush1.msra.mxu0 %v1406
      %2238 = vmatprep.subr.mxu0 %v1396
      %2239 = vmatpush1.msra.mxu0 %v1395
      %2240 = vmatprep.subr.mxu0 %v1737
      %2241 = vmatpush2.msra.mxu0 %v1736
      %2242 = vmatprep.subr.mxu0 %v1726
      %2243 = vmatpush2.msra.mxu0 %v1725
      %2244 = vmatprep.subr.mxu0 %v1715
      %2245 = vmatpush2.msra.mxu0 %v1714
      %2246 = vmatprep.subr.mxu0 %v1704
      %2247 = vmatpush2.msra.mxu0 %v1703
      %2248 = vmatprep.subr.mxu0 %v1693
      %2249 = vmatpush2.msra.mxu0 %v1692
      %2250 = vmatprep.subr.mxu0 %v1682
      %2251 = vmatpush2.msra.mxu0 %v1681
      %2252 = vmatprep.subr.mxu0 %v1671
      %2253 = vmatpush2.msra.mxu0 %v1670
      %2254 = vmatprep.subr.mxu0 %v1660
      %2255 = vmatpush2.msra.mxu0 %v1659
      %2256 = vmatprep.subr.mxu0 %v1649
      %2257 = vmatpush2.msra.mxu0 %v1648
      %2258 = vmatprep.subr.mxu0 %v1638
      %2259 = vmatpush2.msra.mxu0 %v1637
      %2260 = vmatprep.subr.mxu0 %v1627
      %2261 = vmatpush2.msra.mxu0 %v1626
      %2262 = vmatprep.subr.mxu0 %v1616
      %2263 = vmatpush2.msra.mxu0 %v1615
      %2264 = vmatprep.subr.mxu0 %v1605
      %2265 = vmatpush2.msra.mxu0 %v1604
      %2266 = vmatprep.subr.mxu0 %v1594
      %2267 = vmatpush2.msra.mxu0 %v1593
      %2268 = vmatprep.subr.mxu0 %v1583
      %2269 = vmatpush2.msra.mxu0 %v1582
      %2270 = vmatprep.subr.mxu0 %v1572
      %2271 = vmatpush2.msra.mxu0 %v1571
      %2272 = vmatprep.mubr.f32.mxu0 %v773
      %2273 = vmatmul.mubr.f32.gmra.mxu0 %v772
      %v2274 = vpop.f32.mrf.mxu0
      %v2275 = vadd.f32 0.0, %v2274
      %v2276 = vpop.f32.mrf.mxu0
      %v2277 = vadd.f32 0.0, %v2276
      %2278 = vdwg.mxu0
      %2279 = vmatprep.subr.mxu0 0.0
      %2280 = vmatpush1.msra.mxu0 0.0
      %2281 = vmatprep.subr.mxu0 0.0
      %2282 = vmatpush1.msra.mxu0 0.0
      %2283 = vmatprep.subr.mxu0 0.0
      %2284 = vmatpush1.msra.mxu0 0.0
      %2285 = vmatprep.subr.mxu0 0.0
      %2286 = vmatpush1.msra.mxu0 0.0
      %2287 = vmatprep.subr.mxu0 %v1907
      %2288 = vmatpush1.msra.mxu0 %v1904
      %2289 = vmatprep.subr.mxu0 %v1858
      %2290 = vmatpush1.msra.mxu0 %v1857
      %2291 = vmatprep.subr.mxu0 %v1847
      %2292 = vmatpush1.msra.mxu0 %v1846
      %2293 = vmatprep.subr.mxu0 %v1836
      %2294 = vmatpush1.msra.mxu0 %v1835
      %2295 = vmatprep.subr.mxu0 %v1825
      %2296 = vmatpush1.msra.mxu0 %v1824
      %2297 = vmatprep.subr.mxu0 %v1814
      %2298 = vmatpush1.msra.mxu0 %v1813
      %2299 = vmatprep.subr.mxu0 %v1803
      %2300 = vmatpush1.msra.mxu0 %v1802
      %2301 = vmatprep.subr.mxu0 %v1792
      %2302 = vmatpush1.msra.mxu0 %v1791
      %2303 = vmatprep.subr.mxu0 %v1781
      %2304 = vmatpush1.msra.mxu0 %v1780
      %2305 = vmatprep.subr.mxu0 %v1770
      %2306 = vmatpush1.msra.mxu0 %v1769
      %2307 = vmatprep.subr.mxu0 %v1759
      %2308 = vmatpush1.msra.mxu0 %v1758
      %2309 = vmatprep.subr.mxu0 %v1748
      %2310 = vmatpush1.msra.mxu0 %v1747
      %2311 = vmatprep.subr.mxu0 0.0
      %2312 = vmatpush2.msra.mxu0 0.0
      %2313 = vmatprep.subr.mxu0 0.0
      %2314 = vmatpush2.msra.mxu0 0.0
      %2315 = vmatprep.subr.mxu0 0.0
      %2316 = vmatpush2.msra.mxu0 0.0
      %2317 = vmatprep.subr.mxu0 0.0
      %2318 = vmatpush2.msra.mxu0 0.0
      %2319 = vmatprep.subr.mxu0 0.0
      %2320 = vmatpush2.msra.mxu0 0.0
      %2321 = vmatprep.subr.mxu0 0.0
      %2322 = vmatpush2.msra.mxu0 0.0
      %2323 = vmatprep.subr.mxu0 0.0
      %2324 = vmatpush2.msra.mxu0 0.0
      %2325 = vmatprep.subr.mxu0 0.0
      %2326 = vmatpush2.msra.mxu0 0.0
      %2327 = vmatprep.subr.mxu0 0.0
      %2328 = vmatpush2.msra.mxu0 0.0
      %2329 = vmatprep.subr.mxu0 0.0
      %2330 = vmatpush2.msra.mxu0 0.0
      %2331 = vmatprep.subr.mxu0 0.0
      %2332 = vmatpush2.msra.mxu0 0.0
      %2333 = vmatprep.subr.mxu0 0.0
      %2334 = vmatpush2.msra.mxu0 0.0
      %2335 = vmatprep.subr.mxu0 0.0
      %2336 = vmatpush2.msra.mxu0 0.0
      %2337 = vmatprep.subr.mxu0 0.0
      %2338 = vmatpush2.msra.mxu0 0.0
      %2339 = vmatprep.subr.mxu0 0.0
      %2340 = vmatpush2.msra.mxu0 0.0
      %2341 = vmatprep.subr.mxu0 0.0
      %2342 = vmatpush2.msra.mxu0 0.0
      %2343 = vmatprep.mubr.f32.mxu0 0.0
      %2344 = vmatmul.mubr.f32.gmra.mxu0 %v1888
      %v2345 = vpop.f32.mrf.mxu0
      %v2346 = vadd.f32 %v2275, %v2345
      %v2347 = vpop.f32.mrf.mxu0
      %v2348 = vadd.f32 %v2277, %v2347
      %2349 = vdwg.mxu0
      %2350 = vmatprep.subr.mxu0 %v1563
      %2351 = vmatpush1.msra.mxu0 %v1562
      %2352 = vmatprep.subr.mxu0 %v1552
      %2353 = vmatpush1.msra.mxu0 %v1551
      %2354 = vmatprep.subr.mxu0 %v1541
      %2355 = vmatpush1.msra.mxu0 %v1540
      %2356 = vmatprep.subr.mxu0 %v1530
      %2357 = vmatpush1.msra.mxu0 %v1529
      %2358 = vmatprep.subr.mxu0 %v1519
      %2359 = vmatpush1.msra.mxu0 %v1518
      %2360 = vmatprep.subr.mxu0 %v1508
      %2361 = vmatpush1.msra.mxu0 %v1507
      %2362 = vmatprep.subr.mxu0 %v1497
      %2363 = vmatpush1.msra.mxu0 %v1496
      %2364 = vmatprep.subr.mxu0 %v1486
      %2365 = vmatpush1.msra.mxu0 %v1485
      %2366 = vmatprep.subr.mxu0 %v1475
      %2367 = vmatpush1.msra.mxu0 %v1474
      %2368 = vmatprep.subr.mxu0 %v1464
      %2369 = vmatpush1.msra.mxu0 %v1463
      %2370 = vmatprep.subr.mxu0 %v1453
      %2371 = vmatpush1.msra.mxu0 %v1452
      %2372 = vmatprep.subr.mxu0 %v1442
      %2373 = vmatpush1.msra.mxu0 %v1441
      %2374 = vmatprep.subr.mxu0 %v1431
      %2375 = vmatpush1.msra.mxu0 %v1430
      %2376 = vmatprep.subr.mxu0 %v1420
      %2377 = vmatpush1.msra.mxu0 %v1419
      %2378 = vmatprep.subr.mxu0 %v1409
      %2379 = vmatpush1.msra.mxu0 %v1408
      %2380 = vmatprep.subr.mxu0 %v1398
      %2381 = vmatpush1.msra.mxu0 %v1397
      %2382 = vmatprep.subr.mxu0 %v1739
      %2383 = vmatpush2.msra.mxu0 %v1738
      %2384 = vmatprep.subr.mxu0 %v1728
      %2385 = vmatpush2.msra.mxu0 %v1727
      %2386 = vmatprep.subr.mxu0 %v1717
      %2387 = vmatpush2.msra.mxu0 %v1716
      %2388 = vmatprep.subr.mxu0 %v1706
      %2389 = vmatpush2.msra.mxu0 %v1705
      %2390 = vmatprep.subr.mxu0 %v1695
      %2391 = vmatpush2.msra.mxu0 %v1694
      %2392 = vmatprep.subr.mxu0 %v1684
      %2393 = vmatpush2.msra.mxu0 %v1683
      %2394 = vmatprep.subr.mxu0 %v1673
      %2395 = vmatpush2.msra.mxu0 %v1672
      %2396 = vmatprep.subr.mxu0 %v1662
      %2397 = vmatpush2.msra.mxu0 %v1661
      %2398 = vmatprep.subr.mxu0 %v1651
      %2399 = vmatpush2.msra.mxu0 %v1650
      %2400 = vmatprep.subr.mxu0 %v1640
      %2401 = vmatpush2.msra.mxu0 %v1639
      %2402 = vmatprep.subr.mxu0 %v1629
      %2403 = vmatpush2.msra.mxu0 %v1628
      %2404 = vmatprep.subr.mxu0 %v1618
      %2405 = vmatpush2.msra.mxu0 %v1617
      %2406 = vmatprep.subr.mxu0 %v1607
      %2407 = vmatpush2.msra.mxu0 %v1606
      %2408 = vmatprep.subr.mxu0 %v1596
      %2409 = vmatpush2.msra.mxu0 %v1595
      %2410 = vmatprep.subr.mxu0 %v1585
      %2411 = vmatpush2.msra.mxu0 %v1584
      %2412 = vmatprep.subr.mxu0 %v1574
      %2413 = vmatpush2.msra.mxu0 %v1573
      %2414 = vmatprep.mubr.f32.mxu0 %v773
      %2415 = vmatmul.mubr.f32.gmra.mxu0 %v772
      %v2416 = vpop.f32.mrf.mxu0
      %v2417 = vadd.f32 0.0, %v2416
      %v2418 = vpop.f32.mrf.mxu0
      %v2419 = vadd.f32 0.0, %v2418
      %2420 = vdwg.mxu0
      %2421 = vmatprep.subr.mxu0 0.0
      %2422 = vmatpush1.msra.mxu0 0.0
      %2423 = vmatprep.subr.mxu0 0.0
      %2424 = vmatpush1.msra.mxu0 0.0
      %2425 = vmatprep.subr.mxu0 0.0
      %2426 = vmatpush1.msra.mxu0 0.0
      %2427 = vmatprep.subr.mxu0 0.0
      %2428 = vmatpush1.msra.mxu0 0.0
      %2429 = vmatprep.subr.mxu0 %v1913
      %2430 = vmatpush1.msra.mxu0 %v1910
      %2431 = vmatprep.subr.mxu0 %v1860
      %2432 = vmatpush1.msra.mxu0 %v1859
      %2433 = vmatprep.subr.mxu0 %v1849
      %2434 = vmatpush1.msra.mxu0 %v1848
      %2435 = vmatprep.subr.mxu0 %v1838
      %2436 = vmatpush1.msra.mxu0 %v1837
      %2437 = vmatprep.subr.mxu0 %v1827
      %2438 = vmatpush1.msra.mxu0 %v1826
      %2439 = vmatprep.subr.mxu0 %v1816
      %2440 = vmatpush1.msra.mxu0 %v1815
      %2441 = vmatprep.subr.mxu0 %v1805
      %2442 = vmatpush1.msra.mxu0 %v1804
      %2443 = vmatprep.subr.mxu0 %v1794
      %2444 = vmatpush1.msra.mxu0 %v1793
      %2445 = vmatprep.subr.mxu0 %v1783
      %2446 = vmatpush1.msra.mxu0 %v1782
      %2447 = vmatprep.subr.mxu0 %v1772
      %2448 = vmatpush1.msra.mxu0 %v1771
      %2449 = vmatprep.subr.mxu0 %v1761
      %2450 = vmatpush1.msra.mxu0 %v1760
      %2451 = vmatprep.subr.mxu0 %v1750
      %2452 = vmatpush1.msra.mxu0 %v1749
      %2453 = vmatprep.subr.mxu0 0.0
      %2454 = vmatpush2.msra.mxu0 0.0
      %2455 = vmatprep.subr.mxu0 0.0
      %2456 = vmatpush2.msra.mxu0 0.0
      %2457 = vmatprep.subr.mxu0 0.0
      %2458 = vmatpush2.msra.mxu0 0.0
      %2459 = vmatprep.subr.mxu0 0.0
      %2460 = vmatpush2.msra.mxu0 0.0
      %2461 = vmatprep.subr.mxu0 0.0
      %2462 = vmatpush2.msra.mxu0 0.0
      %2463 = vmatprep.subr.mxu0 0.0
      %2464 = vmatpush2.msra.mxu0 0.0
      %2465 = vmatprep.subr.mxu0 0.0
      %2466 = vmatpush2.msra.mxu0 0.0
      %2467 = vmatprep.subr.mxu0 0.0
      %2468 = vmatpush2.msra.mxu0 0.0
      %2469 = vmatprep.subr.mxu0 0.0
      %2470 = vmatpush2.msra.mxu0 0.0
      %2471 = vmatprep.subr.mxu0 0.0
      %2472 = vmatpush2.msra.mxu0 0.0
      %2473 = vmatprep.subr.mxu0 0.0
      %2474 = vmatpush2.msra.mxu0 0.0
      %2475 = vmatprep.subr.mxu0 0.0
      %2476 = vmatpush2.msra.mxu0 0.0
      %2477 = vmatprep.subr.mxu0 0.0
      %2478 = vmatpush2.msra.mxu0 0.0
      %2479 = vmatprep.subr.mxu0 0.0
      %2480 = vmatpush2.msra.mxu0 0.0
      %2481 = vmatprep.subr.mxu0 0.0
      %2482 = vmatpush2.msra.mxu0 0.0
      %2483 = vmatprep.subr.mxu0 0.0
      %2484 = vmatpush2.msra.mxu0 0.0
      %2485 = vmatprep.mubr.f32.mxu0 0.0
      %2486 = vmatmul.mubr.f32.gmra.mxu0 %v1888
      %v2487 = vpop.f32.mrf.mxu0
      %v2488 = vadd.f32 %v2417, %v2487
      %v2489 = vpop.f32.mrf.mxu0
      %v2490 = vadd.f32 %v2419, %v2489
      %2491 = vdwg.mxu0
      %2492 = vmatprep.subr.mxu0 %v1565
      %2493 = vmatpush1.msra.mxu0 %v1564
      %2494 = vmatprep.subr.mxu0 %v1554
      %2495 = vmatpush1.msra.mxu0 %v1553
      %2496 = vmatprep.subr.mxu0 %v1543
      %2497 = vmatpush1.msra.mxu0 %v1542
      %2498 = vmatprep.subr.mxu0 %v1532
      %2499 = vmatpush1.msra.mxu0 %v1531
      %2500 = vmatprep.subr.mxu0 %v1521
      %2501 = vmatpush1.msra.mxu0 %v1520
      %2502 = vmatprep.subr.mxu0 %v1510
      %2503 = vmatpush1.msra.mxu0 %v1509
      %2504 = vmatprep.subr.mxu0 %v1499
      %2505 = vmatpush1.msra.mxu0 %v1498
      %2506 = vmatprep.subr.mxu0 %v1488
      %2507 = vmatpush1.msra.mxu0 %v1487
      %2508 = vmatprep.subr.mxu0 %v1477
      %2509 = vmatpush1.msra.mxu0 %v1476
      %2510 = vmatprep.subr.mxu0 %v1466
      %2511 = vmatpush1.msra.mxu0 %v1465
      %2512 = vmatprep.subr.mxu0 %v1455
      %2513 = vmatpush1.msra.mxu0 %v1454
      %2514 = vmatprep.subr.mxu0 %v1444
      %2515 = vmatpush1.msra.mxu0 %v1443
      %2516 = vmatprep.subr.mxu0 %v1433
      %2517 = vmatpush1.msra.mxu0 %v1432
      %2518 = vmatprep.subr.mxu0 %v1422
      %2519 = vmatpush1.msra.mxu0 %v1421
      %2520 = vmatprep.subr.mxu0 %v1411
      %2521 = vmatpush1.msra.mxu0 %v1410
      %2522 = vmatprep.subr.mxu0 %v1400
      %2523 = vmatpush1.msra.mxu0 %v1399
      %2524 = vmatprep.subr.mxu0 %v1741
      %2525 = vmatpush2.msra.mxu0 %v1740
      %2526 = vmatprep.subr.mxu0 %v1730
      %2527 = vmatpush2.msra.mxu0 %v1729
      %2528 = vmatprep.subr.mxu0 %v1719
      %2529 = vmatpush2.msra.mxu0 %v1718
      %2530 = vmatprep.subr.mxu0 %v1708
      %2531 = vmatpush2.msra.mxu0 %v1707
      %2532 = vmatprep.subr.mxu0 %v1697
      %2533 = vmatpush2.msra.mxu0 %v1696
      %2534 = vmatprep.subr.mxu0 %v1686
      %2535 = vmatpush2.msra.mxu0 %v1685
      %2536 = vmatprep.subr.mxu0 %v1675
      %2537 = vmatpush2.msra.mxu0 %v1674
      %2538 = vmatprep.subr.mxu0 %v1664
      %2539 = vmatpush2.msra.mxu0 %v1663
      %2540 = vmatprep.subr.mxu0 %v1653
      %2541 = vmatpush2.msra.mxu0 %v1652
      %2542 = vmatprep.subr.mxu0 %v1642
      %2543 = vmatpush2.msra.mxu0 %v1641
      %2544 = vmatprep.subr.mxu0 %v1631
      %2545 = vmatpush2.msra.mxu0 %v1630
      %2546 = vmatprep.subr.mxu0 %v1620
      %2547 = vmatpush2.msra.mxu0 %v1619
      %2548 = vmatprep.subr.mxu0 %v1609
      %2549 = vmatpush2.msra.mxu0 %v1608
      %2550 = vmatprep.subr.mxu0 %v1598
      %2551 = vmatpush2.msra.mxu0 %v1597
      %2552 = vmatprep.subr.mxu0 %v1587
      %2553 = vmatpush2.msra.mxu0 %v1586
      %2554 = vmatprep.subr.mxu0 %v1576
      %2555 = vmatpush2.msra.mxu0 %v1575
      %2556 = vmatprep.mubr.f32.mxu0 %v773
      %2557 = vmatmul.mubr.f32.gmra.mxu0 %v772
      %v2558 = vpop.f32.mrf.mxu0
      %v2559 = vadd.f32 0.0, %v2558
      %v2560 = vpop.f32.mrf.mxu0
      %v2561 = vadd.f32 0.0, %v2560
      %2562 = vdwg.mxu0
      %2563 = vmatprep.subr.mxu0 0.0
      %2564 = vmatpush1.msra.mxu0 0.0
      %2565 = vmatprep.subr.mxu0 0.0
      %2566 = vmatpush1.msra.mxu0 0.0
      %2567 = vmatprep.subr.mxu0 0.0
      %2568 = vmatpush1.msra.mxu0 0.0
      %2569 = vmatprep.subr.mxu0 0.0
      %2570 = vmatpush1.msra.mxu0 0.0
      %2571 = vmatprep.subr.mxu0 %v1919
      %2572 = vmatpush1.msra.mxu0 %v1916
      %2573 = vmatprep.subr.mxu0 %v1862
      %2574 = vmatpush1.msra.mxu0 %v1861
      %2575 = vmatprep.subr.mxu0 %v1851
      %2576 = vmatpush1.msra.mxu0 %v1850
      %2577 = vmatprep.subr.mxu0 %v1840
      %2578 = vmatpush1.msra.mxu0 %v1839
      %2579 = vmatprep.subr.mxu0 %v1829
      %2580 = vmatpush1.msra.mxu0 %v1828
      %2581 = vmatprep.subr.mxu0 %v1818
      %2582 = vmatpush1.msra.mxu0 %v1817
      %2583 = vmatprep.subr.mxu0 %v1807
      %2584 = vmatpush1.msra.mxu0 %v1806
      %2585 = vmatprep.subr.mxu0 %v1796
      %2586 = vmatpush1.msra.mxu0 %v1795
      %2587 = vmatprep.subr.mxu0 %v1785
      %2588 = vmatpush1.msra.mxu0 %v1784
      %2589 = vmatprep.subr.mxu0 %v1774
      %2590 = vmatpush1.msra.mxu0 %v1773
      %2591 = vmatprep.subr.mxu0 %v1763
      %2592 = vmatpush1.msra.mxu0 %v1762
      %2593 = vmatprep.subr.mxu0 %v1752
      %2594 = vmatpush1.msra.mxu0 %v1751
      %2595 = vmatprep.subr.mxu0 0.0
      %2596 = vmatpush2.msra.mxu0 0.0
      %2597 = vmatprep.subr.mxu0 0.0
      %2598 = vmatpush2.msra.mxu0 0.0
      %2599 = vmatprep.subr.mxu0 0.0
      %2600 = vmatpush2.msra.mxu0 0.0
      %2601 = vmatprep.subr.mxu0 0.0
      %2602 = vmatpush2.msra.mxu0 0.0
      %2603 = vmatprep.subr.mxu0 0.0
      %2604 = vmatpush2.msra.mxu0 0.0
      %2605 = vmatprep.subr.mxu0 0.0
      %2606 = vmatpush2.msra.mxu0 0.0
      %2607 = vmatprep.subr.mxu0 0.0
      %2608 = vmatpush2.msra.mxu0 0.0
      %2609 = vmatprep.subr.mxu0 0.0
      %2610 = vmatpush2.msra.mxu0 0.0
      %2611 = vmatprep.subr.mxu0 0.0
      %2612 = vmatpush2.msra.mxu0 0.0
      %2613 = vmatprep.subr.mxu0 0.0
      %2614 = vmatpush2.msra.mxu0 0.0
      %2615 = vmatprep.subr.mxu0 0.0
      %2616 = vmatpush2.msra.mxu0 0.0
      %2617 = vmatprep.subr.mxu0 0.0
      %2618 = vmatpush2.msra.mxu0 0.0
      %2619 = vmatprep.subr.mxu0 0.0
      %2620 = vmatpush2.msra.mxu0 0.0
      %2621 = vmatprep.subr.mxu0 0.0
      %2622 = vmatpush2.msra.mxu0 0.0
      %2623 = vmatprep.subr.mxu0 0.0
      %2624 = vmatpush2.msra.mxu0 0.0
      %2625 = vmatprep.subr.mxu0 0.0
      %2626 = vmatpush2.msra.mxu0 0.0
      %2627 = vmatprep.mubr.f32.mxu0 0.0
      %2628 = vmatmul.mubr.f32.gmra.mxu0 %v1888
      %v2629 = vpop.f32.mrf.mxu0
      %v2630 = vadd.f32 %v2559, %v2629
      %v2631 = vpop.f32.mrf.mxu0
      %v2632 = vadd.f32 %v2561, %v2631
      %2633 = vdwg.mxu0
      %2634 = vmatprep.subr.mxu0 0.0
      %2635 = vmatpush1.msra.mxu0 %v1566
      %2636 = vmatprep.subr.mxu0 0.0
      %2637 = vmatpush1.msra.mxu0 %v1555
      %2638 = vmatprep.subr.mxu0 0.0
      %2639 = vmatpush1.msra.mxu0 %v1544
      %2640 = vmatprep.subr.mxu0 0.0
      %2641 = vmatpush1.msra.mxu0 %v1533
      %2642 = vmatprep.subr.mxu0 0.0
      %2643 = vmatpush1.msra.mxu0 %v1522
      %2644 = vmatprep.subr.mxu0 0.0
      %2645 = vmatpush1.msra.mxu0 %v1511
      %2646 = vmatprep.subr.mxu0 0.0
      %2647 = vmatpush1.msra.mxu0 %v1500
      %2648 = vmatprep.subr.mxu0 0.0
      %2649 = vmatpush1.msra.mxu0 %v1489
      %2650 = vmatprep.subr.mxu0 0.0
      %2651 = vmatpush1.msra.mxu0 %v1478
      %2652 = vmatprep.subr.mxu0 0.0
      %2653 = vmatpush1.msra.mxu0 %v1467
      %2654 = vmatprep.subr.mxu0 0.0
      %2655 = vmatpush1.msra.mxu0 %v1456
      %2656 = vmatprep.subr.mxu0 0.0
      %2657 = vmatpush1.msra.mxu0 %v1445
      %2658 = vmatprep.subr.mxu0 0.0
      %2659 = vmatpush1.msra.mxu0 %v1434
      %2660 = vmatprep.subr.mxu0 0.0
      %2661 = vmatpush1.msra.mxu0 %v1423
      %2662 = vmatprep.subr.mxu0 0.0
      %2663 = vmatpush1.msra.mxu0 %v1412
      %2664 = vmatprep.subr.mxu0 0.0
      %2665 = vmatpush1.msra.mxu0 %v1401
      %2666 = vmatprep.subr.mxu0 0.0
      %2667 = vmatpush2.msra.mxu0 %v1742
      %2668 = vmatprep.subr.mxu0 0.0
      %2669 = vmatpush2.msra.mxu0 %v1731
      %2670 = vmatprep.subr.mxu0 0.0
      %2671 = vmatpush2.msra.mxu0 %v1720
      %2672 = vmatprep.subr.mxu0 0.0
      %2673 = vmatpush2.msra.mxu0 %v1709
      %2674 = vmatprep.subr.mxu0 0.0
      %2675 = vmatpush2.msra.mxu0 %v1698
      %2676 = vmatprep.subr.mxu0 0.0
      %2677 = vmatpush2.msra.mxu0 %v1687
      %2678 = vmatprep.subr.mxu0 0.0
      %2679 = vmatpush2.msra.mxu0 %v1676
      %2680 = vmatprep.subr.mxu0 0.0
      %2681 = vmatpush2.msra.mxu0 %v1665
      %2682 = vmatprep.subr.mxu0 0.0
      %2683 = vmatpush2.msra.mxu0 %v1654
      %2684 = vmatprep.subr.mxu0 0.0
      %2685 = vmatpush2.msra.mxu0 %v1643
      %2686 = vmatprep.subr.mxu0 0.0
      %2687 = vmatpush2.msra.mxu0 %v1632
      %2688 = vmatprep.subr.mxu0 0.0
      %2689 = vmatpush2.msra.mxu0 %v1621
      %2690 = vmatprep.subr.mxu0 0.0
      %2691 = vmatpush2.msra.mxu0 %v1610
      %2692 = vmatprep.subr.mxu0 0.0
      %2693 = vmatpush2.msra.mxu0 %v1599
      %2694 = vmatprep.subr.mxu0 0.0
      %2695 = vmatpush2.msra.mxu0 %v1588
      %2696 = vmatprep.subr.mxu0 0.0
      %2697 = vmatpush2.msra.mxu0 %v1577
      %2698 = vmatprep.mubr.f32.mxu0 %v773
      %2699 = vmatmul.mubr.f32.gmra.mxu0 %v772
      %v2700 = vpop.f32.mrf.mxu0
      %v2701 = vadd.f32 0.0, %v2700
      %v2702 = vpop.f32.mrf.mxu0
      %2703 = vdwg.mxu0
      %2704 = vmatprep.subr.mxu0 0.0
      %2705 = vmatpush1.msra.mxu0 0.0
      %2706 = vmatprep.subr.mxu0 0.0
      %2707 = vmatpush1.msra.mxu0 0.0
      %2708 = vmatprep.subr.mxu0 0.0
      %2709 = vmatpush1.msra.mxu0 0.0
      %2710 = vmatprep.subr.mxu0 0.0
      %2711 = vmatpush1.msra.mxu0 0.0
      %2712 = vmatprep.subr.mxu0 0.0
      %2713 = vmatpush1.msra.mxu0 %v1922
      %2714 = vmatprep.subr.mxu0 0.0
      %2715 = vmatpush1.msra.mxu0 %v1863
      %2716 = vmatprep.subr.mxu0 0.0
      %2717 = vmatpush1.msra.mxu0 %v1852
      %2718 = vmatprep.subr.mxu0 0.0
      %2719 = vmatpush1.msra.mxu0 %v1841
      %2720 = vmatprep.subr.mxu0 0.0
      %2721 = vmatpush1.msra.mxu0 %v1830
      %2722 = vmatprep.subr.mxu0 0.0
      %2723 = vmatpush1.msra.mxu0 %v1819
      %2724 = vmatprep.subr.mxu0 0.0
      %2725 = vmatpush1.msra.mxu0 %v1808
      %2726 = vmatprep.subr.mxu0 0.0
      %2727 = vmatpush1.msra.mxu0 %v1797
      %2728 = vmatprep.subr.mxu0 0.0
      %2729 = vmatpush1.msra.mxu0 %v1786
      %2730 = vmatprep.subr.mxu0 0.0
      %2731 = vmatpush1.msra.mxu0 %v1775
      %2732 = vmatprep.subr.mxu0 0.0
      %2733 = vmatpush1.msra.mxu0 %v1764
      %2734 = vmatprep.subr.mxu0 0.0
      %2735 = vmatpush1.msra.mxu0 %v1753
      %2736 = vmatprep.subr.mxu0 0.0
      %2737 = vmatpush2.msra.mxu0 0.0
      %2738 = vmatprep.subr.mxu0 0.0
      %2739 = vmatpush2.msra.mxu0 0.0
      %2740 = vmatprep.subr.mxu0 0.0
      %2741 = vmatpush2.msra.mxu0 0.0
      %2742 = vmatprep.subr.mxu0 0.0
      %2743 = vmatpush2.msra.mxu0 0.0
      %2744 = vmatprep.subr.mxu0 0.0
      %2745 = vmatpush2.msra.mxu0 0.0
      %2746 = vmatprep.subr.mxu0 0.0
      %2747 = vmatpush2.msra.mxu0 0.0
      %2748 = vmatprep.subr.mxu0 0.0
      %2749 = vmatpush2.msra.mxu0 0.0
      %2750 = vmatprep.subr.mxu0 0.0
      %2751 = vmatpush2.msra.mxu0 0.0
      %2752 = vmatprep.subr.mxu0 0.0
      %2753 = vmatpush2.msra.mxu0 0.0
      %2754 = vmatprep.subr.mxu0 0.0
      %2755 = vmatpush2.msra.mxu0 0.0
      %2756 = vmatprep.subr.mxu0 0.0
      %2757 = vmatpush2.msra.mxu0 0.0
      %2758 = vmatprep.subr.mxu0 0.0
      %2759 = vmatpush2.msra.mxu0 0.0
      %2760 = vmatprep.subr.mxu0 0.0
      %2761 = vmatpush2.msra.mxu0 0.0
      %2762 = vmatprep.subr.mxu0 0.0
      %2763 = vmatpush2.msra.mxu0 0.0
      %2764 = vmatprep.subr.mxu0 0.0
      %2765 = vmatpush2.msra.mxu0 0.0
      %2766 = vmatprep.subr.mxu0 0.0
      %2767 = vmatpush2.msra.mxu0 0.0
      %2768 = vmatprep.mubr.f32.mxu0 0.0
      %2769 = vmatmul.mubr.f32.gmra.mxu0 %v1888
      %v2770 = vpop.f32.mrf.mxu0
      %v2771 = vadd.f32 %v2701, %v2770
      %v2772 = vpop.f32.mrf.mxu0
      %2773 = vdwg.mxu0
      %v2774 = vadd.f32 %v1875, %v2062
      %v2775 = vadd.f32 %v1876, %v2064
      %v2776 = vadd.f32 %v1877, %v2204
      %v2777 = vadd.f32 %v1878, %v2206
      %v2778 = vadd.f32 %v1879, %v2346
      %v2779 = vadd.f32 %v1880, %v2348
      %v2780 = vadd.f32 %v1881, %v2488
      %v2781 = vadd.f32 %v1882, %v2490
      %v2782 = vadd.f32 %v1883, %v2630
      %v2783 = vadd.f32 %v1884, %v2632
      %v2784 = vadd.f32 %v1885, %v2771
      %2785 = vst [vmem:[#allocation2] sm:$0xff] %v2774
      %2786 = vst [vmem:[#allocation2 + $0x8] sm:$0xff] %v2775
      %2787 = vst [vmem:[#allocation2 + $0x10] sm:$0xff] %v2776
      %2788 = vst [vmem:[#allocation2 + $0x18] sm:$0xff] %v2777
      %2789 = vst [vmem:[#allocation2 + $0x20] sm:$0xff] %v2778
      %2790 = vst [vmem:[#allocation2 + $0x28] sm:$0xff] %v2779
      %2791 = vst [vmem:[#allocation2 + $0x30] sm:$0xff] %v2780
      %2792 = vst [vmem:[#allocation2 + $0x38] sm:$0xff] %v2781
      %2793 = vst [vmem:[#allocation2 + $0x40] sm:$0xff] %v2782
      %2794 = vst [vmem:[#allocation2 + $0x48] sm:$0xff] %v2783
      %vm2795 = vcmask 162816
      %2796 = vst.msk [vmem:[#allocation2 + $0x50] sm:$0xff] %vm2795, %v2784
      %p2797 = scmp.eq.s32.totalorder %s21, 3
      // Predicated region
      $region65: #{tpu_custom_call.1} parent=59 // pred_check
        %p2798 = pneg %p2797
      $region66: #{tpu_custom_call.1} parent=59 // pred_check_branch
        %2800 = sbr.rel (%p2798) target = $region68
      $region67: #{tpu_custom_call.1} parent=59 // pred_region
        %v2801 = vld [vmem:[#allocation2] sm:$0xff]
        %v2802 = vld [vmem:[#allocation2 + $0x8] sm:$0xff]
        %v2803 = vld [vmem:[#allocation2 + $0x10] sm:$0xff]
        %v2804 = vld [vmem:[#allocation2 + $0x18] sm:$0xff]
        %v2805 = vld [vmem:[#allocation2 + $0x20] sm:$0xff]
        %v2806 = vld [vmem:[#allocation2 + $0x28] sm:$0xff]
        %v2807 = vld [vmem:[#allocation2 + $0x30] sm:$0xff]
        %v2808 = vld [vmem:[#allocation2 + $0x38] sm:$0xff]
        %v2809 = vld [vmem:[#allocation2 + $0x40] sm:$0xff]
        %v2810 = vld [vmem:[#allocation2 + $0x48] sm:$0xff]
        %v2811 = vld [vmem:[#allocation2 + $0x50] sm:$0xff]
        %v2812 = vld [vmem:[%s6] sm:$0xff]
        %v2813 = vld [vmem:[%s6 + $0x8] sm:$0x7]
        %v2816 = vlaneseq
        %v2817 = vshrl.u32 %v2816, 7
        %v2818 = vsub.s32 0, %v2817
        %v2819 = vrot.slane %v2812, %v2818
        %v2820 = vlaneseq
        %v2821 = vshrl.u32 %v2820, 7
        %v2822 = vsub.s32 1, %v2821
        %v2823 = vrot.slane %v2812, %v2822
        %v2824 = vlaneseq
        %v2825 = vshrl.u32 %v2824, 7
        %v2826 = vsub.s32 2, %v2825
        %v2827 = vrot.slane %v2812, %v2826
        %v2828 = vlaneseq
        %v2829 = vshrl.u32 %v2828, 7
        %v2830 = vsub.s32 3, %v2829
        %v2831 = vrot.slane %v2812, %v2830
        %v2832 = vlaneseq
        %v2833 = vshrl.u32 %v2832, 7
        %v2834 = vsub.s32 4, %v2833
        %v2835 = vrot.slane %v2812, %v2834
        %v2836 = vlaneseq
        %v2837 = vshrl.u32 %v2836, 7
        %v2838 = vsub.s32 5, %v2837
        %v2839 = vrot.slane %v2812, %v2838
        %v2840 = vlaneseq
        %v2841 = vshrl.u32 %v2840, 7
        %v2842 = vsub.s32 6, %v2841
        %v2843 = vrot.slane %v2812, %v2842
        %v2844 = vlaneseq
        %v2845 = vshrl.u32 %v2844, 7
        %v2846 = vsub.s32 7, %v2845
        %v2847 = vrot.slane %v2812, %v2846
        %v2848 = vlaneseq
        %v2849 = vshrl.u32 %v2848, 7
        %v2850 = vsub.s32 0, %v2849
        %v2851 = vrot.slane %v2813, %v2850
        %v2852 = vlaneseq
        %v2853 = vshrl.u32 %v2852, 7
        %v2854 = vsub.s32 1, %v2853
        %v2855 = vrot.slane %v2813, %v2854
        %v2856 = vlaneseq
        %v2857 = vshrl.u32 %v2856, 7
        %v2858 = vsub.s32 2, %v2857
        %v2859 = vrot.slane %v2813, %v2858
        %v2871 = vmul.f32 %v2801, %v2819
        %v2872 = vmul.f32 %v2802, %v2823
        %v2873 = vmul.f32 %v2803, %v2827
        %v2874 = vmul.f32 %v2804, %v2831
        %v2875 = vmul.f32 %v2805, %v2835
        %v2876 = vmul.f32 %v2806, %v2839
        %v2877 = vmul.f32 %v2807, %v2843
        %v2878 = vmul.f32 %v2808, %v2847
        %v2879 = vmul.f32 %v2809, %v2851
        %v2880 = vmul.f32 %v2810, %v2855
        %v2881 = vmul.f32 %v2811, %v2859
        %v2882 = vld [vmem:[%s7] sm:$0xff]
        %v2883 = vld [vmem:[%s7 + $0x8] sm:$0x7]
        %v2886 = vlaneseq
        %v2887 = vshrl.u32 %v2886, 7
        %v2888 = vsub.s32 0, %v2887
        %v2889 = vrot.slane %v2882, %v2888
        %v2890 = vlaneseq
        %v2891 = vshrl.u32 %v2890, 7
        %v2892 = vsub.s32 1, %v2891
        %v2893 = vrot.slane %v2882, %v2892
        %v2894 = vlaneseq
        %v2895 = vshrl.u32 %v2894, 7
        %v2896 = vsub.s32 2, %v2895
        %v2897 = vrot.slane %v2882, %v2896
        %v2898 = vlaneseq
        %v2899 = vshrl.u32 %v2898, 7
        %v2900 = vsub.s32 3, %v2899
        %v2901 = vrot.slane %v2882, %v2900
        %v2902 = vlaneseq
        %v2903 = vshrl.u32 %v2902, 7
        %v2904 = vsub.s32 4, %v2903
        %v2905 = vrot.slane %v2882, %v2904
        %v2906 = vlaneseq
        %v2907 = vshrl.u32 %v2906, 7
        %v2908 = vsub.s32 5, %v2907
        %v2909 = vrot.slane %v2882, %v2908
        %v2910 = vlaneseq
        %v2911 = vshrl.u32 %v2910, 7
        %v2912 = vsub.s32 6, %v2911
        %v2913 = vrot.slane %v2882, %v2912
        %v2914 = vlaneseq
        %v2915 = vshrl.u32 %v2914, 7
        %v2916 = vsub.s32 7, %v2915
        %v2917 = vrot.slane %v2882, %v2916
        %v2918 = vlaneseq
        %v2919 = vshrl.u32 %v2918, 7
        %v2920 = vsub.s32 0, %v2919
        %v2921 = vrot.slane %v2883, %v2920
        %v2922 = vlaneseq
        %v2923 = vshrl.u32 %v2922, 7
        %v2924 = vsub.s32 1, %v2923
        %v2925 = vrot.slane %v2883, %v2924
        %v2926 = vlaneseq
        %v2927 = vshrl.u32 %v2926, 7
        %v2928 = vsub.s32 2, %v2927
        %v2929 = vrot.slane %v2883, %v2928
        %v2941 = vadd.f32 %v2871, %v2889
        %v2942 = vadd.f32 %v2872, %v2893
        %v2943 = vadd.f32 %v2873, %v2897
        %v2944 = vadd.f32 %v2874, %v2901
        %v2945 = vadd.f32 %v2875, %v2905
        %v2946 = vadd.f32 %v2876, %v2909
        %v2947 = vadd.f32 %v2877, %v2913
        %v2948 = vadd.f32 %v2878, %v2917
        %v2949 = vadd.f32 %v2879, %v2921
        %v2950 = vadd.f32 %v2880, %v2925
        %v2951 = vadd.f32 %v2881, %v2929
        %v2952 = vmin.f32 %v2941, 20.0
        %v2953 = vmin.f32 %v2942, 20.0
        %v2954 = vmin.f32 %v2943, 20.0
        %v2955 = vmin.f32 %v2944, 20.0
        %v2956 = vmin.f32 %v2945, 20.0
        %v2957 = vmin.f32 %v2946, 20.0
        %v2958 = vmin.f32 %v2947, 20.0
        %v2959 = vmin.f32 %v2948, 20.0
        %v2960 = vmin.f32 %v2949, 20.0
        %v2961 = vmin.f32 %v2950, 20.0
        %v2962 = vmin.f32 %v2951, 20.0
        %v2963 = vmul.f32 %v2952, 1.442695
        %v2964 = vpow.pop %v2963
        %v2965 = vmul.f32 %v2953, 1.442695
        %v2966 = vpow.pop %v2965
        %v2967 = vmul.f32 %v2954, 1.442695
        %v2968 = vpow.pop %v2967
        %v2969 = vmul.f32 %v2955, 1.442695
        %v2970 = vpow.pop %v2969
        %v2971 = vmul.f32 %v2956, 1.442695
        %v2972 = vpow.pop %v2971
        %v2973 = vmul.f32 %v2957, 1.442695
        %v2974 = vpow.pop %v2973
        %v2975 = vmul.f32 %v2958, 1.442695
        %v2976 = vpow.pop %v2975
        %v2977 = vmul.f32 %v2959, 1.442695
        %v2978 = vpow.pop %v2977
        %v2979 = vmul.f32 %v2960, 1.442695
        %v2980 = vpow.pop %v2979
        %v2981 = vmul.f32 %v2961, 1.442695
        %v2982 = vpow.pop %v2981
        %v2983 = vmul.f32 %v2962, 1.442695
        %v2984 = vpow.pop %v2983
        %v2985 = vadd.f32 %v2964, 2.0
        %v2986 = vadd.f32 %v2966, 2.0
        %v2987 = vadd.f32 %v2968, 2.0
        %v2988 = vadd.f32 %v2970, 2.0
        %v2989 = vadd.f32 %v2972, 2.0
        %v2990 = vadd.f32 %v2974, 2.0
        %v2991 = vadd.f32 %v2976, 2.0
        %v2992 = vadd.f32 %v2978, 2.0
        %v2993 = vadd.f32 %v2980, 2.0
        %v2994 = vadd.f32 %v2982, 2.0
        %v2995 = vadd.f32 %v2984, 2.0
        %v2996 = vmul.f32 %v2964, %v2985
        %v2997 = vmul.f32 %v2966, %v2986
        %v2998 = vmul.f32 %v2968, %v2987
        %v2999 = vmul.f32 %v2970, %v2988
        %v3000 = vmul.f32 %v2972, %v2989
        %v3001 = vmul.f32 %v2974, %v2990
        %v3002 = vmul.f32 %v2976, %v2991
        %v3003 = vmul.f32 %v2978, %v2992
        %v3004 = vmul.f32 %v2980, %v2993
        %v3005 = vmul.f32 %v2982, %v2994
        %v3006 = vmul.f32 %v2984, %v2995
        %v3007 = vmul.f32 %v2941, %v2996
        %v3008 = vmul.f32 %v2942, %v2997
        %v3009 = vmul.f32 %v2943, %v2998
        %v3010 = vmul.f32 %v2944, %v2999
        %v3011 = vmul.f32 %v2945, %v3000
        %v3012 = vmul.f32 %v2946, %v3001
        %v3013 = vmul.f32 %v2947, %v3002
        %v3014 = vmul.f32 %v2948, %v3003
        %v3015 = vmul.f32 %v2949, %v3004
        %v3016 = vmul.f32 %v2950, %v3005
        %v3017 = vmul.f32 %v2951, %v3006
        %v3018 = vadd.f32 %v2996, 2.0
        %v3019 = vadd.f32 %v2997, 2.0
        %v3020 = vadd.f32 %v2998, 2.0
        %v3021 = vadd.f32 %v2999, 2.0
        %v3022 = vadd.f32 %v3000, 2.0
        %v3023 = vadd.f32 %v3001, 2.0
        %v3024 = vadd.f32 %v3002, 2.0
        %v3025 = vadd.f32 %v3003, 2.0
        %v3026 = vadd.f32 %v3004, 2.0
        %v3027 = vadd.f32 %v3005, 2.0
        %v3028 = vadd.f32 %v3006, 2.0
        %v3029 = vrcp.pop %v3018
        %v3030 = vrcp.pop %v3019
        %v3031 = vrcp.pop %v3020
        %v3032 = vrcp.pop %v3021
        %v3033 = vrcp.pop %v3022
        %v3034 = vrcp.pop %v3023
        %v3035 = vrcp.pop %v3024
        %v3036 = vrcp.pop %v3025
        %v3037 = vrcp.pop %v3026
        %v3038 = vrcp.pop %v3027
        %v3039 = vrcp.pop %v3028
        %v3040 = vmul.f32 %v3007, %v3029
        %v3041 = vmul.f32 %v3008, %v3030
        %v3042 = vmul.f32 %v3009, %v3031
        %v3043 = vmul.f32 %v3010, %v3032
        %v3044 = vmul.f32 %v3011, %v3033
        %v3045 = vmul.f32 %v3012, %v3034
        %v3046 = vmul.f32 %v3013, %v3035
        %v3047 = vmul.f32 %v3014, %v3036
        %v3048 = vmul.f32 %v3015, %v3037
        %v3049 = vmul.f32 %v3016, %v3038
        %v3050 = vmul.f32 %v3017, %v3039
        %v3051 = vld [vmem:[%s8] sm:$0xff]
        %v3052 = vld [vmem:[%s8 + $0x8] sm:$0xff]
        %v3053 = vld [vmem:[%s8 + $0x10] sm:$0xff]
        %v3054 = vld [vmem:[%s8 + $0x18] sm:$0xff]
        %v3055 = vld [vmem:[%s8 + $0x20] sm:$0xff]
        %v3056 = vld [vmem:[%s8 + $0x28] sm:$0xff]
        %v3057 = vld [vmem:[%s8 + $0x30] sm:$0xff]
        %v3058 = vld [vmem:[%s8 + $0x38] sm:$0xff]
        %v3059 = vld [vmem:[%s8 + $0x40] sm:$0xff]
        %v3060 = vld [vmem:[%s8 + $0x48] sm:$0xff]
        %v3061 = vld [vmem:[%s8 + $0x50] sm:$0xff]
        %v3062 = vld [vmem:[%s8 + $0x58] sm:$0xff]
        %v3063 = vld [vmem:[%s8 + $0x60] sm:$0xff]
        %v3064 = vld [vmem:[%s8 + $0x68] sm:$0xff]
        %v3065 = vld [vmem:[%s8 + $0x70] sm:$0xff]
        %v3066 = vld [vmem:[%s8 + $0x78] sm:$0xff]
        %v3067 = vld [vmem:[%s8 + $0x80] sm:$0xff]
        %v3068 = vld [vmem:[%s8 + $0x88] sm:$0xff]
        %v3069 = vld [vmem:[%s8 + $0x90] sm:$0xff]
        %v3070 = vld [vmem:[%s8 + $0x98] sm:$0xff]
        %v3071 = vld [vmem:[%s8 + $0xa0] sm:$0xff]
        %v3072 = vld [vmem:[%s8 + $0xa8] sm:$0xff]
        %v3073 = vld [vmem:[%s8 + $0xb0] sm:$0xff]
        %v3074 = vld [vmem:[%s8 + $0xb8] sm:$0xff]
        %v3075 = vld [vmem:[%s8 + $0xc0] sm:$0xff]
        %v3076 = vld [vmem:[%s8 + $0xc8] sm:$0xff]
        %v3077 = vld [vmem:[%s8 + $0xd0] sm:$0xff]
        %v3078 = vld [vmem:[%s8 + $0xd8] sm:$0xff]
        %v3079 = vld [vmem:[%s8 + $0xe0] sm:$0xff]
        %v3080 = vld [vmem:[%s8 + $0xe8] sm:$0xff]
        %v3081 = vld [vmem:[%s8 + $0xf0] sm:$0xff]
        %v3082 = vld [vmem:[%s8 + $0xf8] sm:$0xff]
        %v3083 = vld [vmem:[%s8 + $0x100] sm:$0xff]
        %v3084 = vld [vmem:[%s8 + $0x108] sm:$0xff]
        %v3085 = vld [vmem:[%s8 + $0x110] sm:$0xff]
        %v3086 = vld [vmem:[%s8 + $0x118] sm:$0xff]
        %v3087 = vld [vmem:[%s8 + $0x120] sm:$0xff]
        %v3088 = vld [vmem:[%s8 + $0x128] sm:$0xff]
        %v3089 = vld [vmem:[%s8 + $0x130] sm:$0xff]
        %v3090 = vld [vmem:[%s8 + $0x138] sm:$0xff]
        %v3091 = vld [vmem:[%s8 + $0x140] sm:$0xff]
        %v3092 = vld [vmem:[%s8 + $0x148] sm:$0xff]
        %v3093 = vld [vmem:[%s8 + $0x150] sm:$0xff]
        %v3094 = vld [vmem:[%s8 + $0x158] sm:$0xff]
        %v3095 = vld [vmem:[%s8 + $0x160] sm:$0xff]
        %v3096 = vld [vmem:[%s8 + $0x168] sm:$0xff]
        %v3097 = vld [vmem:[%s8 + $0x170] sm:$0xff]
        %v3098 = vld [vmem:[%s8 + $0x178] sm:$0xff]
        %v3099 = vld [vmem:[%s8 + $0x180] sm:$0xff]
        %v3100 = vld [vmem:[%s8 + $0x188] sm:$0xff]
        %v3101 = vld [vmem:[%s8 + $0x190] sm:$0xff]
        %v3102 = vld [vmem:[%s8 + $0x198] sm:$0xff]
        %v3103 = vld [vmem:[%s8 + $0x1a0] sm:$0xff]
        %v3104 = vld [vmem:[%s8 + $0x1a8] sm:$0xff]
        %v3105 = vld [vmem:[%s8 + $0x1b0] sm:$0xff]
        %v3106 = vld [vmem:[%s8 + $0x1b8] sm:$0xff]
        %v3107 = vld [vmem:[%s8 + $0x1c0] sm:$0xff]
        %v3108 = vld [vmem:[%s8 + $0x1c8] sm:$0xff]
        %v3109 = vld [vmem:[%s8 + $0x1d0] sm:$0xff]
        %v3110 = vld [vmem:[%s8 + $0x1d8] sm:$0xff]
        %v3111 = vld [vmem:[%s8 + $0x1e0] sm:$0xff]
        %v3112 = vld [vmem:[%s8 + $0x1e8] sm:$0xff]
        %v3113 = vld [vmem:[%s8 + $0x1f0] sm:$0xff]
        %v3114 = vld [vmem:[%s8 + $0x1f8] sm:$0xff]
        %v3115 = vld [vmem:[%s8 + $0x200] sm:$0xff]
        %v3116 = vld [vmem:[%s8 + $0x208] sm:$0xff]
        %v3117 = vld [vmem:[%s8 + $0x210] sm:$0xff]
        %v3118 = vld [vmem:[%s8 + $0x218] sm:$0xff]
        %v3119 = vld [vmem:[%s8 + $0x220] sm:$0xff]
        %v3120 = vld [vmem:[%s8 + $0x228] sm:$0xff]
        %v3121 = vld [vmem:[%s8 + $0x230] sm:$0xff]
        %v3122 = vld [vmem:[%s8 + $0x238] sm:$0xff]
        %v3123 = vld [vmem:[%s8 + $0x240] sm:$0xff]
        %v3124 = vld [vmem:[%s8 + $0x248] sm:$0xff]
        %v3125 = vld [vmem:[%s8 + $0x250] sm:$0xff]
        %v3126 = vld [vmem:[%s8 + $0x258] sm:$0xff]
        %v3127 = vld [vmem:[%s8 + $0x260] sm:$0xff]
        %v3128 = vld [vmem:[%s8 + $0x268] sm:$0xff]
        %v3129 = vld [vmem:[%s8 + $0x270] sm:$0xff]
        %v3130 = vld [vmem:[%s8 + $0x278] sm:$0xff]
        %v3131 = vld [vmem:[%s8 + $0x280] sm:$0xff]
        %v3132 = vld [vmem:[%s8 + $0x288] sm:$0xff]
        %v3133 = vld [vmem:[%s8 + $0x290] sm:$0xff]
        %v3134 = vld [vmem:[%s8 + $0x298] sm:$0xff]
        %v3135 = vld [vmem:[%s8 + $0x2a0] sm:$0xff]
        %v3136 = vld [vmem:[%s8 + $0x2a8] sm:$0xff]
        %v3137 = vld [vmem:[%s8 + $0x2b0] sm:$0xff]
        %v3138 = vld [vmem:[%s8 + $0x2b8] sm:$0xff]
        %v3139 = vld [vmem:[%s8 + $0x2c0] sm:$0xff]
        %v3140 = vld [vmem:[%s8 + $0x2c8] sm:$0xff]
        %v3141 = vld [vmem:[%s8 + $0x2d0] sm:$0xff]
        %v3142 = vld [vmem:[%s8 + $0x2d8] sm:$0xff]
        %v3143 = vld [vmem:[%s8 + $0x2e0] sm:$0xff]
        %v3144 = vld [vmem:[%s8 + $0x2e8] sm:$0xff]
        %v3145 = vld [vmem:[%s8 + $0x2f0] sm:$0xff]
        %v3146 = vld [vmem:[%s8 + $0x2f8] sm:$0xff]
        %v3147 = vld [vmem:[%s8 + $0x300] sm:$0xff]
        %v3148 = vld [vmem:[%s8 + $0x308] sm:$0xff]
        %v3149 = vld [vmem:[%s8 + $0x310] sm:$0xff]
        %v3150 = vld [vmem:[%s8 + $0x318] sm:$0xff]
        %v3151 = vld [vmem:[%s8 + $0x320] sm:$0xff]
        %v3152 = vld [vmem:[%s8 + $0x328] sm:$0xff]
        %v3153 = vld [vmem:[%s8 + $0x330] sm:$0xff]
        %v3154 = vld [vmem:[%s8 + $0x338] sm:$0xff]
        %v3155 = vld [vmem:[%s8 + $0x340] sm:$0xff]
        %v3156 = vld [vmem:[%s8 + $0x348] sm:$0xff]
        %v3157 = vld [vmem:[%s8 + $0x350] sm:$0xff]
        %v3158 = vld [vmem:[%s8 + $0x358] sm:$0xff]
        %v3159 = vld [vmem:[%s8 + $0x360] sm:$0xff]
        %v3160 = vld [vmem:[%s8 + $0x368] sm:$0xff]
        %v3161 = vld [vmem:[%s8 + $0x370] sm:$0xff]
        %v3162 = vld [vmem:[%s8 + $0x378] sm:$0xff]
        %v3163 = vld [vmem:[%s8 + $0x380] sm:$0xff]
        %v3164 = vld [vmem:[%s8 + $0x388] sm:$0xff]
        %v3165 = vld [vmem:[%s8 + $0x390] sm:$0xff]
        %v3166 = vld [vmem:[%s8 + $0x398] sm:$0xff]
        %v3167 = vld [vmem:[%s8 + $0x3a0] sm:$0xff]
        %v3168 = vld [vmem:[%s8 + $0x3a8] sm:$0xff]
        %v3169 = vld [vmem:[%s8 + $0x3b0] sm:$0xff]
        %v3170 = vld [vmem:[%s8 + $0x3b8] sm:$0xff]
        %v3171 = vld [vmem:[%s8 + $0x3c0] sm:$0xff]
        %v3172 = vld [vmem:[%s8 + $0x3c8] sm:$0xff]
        %v3173 = vld [vmem:[%s8 + $0x3d0] sm:$0xff]
        %v3174 = vld [vmem:[%s8 + $0x3d8] sm:$0xff]
        %v3175 = vld [vmem:[%s8 + $0x3e0] sm:$0xff]
        %v3176 = vld [vmem:[%s8 + $0x3e8] sm:$0xff]
        %v3177 = vld [vmem:[%s8 + $0x3f0] sm:$0xff]
        %v3178 = vld [vmem:[%s8 + $0x3f8] sm:$0xff]
        %v3179 = vld [vmem:[%s8 + $0x400] sm:$0xff]
        %v3180 = vld [vmem:[%s8 + $0x408] sm:$0xff]
        %v3181 = vld [vmem:[%s8 + $0x410] sm:$0xff]
        %v3182 = vld [vmem:[%s8 + $0x418] sm:$0xff]
        %v3183 = vld [vmem:[%s8 + $0x420] sm:$0xff]
        %v3184 = vld [vmem:[%s8 + $0x428] sm:$0xff]
        %v3185 = vld [vmem:[%s8 + $0x430] sm:$0xff]
        %v3186 = vld [vmem:[%s8 + $0x438] sm:$0xff]
        %v3187 = vld [vmem:[%s8 + $0x440] sm:$0xff]
        %v3188 = vld [vmem:[%s8 + $0x448] sm:$0xff]
        %v3189 = vld [vmem:[%s8 + $0x450] sm:$0xff]
        %v3190 = vld [vmem:[%s8 + $0x458] sm:$0xff]
        %v3191 = vld [vmem:[%s8 + $0x460] sm:$0xff]
        %v3192 = vld [vmem:[%s8 + $0x468] sm:$0xff]
        %v3193 = vld [vmem:[%s8 + $0x470] sm:$0xff]
        %v3194 = vld [vmem:[%s8 + $0x478] sm:$0xff]
        %v3195 = vld [vmem:[%s8 + $0x480] sm:$0xff]
        %v3196 = vld [vmem:[%s8 + $0x488] sm:$0xff]
        %v3197 = vld [vmem:[%s8 + $0x490] sm:$0xff]
        %v3198 = vld [vmem:[%s8 + $0x498] sm:$0xff]
        %v3199 = vld [vmem:[%s8 + $0x4a0] sm:$0xff]
        %v3200 = vld [vmem:[%s8 + $0x4a8] sm:$0xff]
        %v3201 = vld [vmem:[%s8 + $0x4b0] sm:$0xff]
        %v3202 = vld [vmem:[%s8 + $0x4b8] sm:$0xff]
        %v3203 = vld [vmem:[%s8 + $0x4c0] sm:$0xff]
        %v3204 = vld [vmem:[%s8 + $0x4c8] sm:$0xff]
        %v3205 = vld [vmem:[%s8 + $0x4d0] sm:$0xff]
        %v3206 = vld [vmem:[%s8 + $0x4d8] sm:$0xff]
        %v3207 = vld [vmem:[%s8 + $0x4e0] sm:$0xff]
        %v3208 = vld [vmem:[%s8 + $0x4e8] sm:$0xff]
        %v3209 = vld [vmem:[%s8 + $0x4f0] sm:$0xff]
        %v3210 = vld [vmem:[%s8 + $0x4f8] sm:$0xff]
        %v3211 = vld [vmem:[%s8 + $0x500] sm:$0xff]
        %v3212 = vld [vmem:[%s8 + $0x508] sm:$0xff]
        %v3213 = vld [vmem:[%s8 + $0x510] sm:$0xf]
        %v3214 = vld [vmem:[%s9] sm:$0x1]
        %v3216 = vlaneseq
        %v3217 = vshrl.u32 %v3216, 7
        %v3218 = vsub.s32 0, %v3217
        %v3219 = vrot.slane %v3214, %v3218
        %v3222 = vsel %vm2795, %v3050, 0
        %v3225 = vsel %vm435, %v3213, 0
        %3227 = vmatprep.subr.mxu0 0.0
        %3228 = vmatpush1.msra.mxu0 %v3066
        %3229 = vmatprep.subr.mxu0 0.0
        %3230 = vmatpush1.msra.mxu0 %v3065
        %3231 = vmatprep.subr.mxu0 0.0
        %3232 = vmatpush1.msra.mxu0 %v3064
        %3233 = vmatprep.subr.mxu0 0.0
        %3234 = vmatpush1.msra.mxu0 %v3063
        %3235 = vmatprep.subr.mxu0 0.0
        %3236 = vmatpush1.msra.mxu0 %v3062
        %3237 = vmatprep.subr.mxu0 0.0
        %3238 = vmatpush1.msra.mxu0 %v3061
        %3239 = vmatprep.subr.mxu0 0.0
        %3240 = vmatpush1.msra.mxu0 %v3060
        %3241 = vmatprep.subr.mxu0 0.0
        %3242 = vmatpush1.msra.mxu0 %v3059
        %3243 = vmatprep.subr.mxu0 0.0
        %3244 = vmatpush1.msra.mxu0 %v3058
        %3245 = vmatprep.subr.mxu0 0.0
        %3246 = vmatpush1.msra.mxu0 %v3057
        %3247 = vmatprep.subr.mxu0 0.0
        %3248 = vmatpush1.msra.mxu0 %v3056
        %3249 = vmatprep.subr.mxu0 0.0
        %3250 = vmatpush1.msra.mxu0 %v3055
        %3251 = vmatprep.subr.mxu0 0.0
        %3252 = vmatpush1.msra.mxu0 %v3054
        %3253 = vmatprep.subr.mxu0 0.0
        %3254 = vmatpush1.msra.mxu0 %v3053
        %3255 = vmatprep.subr.mxu0 0.0
        %3256 = vmatpush1.msra.mxu0 %v3052
        %3257 = vmatprep.subr.mxu0 0.0
        %3258 = vmatpush1.msra.mxu0 %v3051
        %3259 = vmatprep.subr.mxu0 0.0
        %3260 = vmatpush2.msra.mxu0 %v3082
        %3261 = vmatprep.subr.mxu0 0.0
        %3262 = vmatpush2.msra.mxu0 %v3081
        %3263 = vmatprep.subr.mxu0 0.0
        %3264 = vmatpush2.msra.mxu0 %v3080
        %3265 = vmatprep.subr.mxu0 0.0
        %3266 = vmatpush2.msra.mxu0 %v3079
        %3267 = vmatprep.subr.mxu0 0.0
        %3268 = vmatpush2.msra.mxu0 %v3078
        %3269 = vmatprep.subr.mxu0 0.0
        %3270 = vmatpush2.msra.mxu0 %v3077
        %3271 = vmatprep.subr.mxu0 0.0
        %3272 = vmatpush2.msra.mxu0 %v3076
        %3273 = vmatprep.subr.mxu0 0.0
        %3274 = vmatpush2.msra.mxu0 %v3075
        %3275 = vmatprep.subr.mxu0 0.0
        %3276 = vmatpush2.msra.mxu0 %v3074
        %3277 = vmatprep.subr.mxu0 0.0
        %3278 = vmatpush2.msra.mxu0 %v3073
        %3279 = vmatprep.subr.mxu0 0.0
        %3280 = vmatpush2.msra.mxu0 %v3072
        %3281 = vmatprep.subr.mxu0 0.0
        %3282 = vmatpush2.msra.mxu0 %v3071
        %3283 = vmatprep.subr.mxu0 0.0
        %3284 = vmatpush2.msra.mxu0 %v3070
        %3285 = vmatprep.subr.mxu0 0.0
        %3286 = vmatpush2.msra.mxu0 %v3069
        %3287 = vmatprep.subr.mxu0 0.0
        %3288 = vmatpush2.msra.mxu0 %v3068
        %3289 = vmatprep.subr.mxu0 0.0
        %3290 = vmatpush2.msra.mxu0 %v3067
        %3291 = vmatprep.mubr.f32.mxu0 %v3041
        %3292 = vmatmul.mubr.f32.gmra.mxu0 %v3040
        %v3293 = vpop.f32.mrf.mxu0
        %v3294 = vadd.f32 %v3219, %v3293
        %v3295 = vpop.f32.mrf.mxu0
        %3296 = vdwg.mxu0
        %3297 = vmatprep.subr.mxu0 0.0
        %3298 = vmatpush1.msra.mxu0 %v3098
        %3299 = vmatprep.subr.mxu0 0.0
        %3300 = vmatpush1.msra.mxu0 %v3097
        %3301 = vmatprep.subr.mxu0 0.0
        %3302 = vmatpush1.msra.mxu0 %v3096
        %3303 = vmatprep.subr.mxu0 0.0
        %3304 = vmatpush1.msra.mxu0 %v3095
        %3305 = vmatprep.subr.mxu0 0.0
        %3306 = vmatpush1.msra.mxu0 %v3094
        %3307 = vmatprep.subr.mxu0 0.0
        %3308 = vmatpush1.msra.mxu0 %v3093
        %3309 = vmatprep.subr.mxu0 0.0
        %3310 = vmatpush1.msra.mxu0 %v3092
        %3311 = vmatprep.subr.mxu0 0.0
        %3312 = vmatpush1.msra.mxu0 %v3091
        %3313 = vmatprep.subr.mxu0 0.0
        %3314 = vmatpush1.msra.mxu0 %v3090
        %3315 = vmatprep.subr.mxu0 0.0
        %3316 = vmatpush1.msra.mxu0 %v3089
        %3317 = vmatprep.subr.mxu0 0.0
        %3318 = vmatpush1.msra.mxu0 %v3088
        %3319 = vmatprep.subr.mxu0 0.0
        %3320 = vmatpush1.msra.mxu0 %v3087
        %3321 = vmatprep.subr.mxu0 0.0
        %3322 = vmatpush1.msra.mxu0 %v3086
        %3323 = vmatprep.subr.mxu0 0.0
        %3324 = vmatpush1.msra.mxu0 %v3085
        %3325 = vmatprep.subr.mxu0 0.0
        %3326 = vmatpush1.msra.mxu0 %v3084
        %3327 = vmatprep.subr.mxu0 0.0
        %3328 = vmatpush1.msra.mxu0 %v3083
        %3329 = vmatprep.subr.mxu0 0.0
        %3330 = vmatpush2.msra.mxu0 %v3114
        %3331 = vmatprep.subr.mxu0 0.0
        %3332 = vmatpush2.msra.mxu0 %v3113
        %3333 = vmatprep.subr.mxu0 0.0
        %3334 = vmatpush2.msra.mxu0 %v3112
        %3335 = vmatprep.subr.mxu0 0.0
        %3336 = vmatpush2.msra.mxu0 %v3111
        %3337 = vmatprep.subr.mxu0 0.0
        %3338 = vmatpush2.msra.mxu0 %v3110
        %3339 = vmatprep.subr.mxu0 0.0
        %3340 = vmatpush2.msra.mxu0 %v3109
        %3341 = vmatprep.subr.mxu0 0.0
        %3342 = vmatpush2.msra.mxu0 %v3108
        %3343 = vmatprep.subr.mxu0 0.0
        %3344 = vmatpush2.msra.mxu0 %v3107
        %3345 = vmatprep.subr.mxu0 0.0
        %3346 = vmatpush2.msra.mxu0 %v3106
        %3347 = vmatprep.subr.mxu0 0.0
        %3348 = vmatpush2.msra.mxu0 %v3105
        %3349 = vmatprep.subr.mxu0 0.0
        %3350 = vmatpush2.msra.mxu0 %v3104
        %3351 = vmatprep.subr.mxu0 0.0
        %3352 = vmatpush2.msra.mxu0 %v3103
        %3353 = vmatprep.subr.mxu0 0.0
        %3354 = vmatpush2.msra.mxu0 %v3102
        %3355 = vmatprep.subr.mxu0 0.0
        %3356 = vmatpush2.msra.mxu0 %v3101
        %3357 = vmatprep.subr.mxu0 0.0
        %3358 = vmatpush2.msra.mxu0 %v3100
        %3359 = vmatprep.subr.mxu0 0.0
        %3360 = vmatpush2.msra.mxu0 %v3099
        %3361 = vmatprep.mubr.f32.mxu0 %v3043
        %3362 = vmatmul.mubr.f32.gmra.mxu0 %v3042
        %v3363 = vpop.f32.mrf.mxu0
        %v3364 = vadd.f32 %v3294, %v3363
        %v3365 = vpop.f32.mrf.mxu0
        %3366 = vdwg.mxu0
        %3367 = vmatprep.subr.mxu0 0.0
        %3368 = vmatpush1.msra.mxu0 %v3130
        %3369 = vmatprep.subr.mxu0 0.0
        %3370 = vmatpush1.msra.mxu0 %v3129
        %3371 = vmatprep.subr.mxu0 0.0
        %3372 = vmatpush1.msra.mxu0 %v3128
        %3373 = vmatprep.subr.mxu0 0.0
        %3374 = vmatpush1.msra.mxu0 %v3127
        %3375 = vmatprep.subr.mxu0 0.0
        %3376 = vmatpush1.msra.mxu0 %v3126
        %3377 = vmatprep.subr.mxu0 0.0
        %3378 = vmatpush1.msra.mxu0 %v3125
        %3379 = vmatprep.subr.mxu0 0.0
        %3380 = vmatpush1.msra.mxu0 %v3124
        %3381 = vmatprep.subr.mxu0 0.0
        %3382 = vmatpush1.msra.mxu0 %v3123
        %3383 = vmatprep.subr.mxu0 0.0
        %3384 = vmatpush1.msra.mxu0 %v3122
        %3385 = vmatprep.subr.mxu0 0.0
        %3386 = vmatpush1.msra.mxu0 %v3121
        %3387 = vmatprep.subr.mxu0 0.0
        %3388 = vmatpush1.msra.mxu0 %v3120
        %3389 = vmatprep.subr.mxu0 0.0
        %3390 = vmatpush1.msra.mxu0 %v3119
        %3391 = vmatprep.subr.mxu0 0.0
        %3392 = vmatpush1.msra.mxu0 %v3118
        %3393 = vmatprep.subr.mxu0 0.0
        %3394 = vmatpush1.msra.mxu0 %v3117
        %3395 = vmatprep.subr.mxu0 0.0
        %3396 = vmatpush1.msra.mxu0 %v3116
        %3397 = vmatprep.subr.mxu0 0.0
        %3398 = vmatpush1.msra.mxu0 %v3115
        %3399 = vmatprep.subr.mxu0 0.0
        %3400 = vmatpush2.msra.mxu0 %v3146
        %3401 = vmatprep.subr.mxu0 0.0
        %3402 = vmatpush2.msra.mxu0 %v3145
        %3403 = vmatprep.subr.mxu0 0.0
        %3404 = vmatpush2.msra.mxu0 %v3144
        %3405 = vmatprep.subr.mxu0 0.0
        %3406 = vmatpush2.msra.mxu0 %v3143
        %3407 = vmatprep.subr.mxu0 0.0
        %3408 = vmatpush2.msra.mxu0 %v3142
        %3409 = vmatprep.subr.mxu0 0.0
        %3410 = vmatpush2.msra.mxu0 %v3141
        %3411 = vmatprep.subr.mxu0 0.0
        %3412 = vmatpush2.msra.mxu0 %v3140
        %3413 = vmatprep.subr.mxu0 0.0
        %3414 = vmatpush2.msra.mxu0 %v3139
        %3415 = vmatprep.subr.mxu0 0.0
        %3416 = vmatpush2.msra.mxu0 %v3138
        %3417 = vmatprep.subr.mxu0 0.0
        %3418 = vmatpush2.msra.mxu0 %v3137
        %3419 = vmatprep.subr.mxu0 0.0
        %3420 = vmatpush2.msra.mxu0 %v3136
        %3421 = vmatprep.subr.mxu0 0.0
        %3422 = vmatpush2.msra.mxu0 %v3135
        %3423 = vmatprep.subr.mxu0 0.0
        %3424 = vmatpush2.msra.mxu0 %v3134
        %3425 = vmatprep.subr.mxu0 0.0
        %3426 = vmatpush2.msra.mxu0 %v3133
        %3427 = vmatprep.subr.mxu0 0.0
        %3428 = vmatpush2.msra.mxu0 %v3132
        %3429 = vmatprep.subr.mxu0 0.0
        %3430 = vmatpush2.msra.mxu0 %v3131
        %3431 = vmatprep.mubr.f32.mxu0 %v3045
        %3432 = vmatmul.mubr.f32.gmra.mxu0 %v3044
        %v3433 = vpop.f32.mrf.mxu0
        %v3434 = vadd.f32 %v3364, %v3433
        %v3435 = vpop.f32.mrf.mxu0
        %3436 = vdwg.mxu0
        %3437 = vmatprep.subr.mxu0 0.0
        %3438 = vmatpush1.msra.mxu0 %v3162
        %3439 = vmatprep.subr.mxu0 0.0
        %3440 = vmatpush1.msra.mxu0 %v3161
        %3441 = vmatprep.subr.mxu0 0.0
        %3442 = vmatpush1.msra.mxu0 %v3160
        %3443 = vmatprep.subr.mxu0 0.0
        %3444 = vmatpush1.msra.mxu0 %v3159
        %3445 = vmatprep.subr.mxu0 0.0
        %3446 = vmatpush1.msra.mxu0 %v3158
        %3447 = vmatprep.subr.mxu0 0.0
        %3448 = vmatpush1.msra.mxu0 %v3157
        %3449 = vmatprep.subr.mxu0 0.0
        %3450 = vmatpush1.msra.mxu0 %v3156
        %3451 = vmatprep.subr.mxu0 0.0
        %3452 = vmatpush1.msra.mxu0 %v3155
        %3453 = vmatprep.subr.mxu0 0.0
        %3454 = vmatpush1.msra.mxu0 %v3154
        %3455 = vmatprep.subr.mxu0 0.0
        %3456 = vmatpush1.msra.mxu0 %v3153
        %3457 = vmatprep.subr.mxu0 0.0
        %3458 = vmatpush1.msra.mxu0 %v3152
        %3459 = vmatprep.subr.mxu0 0.0
        %3460 = vmatpush1.msra.mxu0 %v3151
        %3461 = vmatprep.subr.mxu0 0.0
        %3462 = vmatpush1.msra.mxu0 %v3150
        %3463 = vmatprep.subr.mxu0 0.0
        %3464 = vmatpush1.msra.mxu0 %v3149
        %3465 = vmatprep.subr.mxu0 0.0
        %3466 = vmatpush1.msra.mxu0 %v3148
        %3467 = vmatprep.subr.mxu0 0.0
        %3468 = vmatpush1.msra.mxu0 %v3147
        %3469 = vmatprep.subr.mxu0 0.0
        %3470 = vmatpush2.msra.mxu0 %v3178
        %3471 = vmatprep.subr.mxu0 0.0
        %3472 = vmatpush2.msra.mxu0 %v3177
        %3473 = vmatprep.subr.mxu0 0.0
        %3474 = vmatpush2.msra.mxu0 %v3176
        %3475 = vmatprep.subr.mxu0 0.0
        %3476 = vmatpush2.msra.mxu0 %v3175
        %3477 = vmatprep.subr.mxu0 0.0
        %3478 = vmatpush2.msra.mxu0 %v3174
        %3479 = vmatprep.subr.mxu0 0.0
        %3480 = vmatpush2.msra.mxu0 %v3173
        %3481 = vmatprep.subr.mxu0 0.0
        %3482 = vmatpush2.msra.mxu0 %v3172
        %3483 = vmatprep.subr.mxu0 0.0
        %3484 = vmatpush2.msra.mxu0 %v3171
        %3485 = vmatprep.subr.mxu0 0.0
        %3486 = vmatpush2.msra.mxu0 %v3170
        %3487 = vmatprep.subr.mxu0 0.0
        %3488 = vmatpush2.msra.mxu0 %v3169
        %3489 = vmatprep.subr.mxu0 0.0
        %3490 = vmatpush2.msra.mxu0 %v3168
        %3491 = vmatprep.subr.mxu0 0.0
        %3492 = vmatpush2.msra.mxu0 %v3167
        %3493 = vmatprep.subr.mxu0 0.0
        %3494 = vmatpush2.msra.mxu0 %v3166
        %3495 = vmatprep.subr.mxu0 0.0
        %3496 = vmatpush2.msra.mxu0 %v3165
        %3497 = vmatprep.subr.mxu0 0.0
        %3498 = vmatpush2.msra.mxu0 %v3164
        %3499 = vmatprep.subr.mxu0 0.0
        %3500 = vmatpush2.msra.mxu0 %v3163
        %3501 = vmatprep.mubr.f32.mxu0 %v3047
        %3502 = vmatmul.mubr.f32.gmra.mxu0 %v3046
        %v3503 = vpop.f32.mrf.mxu0
        %v3504 = vadd.f32 %v3434, %v3503
        %v3505 = vpop.f32.mrf.mxu0
        %3506 = vdwg.mxu0
        %3507 = vmatprep.subr.mxu0 0.0
        %3508 = vmatpush1.msra.mxu0 %v3194
        %3509 = vmatprep.subr.mxu0 0.0
        %3510 = vmatpush1.msra.mxu0 %v3193
        %3511 = vmatprep.subr.mxu0 0.0
        %3512 = vmatpush1.msra.mxu0 %v3192
        %3513 = vmatprep.subr.mxu0 0.0
        %3514 = vmatpush1.msra.mxu0 %v3191
        %3515 = vmatprep.subr.mxu0 0.0
        %3516 = vmatpush1.msra.mxu0 %v3190
        %3517 = vmatprep.subr.mxu0 0.0
        %3518 = vmatpush1.msra.mxu0 %v3189
        %3519 = vmatprep.subr.mxu0 0.0
        %3520 = vmatpush1.msra.mxu0 %v3188
        %3521 = vmatprep.subr.mxu0 0.0
        %3522 = vmatpush1.msra.mxu0 %v3187
        %3523 = vmatprep.subr.mxu0 0.0
        %3524 = vmatpush1.msra.mxu0 %v3186
        %3525 = vmatprep.subr.mxu0 0.0
        %3526 = vmatpush1.msra.mxu0 %v3185
        %3527 = vmatprep.subr.mxu0 0.0
        %3528 = vmatpush1.msra.mxu0 %v3184
        %3529 = vmatprep.subr.mxu0 0.0
        %3530 = vmatpush1.msra.mxu0 %v3183
        %3531 = vmatprep.subr.mxu0 0.0
        %3532 = vmatpush1.msra.mxu0 %v3182
        %3533 = vmatprep.subr.mxu0 0.0
        %3534 = vmatpush1.msra.mxu0 %v3181
        %3535 = vmatprep.subr.mxu0 0.0
        %3536 = vmatpush1.msra.mxu0 %v3180
        %3537 = vmatprep.subr.mxu0 0.0
        %3538 = vmatpush1.msra.mxu0 %v3179
        %3539 = vmatprep.subr.mxu0 0.0
        %3540 = vmatpush2.msra.mxu0 %v3210
        %3541 = vmatprep.subr.mxu0 0.0
        %3542 = vmatpush2.msra.mxu0 %v3209
        %3543 = vmatprep.subr.mxu0 0.0
        %3544 = vmatpush2.msra.mxu0 %v3208
        %3545 = vmatprep.subr.mxu0 0.0
        %3546 = vmatpush2.msra.mxu0 %v3207
        %3547 = vmatprep.subr.mxu0 0.0
        %3548 = vmatpush2.msra.mxu0 %v3206
        %3549 = vmatprep.subr.mxu0 0.0
        %3550 = vmatpush2.msra.mxu0 %v3205
        %3551 = vmatprep.subr.mxu0 0.0
        %3552 = vmatpush2.msra.mxu0 %v3204
        %3553 = vmatprep.subr.mxu0 0.0
        %3554 = vmatpush2.msra.mxu0 %v3203
        %3555 = vmatprep.subr.mxu0 0.0
        %3556 = vmatpush2.msra.mxu0 %v3202
        %3557 = vmatprep.subr.mxu0 0.0
        %3558 = vmatpush2.msra.mxu0 %v3201
        %3559 = vmatprep.subr.mxu0 0.0
        %3560 = vmatpush2.msra.mxu0 %v3200
        %3561 = vmatprep.subr.mxu0 0.0
        %3562 = vmatpush2.msra.mxu0 %v3199
        %3563 = vmatprep.subr.mxu0 0.0
        %3564 = vmatpush2.msra.mxu0 %v3198
        %3565 = vmatprep.subr.mxu0 0.0
        %3566 = vmatpush2.msra.mxu0 %v3197
        %3567 = vmatprep.subr.mxu0 0.0
        %3568 = vmatpush2.msra.mxu0 %v3196
        %3569 = vmatprep.subr.mxu0 0.0
        %3570 = vmatpush2.msra.mxu0 %v3195
        %3571 = vmatprep.mubr.f32.mxu0 %v3049
        %3572 = vmatmul.mubr.f32.gmra.mxu0 %v3048
        %v3573 = vpop.f32.mrf.mxu0
        %v3574 = vadd.f32 %v3504, %v3573
        %v3575 = vpop.f32.mrf.mxu0
        %3576 = vdwg.mxu0
        %3577 = vmatprep.subr.mxu0 0.0
        %3578 = vmatpush1.msra.mxu0 0.0
        %3579 = vmatprep.subr.mxu0 0.0
        %3580 = vmatpush1.msra.mxu0 0.0
        %3581 = vmatprep.subr.mxu0 0.0
        %3582 = vmatpush1.msra.mxu0 0.0
        %3583 = vmatprep.subr.mxu0 0.0
        %3584 = vmatpush1.msra.mxu0 0.0
        %3585 = vmatprep.subr.mxu0 0.0
        %3586 = vmatpush1.msra.mxu0 0.0
        %3587 = vmatprep.subr.mxu0 0.0
        %3588 = vmatpush1.msra.mxu0 0.0
        %3589 = vmatprep.subr.mxu0 0.0
        %3590 = vmatpush1.msra.mxu0 0.0
        %3591 = vmatprep.subr.mxu0 0.0
        %3592 = vmatpush1.msra.mxu0 0.0
        %3593 = vmatprep.subr.mxu0 0.0
        %3594 = vmatpush1.msra.mxu0 0.0
        %3595 = vmatprep.subr.mxu0 0.0
        %3596 = vmatpush1.msra.mxu0 0.0
        %3597 = vmatprep.subr.mxu0 0.0
        %3598 = vmatpush1.msra.mxu0 0.0
        %3599 = vmatprep.subr.mxu0 0.0
        %3600 = vmatpush1.msra.mxu0 0.0
        %3601 = vmatprep.subr.mxu0 0.0
        %3602 = vmatpush1.msra.mxu0 0.0
        %3603 = vmatprep.subr.mxu0 0.0
        %3604 = vmatpush1.msra.mxu0 %v3225
        %3605 = vmatprep.subr.mxu0 0.0
        %3606 = vmatpush1.msra.mxu0 %v3212
        %3607 = vmatprep.subr.mxu0 0.0
        %3608 = vmatpush1.msra.mxu0 %v3211
        %3609 = vmatprep.subr.mxu0 0.0
        %3610 = vmatpush2.msra.mxu0 0.0
        %3611 = vmatprep.subr.mxu0 0.0
        %3612 = vmatpush2.msra.mxu0 0.0
        %3613 = vmatprep.subr.mxu0 0.0
        %3614 = vmatpush2.msra.mxu0 0.0
        %3615 = vmatprep.subr.mxu0 0.0
        %3616 = vmatpush2.msra.mxu0 0.0
        %3617 = vmatprep.subr.mxu0 0.0
        %3618 = vmatpush2.msra.mxu0 0.0
        %3619 = vmatprep.subr.mxu0 0.0
        %3620 = vmatpush2.msra.mxu0 0.0
        %3621 = vmatprep.subr.mxu0 0.0
        %3622 = vmatpush2.msra.mxu0 0.0
        %3623 = vmatprep.subr.mxu0 0.0
        %3624 = vmatpush2.msra.mxu0 0.0
        %3625 = vmatprep.subr.mxu0 0.0
        %3626 = vmatpush2.msra.mxu0 0.0
        %3627 = vmatprep.subr.mxu0 0.0
        %3628 = vmatpush2.msra.mxu0 0.0
        %3629 = vmatprep.subr.mxu0 0.0
        %3630 = vmatpush2.msra.mxu0 0.0
        %3631 = vmatprep.subr.mxu0 0.0
        %3632 = vmatpush2.msra.mxu0 0.0
        %3633 = vmatprep.subr.mxu0 0.0
        %3634 = vmatpush2.msra.mxu0 0.0
        %3635 = vmatprep.subr.mxu0 0.0
        %3636 = vmatpush2.msra.mxu0 0.0
        %3637 = vmatprep.subr.mxu0 0.0
        %3638 = vmatpush2.msra.mxu0 0.0
        %3639 = vmatprep.subr.mxu0 0.0
        %3640 = vmatpush2.msra.mxu0 0.0
        %3641 = vmatprep.mubr.f32.mxu0 0.0
        %3642 = vmatmul.mubr.f32.gmra.mxu0 %v3222
        %v3643 = vpop.f32.mrf.mxu0
        %v3644 = vadd.f32 %v3574, %v3643
        %v3645 = vpop.f32.mrf.mxu0
        %3646 = vdwg.mxu0
        %v3647 = vtanh.pop %v3644
        %v3648 = vmul.f32 %v3647, 0.05
        %v3649 = vld [vmem:[%s1] sm:$0xff]
        %v3650 = vadd.f32 %v3648, %v3649
        %v3651 = vmax.f32 %v3650, -1.0
        %v3652 = vmin.f32 %v3651, 1.0
        %3653 = vst.msk [vmem:[%s10] sm:$0xff] %vm431, %v3652
      $region68: #{tpu_custom_call.1} parent=59 // pred_fallthru
        _
      // Predicated region
      $region69: #{tpu_custom_call.1} parent=59 // pred_check
        %p3654 = pneg %p264
      $region70: #{tpu_custom_call.1} parent=59 // pred_check_branch
        %3656 = sbr.rel (%p3654) target = $region72
      $region71: #{tpu_custom_call.1} parent=59 // pred_region
        _
      $region72: #{tpu_custom_call.1} parent=59 // pred_fallthru
        _
      // Predicated region
      $region73: #{tpu_custom_call.1} parent=59 // pred_check
        %p3657 = pneg %p264
      $region74: #{tpu_custom_call.1} parent=59 // pred_check_branch
        %3659 = sbr.rel (%p3657) target = $region76
      $region75: #{tpu_custom_call.1} parent=59 // pred_region
        _
      $region76: #{tpu_custom_call.1} parent=59 // pred_fallthru
        _
    $region60: #{tpu_custom_call.1} parent=5 // pred_fallthru
      _
    %p3660 = scmp.le.s32.totalorder 2, %s16
    // Predicated region
    $region77: #{tpu_custom_call.1} parent=5 // pred_check
      %p3661 = pneg %p3660
    $region78: #{tpu_custom_call.1} parent=5 // pred_check_branch
      %3663 = sbr.rel (%p3661) target = $region80
    $region79: #{tpu_custom_call.1} parent=5 // pred_region
      %s3664 = ssub.s32 %s16, 2
    $region80: #{tpu_custom_call.1} parent=5 // pred_fallthru
      _
  $region6: #{tpu_custom_call.1} parent=0 // loop_footer
    %s20 = sadd.s32 1, %s16
  $region7: #{tpu_custom_call.1} parent=0 // loop_footer_branch
    %15 = sbr.rel target = $region3
  $region8: #{tpu_custom_call.1} parent=0 // loop_exit
    _

</llo_original>
